<compile_context>
chip_gen: v7x
topology: tpu7x:2x2x1
jax: 0.10.0
libtpu: 0.0.40
codegen_flags: <defaults>
</compile_context>

<pallas_src>
import functools

import jax
import jax.numpy as jnp
from jax.experimental import pallas as pl
from jax.experimental.pallas import tpu as pltpu

LANE = 128


def _round_up(x, m):
    return ((x + m - 1) // m) * m


# ----------------------------------------------------------------------------- kernel
def gru_seq_kernel(tok_ref,      # SMEM (T,)        int32 token ids (scalar prefetch)
                   emb_ref,      # VMEM (V, 1, Ep)  embedding table (resident)
                   h0_ref,       # VMEM (1, Hp)     initial hidden state
                   wih_ref,      # VMEM (Ep, 3*Hp)  input->hidden weights, gates r|z|n
                   whh_ref,      # VMEM (Hp, 3*Hp)  hidden->hidden weights
                   bih_ref,      # VMEM (1, 3*Hp)
                   bhh_ref,      # VMEM (1, 3*Hp)
                   wfc_ref,      # VMEM (Hp, Op)    fc weights (transposed)
                   bfc_ref,      # VMEM (1, Op)
                   out_ref,      # VMEM (T, Op)     per-step fc outputs
                   hout_ref,     # VMEM (1, Hp)     final hidden
                   x_all,        # VMEM (T, Ep)     scratch: gathered embeddings
                   h_all):       # VMEM (T, Hp)     scratch: per-step hidden states
    T = out_ref.shape[0]
    Hp = h0_ref.shape[-1]
    V = emb_ref.shape[0]

    # Phase 1: gather embedding rows for all tokens from the resident table.
    for t in range(T):
        tok = jnp.minimum(jnp.maximum(tok_ref[t], 0), V - 1)   # clamp: no OOB read
        x_all[pl.ds(t, 1), :] = emb_ref[tok]                    # (1, Ep) row

    # Phase 2: batched input projection — ONE (T,Ep)x(Ep,3Hp) MXU matmul.
    gi_all = (jnp.dot(x_all[...], wih_ref[...], preferred_element_type=jnp.float32)
              + bih_ref[...])                                   # (T, 3Hp)

    # Phase 3: serial recurrence, fully unrolled. Only the h->h matmul, the fused
    # r|z sigmoid, the n tanh, the blend and one row store sit on the serial path.
    h = h0_ref[...]                                             # (1, Hp)
    for t in range(T):
        gi = gi_all[t:t + 1, :]                                 # (1, 3Hp) static slice
        gh = (jnp.dot(h, whh_ref[...], preferred_element_type=jnp.float32)
              + bhh_ref[...])                                   # (1, 3Hp)
        rz = jax.nn.sigmoid(gi[:, :2 * Hp] + gh[:, :2 * Hp])    # fused r|z slab
        r = rz[:, :Hp]
        z = rz[:, Hp:]
        n = jnp.tanh(gi[:, 2 * Hp:] + r * gh[:, 2 * Hp:])       # b_hn inside r*(.)
        h = (1.0 - z) * n + z * h                               # padded lanes stay 0
        h_all[pl.ds(t, 1), :] = h

    # Phase 4: single final-hidden store + ONE batched FC matmul + dense writeback.
    hout_ref[...] = h
    out_ref[...] = (jnp.dot(h_all[...], wfc_ref[...], preferred_element_type=jnp.float32)
                    + bfc_ref[...])


# ----------------------------------------------------------------------------- wrapper
@functools.partial(jax.jit, static_argnames=("output_size",))
def custom_rnn_forward_seq(tokens, hidden, padded, *, output_size):
    """Runs T sequential GRU steps (== calling CustomRNN.forward per token).

    tokens: (T,) int32, hidden: (1, 1, H) f32, padded: dict of lane-padded params.
    Returns (outs (T, O), hidden (1, 1, H)).
    """
    T = tokens.shape[0]
    H = hidden.shape[-1]
    V, _, Ep = padded["embedding"].shape
    Hp = padded["w_hh_t"].shape[0]
    Op = padded["b_fc"].shape[-1]

    h0 = jnp.pad(hidden.reshape(1, H).astype(jnp.float32), ((0, 0), (0, Hp - H)))

    const2 = lambda i, tok: (0, 0)
    grid_spec = pltpu.PrefetchScalarGridSpec(
        num_scalar_prefetch=1,
        grid=(1,),                                             # single grid step
        in_specs=[
            pl.BlockSpec((V, 1, Ep), lambda i, tok: (0, 0, 0)),  # embedding table
            pl.BlockSpec((1, Hp), const2),                       # h0
            pl.BlockSpec((Ep, 3 * Hp), const2),                  # w_ih^T
            pl.BlockSpec((Hp, 3 * Hp), const2),                  # w_hh^T
            pl.BlockSpec((1, 3 * Hp), const2),                   # b_ih
            pl.BlockSpec((1, 3 * Hp), const2),                   # b_hh
            pl.BlockSpec((Hp, Op), const2),                      # w_fc^T
            pl.BlockSpec((1, Op), const2),                       # b_fc
        ],
        out_specs=(
            pl.BlockSpec((T, Op), const2),                       # per-step outputs
            pl.BlockSpec((1, Hp), const2),                       # final hidden
        ),
        scratch_shapes=[
            pltpu.VMEM((T, Ep), jnp.float32),                    # gathered embeddings
            pltpu.VMEM((T, Hp), jnp.float32),                    # per-step hidden
        ],
    )

    out_pad, h_pad = pl.pallas_call(
        gru_seq_kernel,
        out_shape=(
            jax.ShapeDtypeStruct((T, Op), jnp.float32),
            jax.ShapeDtypeStruct((1, Hp), jnp.float32),
        ),
        grid_spec=grid_spec,
        compiler_params=pltpu.CompilerParams(
            dimension_semantics=("arbitrary",)),                 # sequential recurrence
    )(
        tokens.astype(jnp.int32),
        padded["embedding"],
        h0,
        padded["w_ih_t"],
        padded["w_hh_t"],
        padded["b_ih"],
        padded["b_hh"],
        padded["w_fc_t"],
        padded["b_fc"],
    )
    return out_pad[:, :output_size], h_pad[:, :H].reshape(1, 1, H)


def custom_rnn_forward(token, hidden, padded, *, output_size):
    """Mirrors CustomRNN.forward(x, hidden): one token -> (out (1,O), hidden (1,1,H))."""
    # TODO(synk): for host-loop autoregressive decode, alias h0 -> hout via
    # input_output_aliases and keep the hidden state padded between calls.
    tok = jnp.reshape(token, (-1,))[:1].astype(jnp.int32)
    return custom_rnn_forward_seq(tok, hidden, padded, output_size=output_size)


# ----------------------------------------------------------------------------- params
def init_params(key, input_size, embed_size, hidden_dim, output_size):
    ks = jax.random.split(key, 7)
    scale = 0.1
    return {
        # nn.Embedding(input_size, embed_size)
        "embedding": scale * jax.random.normal(ks[0], (input_size, embed_size), jnp.float32),
        # nn.GRU weight_ih_l0 is (3H, E); stored transposed as (E, 3H), gate order r|z|n
        "w_ih_t": scale * jax.random.normal(ks[1], (embed_size, 3 * hidden_dim), jnp.float32),
        # nn.GRU weight_hh_l0 is (3H, H); stored transposed as (H, 3H)
        "w_hh_t": scale * jax.random.normal(ks[2], (hidden_dim, 3 * hidden_dim), jnp.float32),
        "b_ih": scale * jax.random.normal(ks[3], (3 * hidden_dim,), jnp.float32),
        "b_hh": scale * jax.random.normal(ks[4], (3 * hidden_dim,), jnp.float32),
        # nn.Linear(hidden_dim, output_size) weight is (O, H); stored transposed as (H, O)
        "w_fc_t": scale * jax.random.normal(ks[5], (hidden_dim, output_size), jnp.float32),
        "b_fc": scale * jax.random.normal(ks[6], (output_size,), jnp.float32),
    }


def pad_params(params, embed_size, hidden_dim, output_size):
    """Zero-pad every feature dimension (E, H per gate, O) up to 128 lanes.

    All padded columns/lanes MUST be zero: the kernel relies on this so padded
    hidden lanes remain exactly 0 across GRU steps.
    """
    Ep = _round_up(embed_size, LANE)
    Hp = _round_up(hidden_dim, LANE)
    Op = _round_up(output_size, LANE)

    def pad2(a, rows, cols):
        return jnp.pad(a, ((0, rows - a.shape[0]), (0, cols - a.shape[1])))

    def pad_gates(w2d, rows_to):
        # (rows, 3H) with gates r|z|n -> (rows_to, 3*Hp), each gate zero-padded to Hp.
        H = hidden_dim
        gates = [pad2(w2d[:, g * H:(g + 1) * H], rows_to, Hp) for g in range(3)]
        return jnp.concatenate(gates, axis=1)

    emb = pad2(params["embedding"], params["embedding"].shape[0], Ep)
    return {
        "embedding": emb.reshape(emb.shape[0], 1, Ep),
        "w_ih_t": pad_gates(params["w_ih_t"], Ep),
        "w_hh_t": pad_gates(params["w_hh_t"], Hp),
        "b_ih": pad_gates(params["b_ih"].reshape(1, -1), 1),
        "b_hh": pad_gates(params["b_hh"].reshape(1, -1), 1),
        "w_fc_t": pad2(params["w_fc_t"], Hp, Op),
        "b_fc": pad2(params["b_fc"].reshape(1, -1), 1, Op),
    }


# ----------------------------------------------------------------------------- reference
def gru_reference(tokens, hidden, params):
    H = params["w_hh_t"].shape[0]
    h = hidden.reshape(1, H)
    outs = []
    for t in range(tokens.shape[0]):
        x = params["embedding"][tokens[t]].reshape(1, -1)
        gi = x @ params["w_ih_t"] + params["b_ih"]
        gh = h @ params["w_hh_t"] + params["b_hh"]
        i_r, i_z, i_n = gi[:, :H], gi[:, H:2 * H], gi[:, 2 * H:]
        h_r, h_z, h_n = gh[:, :H], gh[:, H:2 * H], gh[:, 2 * H:]
        r = jax.nn.sigmoid(i_r + h_r)
        z = jax.nn.sigmoid(i_z + h_z)
        n = jnp.tanh(i_n + r * h_n)
        h = (1.0 - z) * n + z * h
        outs.append(h @ params["w_fc_t"] + params["b_fc"])
    return jnp.concatenate(outs, axis=0), h.reshape(1, 1, H)


# ----------------------------------------------------------------------------- main
if __name__ == "__main__":
    input_size, embed_size, hidden_dim, output_size = 16, 32, 32, 8
    seq_len = 8

    key = jax.random.PRNGKey(0)
    pkey, hkey, tkey = jax.random.split(key, 3)
    params = init_params(pkey, input_size, embed_size, hidden_dim, output_size)
    padded = pad_params(params, embed_size, hidden_dim, output_size)

    tokens = jax.random.randint(tkey, (seq_len,), 0, input_size, dtype=jnp.int32)
    hidden0 = jax.random.normal(hkey, (1, 1, hidden_dim), jnp.float32)

    # Fused multi-step run (== calling CustomRNN.forward once per token, carrying hidden).
    outs, h_final = custom_rnn_forward_seq(tokens, hidden0, padded, output_size=output_size)
    jax.block_until_ready((outs, h_final))

    # Single-step call mirroring CustomRNN.forward(x, hidden).
    out1, h1 = custom_rnn_forward(tokens[:1], hidden0, padded, output_size=output_size)
    jax.block_until_ready((out1, h1))

    assert outs.shape == (seq_len, output_size)
    assert h_final.shape == (1, 1, hidden_dim)
    assert out1.shape == (1, output_size)
    assert h1.shape == (1, 1, hidden_dim)

    # Numerical check against a pure-JAX reference.
    import numpy as np
    ref_outs, ref_h = gru_reference(tokens, hidden0, params)
    np.testing.assert_allclose(np.asarray(outs), np.asarray(ref_outs), rtol=2e-3, atol=2e-3)
    np.testing.assert_allclose(np.asarray(h_final), np.asarray(ref_h), rtol=2e-3, atol=2e-3)
    np.testing.assert_allclose(np.asarray(out1), np.asarray(ref_outs[:1]), rtol=2e-3, atol=2e-3)

    print("KERNEL_OK")
</pallas_src>

<mosaic_0001>
module attributes {stable_mosaic.version = 11 : i64} {
  func.func @gru_seq_kernel(%arg0: i32, %arg1: memref<8xi32, #tpu.memory_space<smem>>, %arg2: memref<16x1x128xf32, #tpu.memory_space<vmem>>, %arg3: memref<1x128xf32, #tpu.memory_space<vmem>>, %arg4: memref<128x384xf32, #tpu.memory_space<vmem>>, %arg5: memref<128x384xf32, #tpu.memory_space<vmem>>, %arg6: memref<1x384xf32, #tpu.memory_space<vmem>>, %arg7: memref<1x384xf32, #tpu.memory_space<vmem>>, %arg8: memref<128x128xf32, #tpu.memory_space<vmem>>, %arg9: memref<1x128xf32, #tpu.memory_space<vmem>>, %arg10: memref<8x128xf32, #tpu.memory_space<vmem>>, %arg11: memref<1x128xf32, #tpu.memory_space<vmem>>, %arg12: memref<8x128xf32, #tpu.memory_space<vmem>>, %arg13: memref<8x128xf32, #tpu.memory_space<vmem>>) attributes {dimension_semantics = [#tpu.dimension_semantics<arbitrary>], iteration_bounds = array<i64: 1>, scalar_prefetch = 1 : i64, scratch_operands = 2 : i64, tpu.core_type = #tpu.core_type<tc>, window_params = [{pipeline_mode = #tpu.pipeline_mode<synchronous>, transform_indices = @transform_0, window_bounds = array<i64: 16, 1, 128>}, {pipeline_mode = #tpu.pipeline_mode<synchronous>, transform_indices = @transform_1, window_bounds = array<i64: 1, 128>}, {pipeline_mode = #tpu.pipeline_mode<synchronous>, transform_indices = @transform_2, window_bounds = array<i64: 128, 384>}, {pipeline_mode = #tpu.pipeline_mode<synchronous>, transform_indices = @transform_3, window_bounds = array<i64: 128, 384>}, {pipeline_mode = #tpu.pipeline_mode<synchronous>, transform_indices = @transform_4, window_bounds = array<i64: 1, 384>}, {pipeline_mode = #tpu.pipeline_mode<synchronous>, transform_indices = @transform_5, window_bounds = array<i64: 1, 384>}, {pipeline_mode = #tpu.pipeline_mode<synchronous>, transform_indices = @transform_6, window_bounds = array<i64: 128, 128>}, {pipeline_mode = #tpu.pipeline_mode<synchronous>, transform_indices = @transform_7, window_bounds = array<i64: 1, 128>}, {pipeline_mode = #tpu.pipeline_mode<synchronous>, transform_indices = @transform_8, window_bounds = array<i64: 8, 128>}, {pipeline_mode = #tpu.pipeline_mode<synchronous>, transform_indices = @transform_9, window_bounds = array<i64: 1, 128>}]} {
    %c0 = arith.constant 0 : index
    %0 = memref.load %arg1[%c0] : memref<8xi32, #tpu.memory_space<smem>>
    %c0_i32 = arith.constant 0 : i32
    %1 = arith.maxsi %0, %c0_i32 : i32
    %c15_i32 = arith.constant 15 : i32
    %2 = arith.minsi %1, %c15_i32 : i32
    %3 = arith.index_cast %2 : i32 to index
    %c0_0 = arith.constant 0 : index
    %c0_1 = arith.constant 0 : index
    %4 = vector.load %arg2[%3, %c0_0, %c0_1] : memref<16x1x128xf32, #tpu.memory_space<vmem>>, vector<1x1x128xf32>
    %5 = vector.shape_cast %4 : vector<1x1x128xf32> to vector<1x128xf32>
    %c0_2 = arith.constant 0 : index
    %c0_3 = arith.constant 0 : index
    %6 = vector.load %arg12[%c0_2, %c0_3] : memref<8x128xf32, #tpu.memory_space<vmem>>, vector<1x128xf32>
    tpu.vector_store %arg12[%c0_2, %c0_3], %5 {strides = array<i32>} : memref<8x128xf32, #tpu.memory_space<vmem>>, vector<1x128xf32>,
    %c1 = arith.constant 1 : index
    %7 = memref.load %arg1[%c1] : memref<8xi32, #tpu.memory_space<smem>>
    %c0_i32_4 = arith.constant 0 : i32
    %8 = arith.maxsi %7, %c0_i32_4 : i32
    %c15_i32_5 = arith.constant 15 : i32
    %9 = arith.minsi %8, %c15_i32_5 : i32
    %10 = arith.index_cast %9 : i32 to index
    %c0_6 = arith.constant 0 : index
    %c0_7 = arith.constant 0 : index
    %11 = vector.load %arg2[%10, %c0_6, %c0_7] : memref<16x1x128xf32, #tpu.memory_space<vmem>>, vector<1x1x128xf32>
    %12 = vector.shape_cast %11 : vector<1x1x128xf32> to vector<1x128xf32>
    %c1_8 = arith.constant 1 : index
    %c0_9 = arith.constant 0 : index
    %13 = vector.load %arg12[%c1_8, %c0_9] : memref<8x128xf32, #tpu.memory_space<vmem>>, vector<1x128xf32>
    tpu.vector_store %arg12[%c1_8, %c0_9], %12 {strides = array<i32>} : memref<8x128xf32, #tpu.memory_space<vmem>>, vector<1x128xf32>,
    %c2 = arith.constant 2 : index
    %14 = memref.load %arg1[%c2] : memref<8xi32, #tpu.memory_space<smem>>
    %c0_i32_10 = arith.constant 0 : i32
    %15 = arith.maxsi %14, %c0_i32_10 : i32
    %c15_i32_11 = arith.constant 15 : i32
    %16 = arith.minsi %15, %c15_i32_11 : i32
    %17 = arith.index_cast %16 : i32 to index
    %c0_12 = arith.constant 0 : index
    %c0_13 = arith.constant 0 : index
    %18 = vector.load %arg2[%17, %c0_12, %c0_13] : memref<16x1x128xf32, #tpu.memory_space<vmem>>, vector<1x1x128xf32>
    %19 = vector.shape_cast %18 : vector<1x1x128xf32> to vector<1x128xf32>
    %c2_14 = arith.constant 2 : index
    %c0_15 = arith.constant 0 : index
    %20 = vector.load %arg12[%c2_14, %c0_15] : memref<8x128xf32, #tpu.memory_space<vmem>>, vector<1x128xf32>
    tpu.vector_store %arg12[%c2_14, %c0_15], %19 {strides = array<i32>} : memref<8x128xf32, #tpu.memory_space<vmem>>, vector<1x128xf32>,
    %c3 = arith.constant 3 : index
    %21 = memref.load %arg1[%c3] : memref<8xi32, #tpu.memory_space<smem>>
    %c0_i32_16 = arith.constant 0 : i32
    %22 = arith.maxsi %21, %c0_i32_16 : i32
    %c15_i32_17 = arith.constant 15 : i32
    %23 = arith.minsi %22, %c15_i32_17 : i32
    %24 = arith.index_cast %23 : i32 to index
    %c0_18 = arith.constant 0 : index
    %c0_19 = arith.constant 0 : index
    %25 = vector.load %arg2[%24, %c0_18, %c0_19] : memref<16x1x128xf32, #tpu.memory_space<vmem>>, vector<1x1x128xf32>
    %26 = vector.shape_cast %25 : vector<1x1x128xf32> to vector<1x128xf32>
    %c3_20 = arith.constant 3 : index
    %c0_21 = arith.constant 0 : index
    %27 = vector.load %arg12[%c3_20, %c0_21] : memref<8x128xf32, #tpu.memory_space<vmem>>, vector<1x128xf32>
    tpu.vector_store %arg12[%c3_20, %c0_21], %26 {strides = array<i32>} : memref<8x128xf32, #tpu.memory_space<vmem>>, vector<1x128xf32>,
    %c4 = arith.constant 4 : index
    %28 = memref.load %arg1[%c4] : memref<8xi32, #tpu.memory_space<smem>>
    %c0_i32_22 = arith.constant 0 : i32
    %29 = arith.maxsi %28, %c0_i32_22 : i32
    %c15_i32_23 = arith.constant 15 : i32
    %30 = arith.minsi %29, %c15_i32_23 : i32
    %31 = arith.index_cast %30 : i32 to index
    %c0_24 = arith.constant 0 : index
    %c0_25 = arith.constant 0 : index
    %32 = vector.load %arg2[%31, %c0_24, %c0_25] : memref<16x1x128xf32, #tpu.memory_space<vmem>>, vector<1x1x128xf32>
    %33 = vector.shape_cast %32 : vector<1x1x128xf32> to vector<1x128xf32>
    %c4_26 = arith.constant 4 : index
    %c0_27 = arith.constant 0 : index
    %34 = vector.load %arg12[%c4_26, %c0_27] : memref<8x128xf32, #tpu.memory_space<vmem>>, vector<1x128xf32>
    tpu.vector_store %arg12[%c4_26, %c0_27], %33 {strides = array<i32>} : memref<8x128xf32, #tpu.memory_space<vmem>>, vector<1x128xf32>,
    %c5 = arith.constant 5 : index
    %35 = memref.load %arg1[%c5] : memref<8xi32, #tpu.memory_space<smem>>
    %c0_i32_28 = arith.constant 0 : i32
    %36 = arith.maxsi %35, %c0_i32_28 : i32
    %c15_i32_29 = arith.constant 15 : i32
    %37 = arith.minsi %36, %c15_i32_29 : i32
    %38 = arith.index_cast %37 : i32 to index
    %c0_30 = arith.constant 0 : index
    %c0_31 = arith.constant 0 : index
    %39 = vector.load %arg2[%38, %c0_30, %c0_31] : memref<16x1x128xf32, #tpu.memory_space<vmem>>, vector<1x1x128xf32>
    %40 = vector.shape_cast %39 : vector<1x1x128xf32> to vector<1x128xf32>
    %c5_32 = arith.constant 5 : index
    %c0_33 = arith.constant 0 : index
    %41 = vector.load %arg12[%c5_32, %c0_33] : memref<8x128xf32, #tpu.memory_space<vmem>>, vector<1x128xf32>
    tpu.vector_store %arg12[%c5_32, %c0_33], %40 {strides = array<i32>} : memref<8x128xf32, #tpu.memory_space<vmem>>, vector<1x128xf32>,
    %c6 = arith.constant 6 : index
    %42 = memref.load %arg1[%c6] : memref<8xi32, #tpu.memory_space<smem>>
    %c0_i32_34 = arith.constant 0 : i32
    %43 = arith.maxsi %42, %c0_i32_34 : i32
    %c15_i32_35 = arith.constant 15 : i32
    %44 = arith.minsi %43, %c15_i32_35 : i32
    %45 = arith.index_cast %44 : i32 to index
    %c0_36 = arith.constant 0 : index
    %c0_37 = arith.constant 0 : index
    %46 = vector.load %arg2[%45, %c0_36, %c0_37] : memref<16x1x128xf32, #tpu.memory_space<vmem>>, vector<1x1x128xf32>
    %47 = vector.shape_cast %46 : vector<1x1x128xf32> to vector<1x128xf32>
    %c6_38 = arith.constant 6 : index
    %c0_39 = arith.constant 0 : index
    %48 = vector.load %arg12[%c6_38, %c0_39] : memref<8x128xf32, #tpu.memory_space<vmem>>, vector<1x128xf32>
    tpu.vector_store %arg12[%c6_38, %c0_39], %47 {strides = array<i32>} : memref<8x128xf32, #tpu.memory_space<vmem>>, vector<1x128xf32>,
    %c7 = arith.constant 7 : index
    %49 = memref.load %arg1[%c7] : memref<8xi32, #tpu.memory_space<smem>>
    %c0_i32_40 = arith.constant 0 : i32
    %50 = arith.maxsi %49, %c0_i32_40 : i32
    %c15_i32_41 = arith.constant 15 : i32
    %51 = arith.minsi %50, %c15_i32_41 : i32
    %52 = arith.index_cast %51 : i32 to index
    %c0_42 = arith.constant 0 : index
    %c0_43 = arith.constant 0 : index
    %53 = vector.load %arg2[%52, %c0_42, %c0_43] : memref<16x1x128xf32, #tpu.memory_space<vmem>>, vector<1x1x128xf32>
    %54 = vector.shape_cast %53 : vector<1x1x128xf32> to vector<1x128xf32>
    %c7_44 = arith.constant 7 : index
    %c0_45 = arith.constant 0 : index
    %55 = vector.load %arg12[%c7_44, %c0_45] : memref<8x128xf32, #tpu.memory_space<vmem>>, vector<1x128xf32>
    tpu.vector_store %arg12[%c7_44, %c0_45], %54 {strides = array<i32>} : memref<8x128xf32, #tpu.memory_space<vmem>>, vector<1x128xf32>,
    %c0_46 = arith.constant 0 : index
    %c0_47 = arith.constant 0 : index
    %56 = vector.load %arg12[%c0_46, %c0_47] : memref<8x128xf32, #tpu.memory_space<vmem>>, vector<8x128xf32>
    %c0_48 = arith.constant 0 : index
    %c0_49 = arith.constant 0 : index
    %57 = vector.load %arg4[%c0_48, %c0_49] : memref<128x384xf32, #tpu.memory_space<vmem>>, vector<128x384xf32>
    %cst = arith.constant dense<0.000000e+00> : vector<8x384xf32>
    %58 = tpu.matmul %56, %57, %cst {dimension_numbers = #tpu.dot_dimension_numbers<[1], [0], [0], [1], [0, 0, 1, 1], [], []>} : vector<8x128xf32>, vector<128x384xf32>, vector<8x384xf32> -> vector<8x384xf32>
    %c0_50 = arith.constant 0 : index
    %c0_51 = arith.constant 0 : index
    %59 = vector.load %arg6[%c0_50, %c0_51] : memref<1x384xf32, #tpu.memory_space<vmem>>, vector<1x384xf32>
    %60 = vector.broadcast %59 : vector<1x384xf32> to vector<8x384xf32>
    %61 = arith.addf %58, %60 : vector<8x384xf32>
    %c0_52 = arith.constant 0 : index
    %c0_53 = arith.constant 0 : index
    %62 = vector.load %arg3[%c0_52, %c0_53] : memref<1x128xf32, #tpu.memory_space<vmem>>, vector<1x128xf32>
    %63 = vector.extract_strided_slice %61 {offsets = [0, 0], sizes = [1, 384], strides = [1, 1]} : vector<8x384xf32> to vector<1x384xf32>
    %c0_54 = arith.constant 0 : index
    %c0_55 = arith.constant 0 : index
    %64 = vector.load %arg5[%c0_54, %c0_55] : memref<128x384xf32, #tpu.memory_space<vmem>>, vector<128x384xf32>
    %cst_56 = arith.constant dense<0.000000e+00> : vector<1x384xf32>
    %65 = tpu.matmul %62, %64, %cst_56 {dimension_numbers = #tpu.dot_dimension_numbers<[1], [0], [0], [1], [0, 0, 1, 1], [], []>} : vector<1x128xf32>, vector<128x384xf32>, vector<1x384xf32> -> vector<1x384xf32>
    %c0_57 = arith.constant 0 : index
    %c0_58 = arith.constant 0 : index
    %66 = vector.load %arg7[%c0_57, %c0_58] : memref<1x384xf32, #tpu.memory_space<vmem>>, vector<1x384xf32>
    %67 = arith.addf %65, %66 : vector<1x384xf32>
    %68 = vector.extract_strided_slice %63 {offsets = [0, 0], sizes = [1, 256], strides = [1, 1]} : vector<1x384xf32> to vector<1x256xf32>
    %69 = vector.extract_strided_slice %67 {offsets = [0, 0], sizes = [1, 256], strides = [1, 1]} : vector<1x384xf32> to vector<1x256xf32>
    %70 = arith.addf %68, %69 : vector<1x256xf32>
    %71 = arith.negf %70 : vector<1x256xf32>
    %72 = math.exp %71 : vector<1x256xf32>
    %cst_59 = arith.constant 1.000000e+00 : f32
    %73 = vector.broadcast %cst_59 : f32 to vector<1x256xf32>
    %74 = arith.addf %73, %72 : vector<1x256xf32>
    %75 = arith.divf %73, %74 : vector<1x256xf32>
    %76 = vector.extract_strided_slice %75 {offsets = [0, 0], sizes = [1, 128], strides = [1, 1]} : vector<1x256xf32> to vector<1x128xf32>
    %77 = vector.extract_strided_slice %75 {offsets = [0, 128], sizes = [1, 128], strides = [1, 1]} : vector<1x256xf32> to vector<1x128xf32>
    %78 = vector.extract_strided_slice %63 {offsets = [0, 256], sizes = [1, 128], strides = [1, 1]} : vector<1x384xf32> to vector<1x128xf32>
    %79 = vector.extract_strided_slice %67 {offsets = [0, 256], sizes = [1, 128], strides = [1, 1]} : vector<1x384xf32> to vector<1x128xf32>
    %80 = arith.mulf %76, %79 : vector<1x128xf32>
    %81 = arith.addf %78, %80 : vector<1x128xf32>
    %82 = math.tanh %81 : vector<1x128xf32>
    %cst_60 = arith.constant 1.000000e+00 : f32
    %83 = vector.broadcast %cst_60 : f32 to vector<1x128xf32>
    %84 = arith.subf %83, %77 : vector<1x128xf32>
    %85 = arith.mulf %84, %82 : vector<1x128xf32>
    %86 = arith.mulf %77, %62 : vector<1x128xf32>
    %87 = arith.addf %85, %86 : vector<1x128xf32>
    %c0_61 = arith.constant 0 : index
    %c0_62 = arith.constant 0 : index
    %88 = vector.load %arg13[%c0_61, %c0_62] : memref<8x128xf32, #tpu.memory_space<vmem>>, vector<1x128xf32>
    tpu.vector_store %arg13[%c0_61, %c0_62], %87 {strides = array<i32>} : memref<8x128xf32, #tpu.memory_space<vmem>>, vector<1x128xf32>,
    %89 = vector.extract_strided_slice %61 {offsets = [1, 0], sizes = [1, 384], strides = [1, 1]} : vector<8x384xf32> to vector<1x384xf32>
    %c0_63 = arith.constant 0 : index
    %c0_64 = arith.constant 0 : index
    %90 = vector.load %arg5[%c0_63, %c0_64] : memref<128x384xf32, #tpu.memory_space<vmem>>, vector<128x384xf32>
    %cst_65 = arith.constant dense<0.000000e+00> : vector<1x384xf32>
    %91 = tpu.matmul %87, %90, %cst_65 {dimension_numbers = #tpu.dot_dimension_numbers<[1], [0], [0], [1], [0, 0, 1, 1], [], []>} : vector<1x128xf32>, vector<128x384xf32>, vector<1x384xf32> -> vector<1x384xf32>
    %c0_66 = arith.constant 0 : index
    %c0_67 = arith.constant 0 : index
    %92 = vector.load %arg7[%c0_66, %c0_67] : memref<1x384xf32, #tpu.memory_space<vmem>>, vector<1x384xf32>
    %93 = arith.addf %91, %92 : vector<1x384xf32>
    %94 = vector.extract_strided_slice %89 {offsets = [0, 0], sizes = [1, 256], strides = [1, 1]} : vector<1x384xf32> to vector<1x256xf32>
    %95 = vector.extract_strided_slice %93 {offsets = [0, 0], sizes = [1, 256], strides = [1, 1]} : vector<1x384xf32> to vector<1x256xf32>
    %96 = arith.addf %94, %95 : vector<1x256xf32>
    %97 = arith.negf %96 : vector<1x256xf32>
    %98 = math.exp %97 : vector<1x256xf32>
    %cst_68 = arith.constant 1.000000e+00 : f32
    %99 = vector.broadcast %cst_68 : f32 to vector<1x256xf32>
    %100 = arith.addf %99, %98 : vector<1x256xf32>
    %101 = arith.divf %99, %100 : vector<1x256xf32>
    %102 = vector.extract_strided_slice %101 {offsets = [0, 0], sizes = [1, 128], strides = [1, 1]} : vector<1x256xf32> to vector<1x128xf32>
    %103 = vector.extract_strided_slice %101 {offsets = [0, 128], sizes = [1, 128], strides = [1, 1]} : vector<1x256xf32> to vector<1x128xf32>
    %104 = vector.extract_strided_slice %89 {offsets = [0, 256], sizes = [1, 128], strides = [1, 1]} : vector<1x384xf32> to vector<1x128xf32>
    %105 = vector.extract_strided_slice %93 {offsets = [0, 256], sizes = [1, 128], strides = [1, 1]} : vector<1x384xf32> to vector<1x128xf32>
    %106 = arith.mulf %102, %105 : vector<1x128xf32>
    %107 = arith.addf %104, %106 : vector<1x128xf32>
    %108 = math.tanh %107 : vector<1x128xf32>
    %cst_69 = arith.constant 1.000000e+00 : f32
    %109 = vector.broadcast %cst_69 : f32 to vector<1x128xf32>
    %110 = arith.subf %109, %103 : vector<1x128xf32>
    %111 = arith.mulf %110, %108 : vector<1x128xf32>
    %112 = arith.mulf %103, %87 : vector<1x128xf32>
    %113 = arith.addf %111, %112 : vector<1x128xf32>
    %c1_70 = arith.constant 1 : index
    %c0_71 = arith.constant 0 : index
    %114 = vector.load %arg13[%c1_70, %c0_71] : memref<8x128xf32, #tpu.memory_space<vmem>>, vector<1x128xf32>
    tpu.vector_store %arg13[%c1_70, %c0_71], %113 {strides = array<i32>} : memref<8x128xf32, #tpu.memory_space<vmem>>, vector<1x128xf32>,
    %115 = vector.extract_strided_slice %61 {offsets = [2, 0], sizes = [1, 384], strides = [1, 1]} : vector<8x384xf32> to vector<1x384xf32>
    %c0_72 = arith.constant 0 : index
    %c0_73 = arith.constant 0 : index
    %116 = vector.load %arg5[%c0_72, %c0_73] : memref<128x384xf32, #tpu.memory_space<vmem>>, vector<128x384xf32>
    %cst_74 = arith.constant dense<0.000000e+00> : vector<1x384xf32>
    %117 = tpu.matmul %113, %116, %cst_74 {dimension_numbers = #tpu.dot_dimension_numbers<[1], [0], [0], [1], [0, 0, 1, 1], [], []>} : vector<1x128xf32>, vector<128x384xf32>, vector<1x384xf32> -> vector<1x384xf32>
    %c0_75 = arith.constant 0 : index
    %c0_76 = arith.constant 0 : index
    %118 = vector.load %arg7[%c0_75, %c0_76] : memref<1x384xf32, #tpu.memory_space<vmem>>, vector<1x384xf32>
    %119 = arith.addf %117, %118 : vector<1x384xf32>
    %120 = vector.extract_strided_slice %115 {offsets = [0, 0], sizes = [1, 256], strides = [1, 1]} : vector<1x384xf32> to vector<1x256xf32>
    %121 = vector.extract_strided_slice %119 {offsets = [0, 0], sizes = [1, 256], strides = [1, 1]} : vector<1x384xf32> to vector<1x256xf32>
    %122 = arith.addf %120, %121 : vector<1x256xf32>
    %123 = arith.negf %122 : vector<1x256xf32>
    %124 = math.exp %123 : vector<1x256xf32>
    %cst_77 = arith.constant 1.000000e+00 : f32
    %125 = vector.broadcast %cst_77 : f32 to vector<1x256xf32>
    %126 = arith.addf %125, %124 : vector<1x256xf32>
    %127 = arith.divf %125, %126 : vector<1x256xf32>
    %128 = vector.extract_strided_slice %127 {offsets = [0, 0], sizes = [1, 128], strides = [1, 1]} : vector<1x256xf32> to vector<1x128xf32>
    %129 = vector.extract_strided_slice %127 {offsets = [0, 128], sizes = [1, 128], strides = [1, 1]} : vector<1x256xf32> to vector<1x128xf32>
    %130 = vector.extract_strided_slice %115 {offsets = [0, 256], sizes = [1, 128], strides = [1, 1]} : vector<1x384xf32> to vector<1x128xf32>
    %131 = vector.extract_strided_slice %119 {offsets = [0, 256], sizes = [1, 128], strides = [1, 1]} : vector<1x384xf32> to vector<1x128xf32>
    %132 = arith.mulf %128, %131 : vector<1x128xf32>
    %133 = arith.addf %130, %132 : vector<1x128xf32>
    %134 = math.tanh %133 : vector<1x128xf32>
    %cst_78 = arith.constant 1.000000e+00 : f32
    %135 = vector.broadcast %cst_78 : f32 to vector<1x128xf32>
    %136 = arith.subf %135, %129 : vector<1x128xf32>
    %137 = arith.mulf %136, %134 : vector<1x128xf32>
    %138 = arith.mulf %129, %113 : vector<1x128xf32>
    %139 = arith.addf %137, %138 : vector<1x128xf32>
    %c2_79 = arith.constant 2 : index
    %c0_80 = arith.constant 0 : index
    %140 = vector.load %arg13[%c2_79, %c0_80] : memref<8x128xf32, #tpu.memory_space<vmem>>, vector<1x128xf32>
    tpu.vector_store %arg13[%c2_79, %c0_80], %139 {strides = array<i32>} : memref<8x128xf32, #tpu.memory_space<vmem>>, vector<1x128xf32>,
    %141 = vector.extract_strided_slice %61 {offsets = [3, 0], sizes = [1, 384], strides = [1, 1]} : vector<8x384xf32> to vector<1x384xf32>
    %c0_81 = arith.constant 0 : index
    %c0_82 = arith.constant 0 : index
    %142 = vector.load %arg5[%c0_81, %c0_82] : memref<128x384xf32, #tpu.memory_space<vmem>>, vector<128x384xf32>
    %cst_83 = arith.constant dense<0.000000e+00> : vector<1x384xf32>
    %143 = tpu.matmul %139, %142, %cst_83 {dimension_numbers = #tpu.dot_dimension_numbers<[1], [0], [0], [1], [0, 0, 1, 1], [], []>} : vector<1x128xf32>, vector<128x384xf32>, vector<1x384xf32> -> vector<1x384xf32>
    %c0_84 = arith.constant 0 : index
    %c0_85 = arith.constant 0 : index
    %144 = vector.load %arg7[%c0_84, %c0_85] : memref<1x384xf32, #tpu.memory_space<vmem>>, vector<1x384xf32>
    %145 = arith.addf %143, %144 : vector<1x384xf32>
    %146 = vector.extract_strided_slice %141 {offsets = [0, 0], sizes = [1, 256], strides = [1, 1]} : vector<1x384xf32> to vector<1x256xf32>
    %147 = vector.extract_strided_slice %145 {offsets = [0, 0], sizes = [1, 256], strides = [1, 1]} : vector<1x384xf32> to vector<1x256xf32>
    %148 = arith.addf %146, %147 : vector<1x256xf32>
    %149 = arith.negf %148 : vector<1x256xf32>
    %150 = math.exp %149 : vector<1x256xf32>
    %cst_86 = arith.constant 1.000000e+00 : f32
    %151 = vector.broadcast %cst_86 : f32 to vector<1x256xf32>
    %152 = arith.addf %151, %150 : vector<1x256xf32>
    %153 = arith.divf %151, %152 : vector<1x256xf32>
    %154 = vector.extract_strided_slice %153 {offsets = [0, 0], sizes = [1, 128], strides = [1, 1]} : vector<1x256xf32> to vector<1x128xf32>
    %155 = vector.extract_strided_slice %153 {offsets = [0, 128], sizes = [1, 128], strides = [1, 1]} : vector<1x256xf32> to vector<1x128xf32>
    %156 = vector.extract_strided_slice %141 {offsets = [0, 256], sizes = [1, 128], strides = [1, 1]} : vector<1x384xf32> to vector<1x128xf32>
    %157 = vector.extract_strided_slice %145 {offsets = [0, 256], sizes = [1, 128], strides = [1, 1]} : vector<1x384xf32> to vector<1x128xf32>
    %158 = arith.mulf %154, %157 : vector<1x128xf32>
    %159 = arith.addf %156, %158 : vector<1x128xf32>
    %160 = math.tanh %159 : vector<1x128xf32>
    %cst_87 = arith.constant 1.000000e+00 : f32
    %161 = vector.broadcast %cst_87 : f32 to vector<1x128xf32>
    %162 = arith.subf %161, %155 : vector<1x128xf32>
    %163 = arith.mulf %162, %160 : vector<1x128xf32>
    %164 = arith.mulf %155, %139 : vector<1x128xf32>
    %165 = arith.addf %163, %164 : vector<1x128xf32>
    %c3_88 = arith.constant 3 : index
    %c0_89 = arith.constant 0 : index
    %166 = vector.load %arg13[%c3_88, %c0_89] : memref<8x128xf32, #tpu.memory_space<vmem>>, vector<1x128xf32>
    tpu.vector_store %arg13[%c3_88, %c0_89], %165 {strides = array<i32>} : memref<8x128xf32, #tpu.memory_space<vmem>>, vector<1x128xf32>,
    %167 = vector.extract_strided_slice %61 {offsets = [4, 0], sizes = [1, 384], strides = [1, 1]} : vector<8x384xf32> to vector<1x384xf32>
    %c0_90 = arith.constant 0 : index
    %c0_91 = arith.constant 0 : index
    %168 = vector.load %arg5[%c0_90, %c0_91] : memref<128x384xf32, #tpu.memory_space<vmem>>, vector<128x384xf32>
    %cst_92 = arith.constant dense<0.000000e+00> : vector<1x384xf32>
    %169 = tpu.matmul %165, %168, %cst_92 {dimension_numbers = #tpu.dot_dimension_numbers<[1], [0], [0], [1], [0, 0, 1, 1], [], []>} : vector<1x128xf32>, vector<128x384xf32>, vector<1x384xf32> -> vector<1x384xf32>
    %c0_93 = arith.constant 0 : index
    %c0_94 = arith.constant 0 : index
    %170 = vector.load %arg7[%c0_93, %c0_94] : memref<1x384xf32, #tpu.memory_space<vmem>>, vector<1x384xf32>
    %171 = arith.addf %169, %170 : vector<1x384xf32>
    %172 = vector.extract_strided_slice %167 {offsets = [0, 0], sizes = [1, 256], strides = [1, 1]} : vector<1x384xf32> to vector<1x256xf32>
    %173 = vector.extract_strided_slice %171 {offsets = [0, 0], sizes = [1, 256], strides = [1, 1]} : vector<1x384xf32> to vector<1x256xf32>
    %174 = arith.addf %172, %173 : vector<1x256xf32>
    %175 = arith.negf %174 : vector<1x256xf32>
    %176 = math.exp %175 : vector<1x256xf32>
    %cst_95 = arith.constant 1.000000e+00 : f32
    %177 = vector.broadcast %cst_95 : f32 to vector<1x256xf32>
    %178 = arith.addf %177, %176 : vector<1x256xf32>
    %179 = arith.divf %177, %178 : vector<1x256xf32>
    %180 = vector.extract_strided_slice %179 {offsets = [0, 0], sizes = [1, 128], strides = [1, 1]} : vector<1x256xf32> to vector<1x128xf32>
    %181 = vector.extract_strided_slice %179 {offsets = [0, 128], sizes = [1, 128], strides = [1, 1]} : vector<1x256xf32> to vector<1x128xf32>
    %182 = vector.extract_strided_slice %167 {offsets = [0, 256], sizes = [1, 128], strides = [1, 1]} : vector<1x384xf32> to vector<1x128xf32>
    %183 = vector.extract_strided_slice %171 {offsets = [0, 256], sizes = [1, 128], strides = [1, 1]} : vector<1x384xf32> to vector<1x128xf32>
    %184 = arith.mulf %180, %183 : vector<1x128xf32>
    %185 = arith.addf %182, %184 : vector<1x128xf32>
    %186 = math.tanh %185 : vector<1x128xf32>
    %cst_96 = arith.constant 1.000000e+00 : f32
    %187 = vector.broadcast %cst_96 : f32 to vector<1x128xf32>
    %188 = arith.subf %187, %181 : vector<1x128xf32>
    %189 = arith.mulf %188, %186 : vector<1x128xf32>
    %190 = arith.mulf %181, %165 : vector<1x128xf32>
    %191 = arith.addf %189, %190 : vector<1x128xf32>
    %c4_97 = arith.constant 4 : index
    %c0_98 = arith.constant 0 : index
    %192 = vector.load %arg13[%c4_97, %c0_98] : memref<8x128xf32, #tpu.memory_space<vmem>>, vector<1x128xf32>
    tpu.vector_store %arg13[%c4_97, %c0_98], %191 {strides = array<i32>} : memref<8x128xf32, #tpu.memory_space<vmem>>, vector<1x128xf32>,
    %193 = vector.extract_strided_slice %61 {offsets = [5, 0], sizes = [1, 384], strides = [1, 1]} : vector<8x384xf32> to vector<1x384xf32>
    %c0_99 = arith.constant 0 : index
    %c0_100 = arith.constant 0 : index
    %194 = vector.load %arg5[%c0_99, %c0_100] : memref<128x384xf32, #tpu.memory_space<vmem>>, vector<128x384xf32>
    %cst_101 = arith.constant dense<0.000000e+00> : vector<1x384xf32>
    %195 = tpu.matmul %191, %194, %cst_101 {dimension_numbers = #tpu.dot_dimension_numbers<[1], [0], [0], [1], [0, 0, 1, 1], [], []>} : vector<1x128xf32>, vector<128x384xf32>, vector<1x384xf32> -> vector<1x384xf32>
    %c0_102 = arith.constant 0 : index
    %c0_103 = arith.constant 0 : index
    %196 = vector.load %arg7[%c0_102, %c0_103] : memref<1x384xf32, #tpu.memory_space<vmem>>, vector<1x384xf32>
    %197 = arith.addf %195, %196 : vector<1x384xf32>
    %198 = vector.extract_strided_slice %193 {offsets = [0, 0], sizes = [1, 256], strides = [1, 1]} : vector<1x384xf32> to vector<1x256xf32>
    %199 = vector.extract_strided_slice %197 {offsets = [0, 0], sizes = [1, 256], strides = [1, 1]} : vector<1x384xf32> to vector<1x256xf32>
    %200 = arith.addf %198, %199 : vector<1x256xf32>
    %201 = arith.negf %200 : vector<1x256xf32>
    %202 = math.exp %201 : vector<1x256xf32>
    %cst_104 = arith.constant 1.000000e+00 : f32
    %203 = vector.broadcast %cst_104 : f32 to vector<1x256xf32>
    %204 = arith.addf %203, %202 : vector<1x256xf32>
    %205 = arith.divf %203, %204 : vector<1x256xf32>
    %206 = vector.extract_strided_slice %205 {offsets = [0, 0], sizes = [1, 128], strides = [1, 1]} : vector<1x256xf32> to vector<1x128xf32>
    %207 = vector.extract_strided_slice %205 {offsets = [0, 128], sizes = [1, 128], strides = [1, 1]} : vector<1x256xf32> to vector<1x128xf32>
    %208 = vector.extract_strided_slice %193 {offsets = [0, 256], sizes = [1, 128], strides = [1, 1]} : vector<1x384xf32> to vector<1x128xf32>
    %209 = vector.extract_strided_slice %197 {offsets = [0, 256], sizes = [1, 128], strides = [1, 1]} : vector<1x384xf32> to vector<1x128xf32>
    %210 = arith.mulf %206, %209 : vector<1x128xf32>
    %211 = arith.addf %208, %210 : vector<1x128xf32>
    %212 = math.tanh %211 : vector<1x128xf32>
    %cst_105 = arith.constant 1.000000e+00 : f32
    %213 = vector.broadcast %cst_105 : f32 to vector<1x128xf32>
    %214 = arith.subf %213, %207 : vector<1x128xf32>
    %215 = arith.mulf %214, %212 : vector<1x128xf32>
    %216 = arith.mulf %207, %191 : vector<1x128xf32>
    %217 = arith.addf %215, %216 : vector<1x128xf32>
    %c5_106 = arith.constant 5 : index
    %c0_107 = arith.constant 0 : index
    %218 = vector.load %arg13[%c5_106, %c0_107] : memref<8x128xf32, #tpu.memory_space<vmem>>, vector<1x128xf32>
    tpu.vector_store %arg13[%c5_106, %c0_107], %217 {strides = array<i32>} : memref<8x128xf32, #tpu.memory_space<vmem>>, vector<1x128xf32>,
    %219 = vector.extract_strided_slice %61 {offsets = [6, 0], sizes = [1, 384], strides = [1, 1]} : vector<8x384xf32> to vector<1x384xf32>
    %c0_108 = arith.constant 0 : index
    %c0_109 = arith.constant 0 : index
    %220 = vector.load %arg5[%c0_108, %c0_109] : memref<128x384xf32, #tpu.memory_space<vmem>>, vector<128x384xf32>
    %cst_110 = arith.constant dense<0.000000e+00> : vector<1x384xf32>
    %221 = tpu.matmul %217, %220, %cst_110 {dimension_numbers = #tpu.dot_dimension_numbers<[1], [0], [0], [1], [0, 0, 1, 1], [], []>} : vector<1x128xf32>, vector<128x384xf32>, vector<1x384xf32> -> vector<1x384xf32>
    %c0_111 = arith.constant 0 : index
    %c0_112 = arith.constant 0 : index
    %222 = vector.load %arg7[%c0_111, %c0_112] : memref<1x384xf32, #tpu.memory_space<vmem>>, vector<1x384xf32>
    %223 = arith.addf %221, %222 : vector<1x384xf32>
    %224 = vector.extract_strided_slice %219 {offsets = [0, 0], sizes = [1, 256], strides = [1, 1]} : vector<1x384xf32> to vector<1x256xf32>
    %225 = vector.extract_strided_slice %223 {offsets = [0, 0], sizes = [1, 256], strides = [1, 1]} : vector<1x384xf32> to vector<1x256xf32>
    %226 = arith.addf %224, %225 : vector<1x256xf32>
    %227 = arith.negf %226 : vector<1x256xf32>
    %228 = math.exp %227 : vector<1x256xf32>
    %cst_113 = arith.constant 1.000000e+00 : f32
    %229 = vector.broadcast %cst_113 : f32 to vector<1x256xf32>
    %230 = arith.addf %229, %228 : vector<1x256xf32>
    %231 = arith.divf %229, %230 : vector<1x256xf32>
    %232 = vector.extract_strided_slice %231 {offsets = [0, 0], sizes = [1, 128], strides = [1, 1]} : vector<1x256xf32> to vector<1x128xf32>
    %233 = vector.extract_strided_slice %231 {offsets = [0, 128], sizes = [1, 128], strides = [1, 1]} : vector<1x256xf32> to vector<1x128xf32>
    %234 = vector.extract_strided_slice %219 {offsets = [0, 256], sizes = [1, 128], strides = [1, 1]} : vector<1x384xf32> to vector<1x128xf32>
    %235 = vector.extract_strided_slice %223 {offsets = [0, 256], sizes = [1, 128], strides = [1, 1]} : vector<1x384xf32> to vector<1x128xf32>
    %236 = arith.mulf %232, %235 : vector<1x128xf32>
    %237 = arith.addf %234, %236 : vector<1x128xf32>
    %238 = math.tanh %237 : vector<1x128xf32>
    %cst_114 = arith.constant 1.000000e+00 : f32
    %239 = vector.broadcast %cst_114 : f32 to vector<1x128xf32>
    %240 = arith.subf %239, %233 : vector<1x128xf32>
    %241 = arith.mulf %240, %238 : vector<1x128xf32>
    %242 = arith.mulf %233, %217 : vector<1x128xf32>
    %243 = arith.addf %241, %242 : vector<1x128xf32>
    %c6_115 = arith.constant 6 : index
    %c0_116 = arith.constant 0 : index
    %244 = vector.load %arg13[%c6_115, %c0_116] : memref<8x128xf32, #tpu.memory_space<vmem>>, vector<1x128xf32>
    tpu.vector_store %arg13[%c6_115, %c0_116], %243 {strides = array<i32>} : memref<8x128xf32, #tpu.memory_space<vmem>>, vector<1x128xf32>,
    %245 = vector.extract_strided_slice %61 {offsets = [7, 0], sizes = [1, 384], strides = [1, 1]} : vector<8x384xf32> to vector<1x384xf32>
    %c0_117 = arith.constant 0 : index
    %c0_118 = arith.constant 0 : index
    %246 = vector.load %arg5[%c0_117, %c0_118] : memref<128x384xf32, #tpu.memory_space<vmem>>, vector<128x384xf32>
    %cst_119 = arith.constant dense<0.000000e+00> : vector<1x384xf32>
    %247 = tpu.matmul %243, %246, %cst_119 {dimension_numbers = #tpu.dot_dimension_numbers<[1], [0], [0], [1], [0, 0, 1, 1], [], []>} : vector<1x128xf32>, vector<128x384xf32>, vector<1x384xf32> -> vector<1x384xf32>
    %c0_120 = arith.constant 0 : index
    %c0_121 = arith.constant 0 : index
    %248 = vector.load %arg7[%c0_120, %c0_121] : memref<1x384xf32, #tpu.memory_space<vmem>>, vector<1x384xf32>
    %249 = arith.addf %247, %248 : vector<1x384xf32>
    %250 = vector.extract_strided_slice %245 {offsets = [0, 0], sizes = [1, 256], strides = [1, 1]} : vector<1x384xf32> to vector<1x256xf32>
    %251 = vector.extract_strided_slice %249 {offsets = [0, 0], sizes = [1, 256], strides = [1, 1]} : vector<1x384xf32> to vector<1x256xf32>
    %252 = arith.addf %250, %251 : vector<1x256xf32>
    %253 = arith.negf %252 : vector<1x256xf32>
    %254 = math.exp %253 : vector<1x256xf32>
    %cst_122 = arith.constant 1.000000e+00 : f32
    %255 = vector.broadcast %cst_122 : f32 to vector<1x256xf32>
    %256 = arith.addf %255, %254 : vector<1x256xf32>
    %257 = arith.divf %255, %256 : vector<1x256xf32>
    %258 = vector.extract_strided_slice %257 {offsets = [0, 0], sizes = [1, 128], strides = [1, 1]} : vector<1x256xf32> to vector<1x128xf32>
    %259 = vector.extract_strided_slice %257 {offsets = [0, 128], sizes = [1, 128], strides = [1, 1]} : vector<1x256xf32> to vector<1x128xf32>
    %260 = vector.extract_strided_slice %245 {offsets = [0, 256], sizes = [1, 128], strides = [1, 1]} : vector<1x384xf32> to vector<1x128xf32>
    %261 = vector.extract_strided_slice %249 {offsets = [0, 256], sizes = [1, 128], strides = [1, 1]} : vector<1x384xf32> to vector<1x128xf32>
    %262 = arith.mulf %258, %261 : vector<1x128xf32>
    %263 = arith.addf %260, %262 : vector<1x128xf32>
    %264 = math.tanh %263 : vector<1x128xf32>
    %cst_123 = arith.constant 1.000000e+00 : f32
    %265 = vector.broadcast %cst_123 : f32 to vector<1x128xf32>
    %266 = arith.subf %265, %259 : vector<1x128xf32>
    %267 = arith.mulf %266, %264 : vector<1x128xf32>
    %268 = arith.mulf %259, %243 : vector<1x128xf32>
    %269 = arith.addf %267, %268 : vector<1x128xf32>
    %c7_124 = arith.constant 7 : index
    %c0_125 = arith.constant 0 : index
    %270 = vector.load %arg13[%c7_124, %c0_125] : memref<8x128xf32, #tpu.memory_space<vmem>>, vector<1x128xf32>
    tpu.vector_store %arg13[%c7_124, %c0_125], %269 {strides = array<i32>} : memref<8x128xf32, #tpu.memory_space<vmem>>, vector<1x128xf32>,
    %c0_126 = arith.constant 0 : index
    %c0_127 = arith.constant 0 : index
    %271 = vector.load %arg11[%c0_126, %c0_127] : memref<1x128xf32, #tpu.memory_space<vmem>>, vector<1x128xf32>
    tpu.vector_store %arg11[%c0_126, %c0_127], %269 {strides = array<i32>} : memref<1x128xf32, #tpu.memory_space<vmem>>, vector<1x128xf32>,
    %c0_128 = arith.constant 0 : index
    %c0_129 = arith.constant 0 : index
    %272 = vector.load %arg13[%c0_128, %c0_129] : memref<8x128xf32, #tpu.memory_space<vmem>>, vector<8x128xf32>
    %c0_130 = arith.constant 0 : index
    %c0_131 = arith.constant 0 : index
    %273 = vector.load %arg8[%c0_130, %c0_131] : memref<128x128xf32, #tpu.memory_space<vmem>>, vector<128x128xf32>
    %cst_132 = arith.constant dense<0.000000e+00> : vector<8x128xf32>
    %274 = tpu.matmul %272, %273, %cst_132 {dimension_numbers = #tpu.dot_dimension_numbers<[1], [0], [0], [1], [0, 0, 1, 1], [], []>} : vector<8x128xf32>, vector<128x128xf32>, vector<8x128xf32> -> vector<8x128xf32>
    %c0_133 = arith.constant 0 : index
    %c0_134 = arith.constant 0 : index
    %275 = vector.load %arg9[%c0_133, %c0_134] : memref<1x128xf32, #tpu.memory_space<vmem>>, vector<1x128xf32>
    %276 = vector.broadcast %275 : vector<1x128xf32> to vector<8x128xf32>
    %277 = arith.addf %274, %276 : vector<8x128xf32>
    %c0_135 = arith.constant 0 : index
    %c0_136 = arith.constant 0 : index
    %278 = vector.load %arg10[%c0_135, %c0_136] : memref<8x128xf32, #tpu.memory_space<vmem>>, vector<8x128xf32>
    tpu.vector_store %arg10[%c0_135, %c0_136], %277 {strides = array<i32>} : memref<8x128xf32, #tpu.memory_space<vmem>>, vector<8x128xf32>,
    return
  }
  func.func @transform_0(%arg0: i32, %arg1: memref<8xi32, #tpu.memory_space<smem>>) -> (i32, i32, i32) {
    %c0_i32 = arith.constant 0 : i32
    %c0_i32_0 = arith.constant 0 : i32
    %c0_i32_1 = arith.constant 0 : i32
    %c0_i32_2 = arith.constant 0 : i32
    return %c0_i32, %c0_i32_0, %c0_i32_1 : i32, i32, i32
  }
  func.func @transform_1(%arg0: i32, %arg1: memref<8xi32, #tpu.memory_space<smem>>) -> (i32, i32) {
    %c0_i32 = arith.constant 0 : i32
    %c0_i32_0 = arith.constant 0 : i32
    %c0_i32_1 = arith.constant 0 : i32
    return %c0_i32, %c0_i32_0 : i32, i32
  }
  func.func @transform_2(%arg0: i32, %arg1: memref<8xi32, #tpu.memory_space<smem>>) -> (i32, i32) {
    %c0_i32 = arith.constant 0 : i32
    %c0_i32_0 = arith.constant 0 : i32
    %c0_i32_1 = arith.constant 0 : i32
    return %c0_i32, %c0_i32_0 : i32, i32
  }
  func.func @transform_3(%arg0: i32, %arg1: memref<8xi32, #tpu.memory_space<smem>>) -> (i32, i32) {
    %c0_i32 = arith.constant 0 : i32
    %c0_i32_0 = arith.constant 0 : i32
    %c0_i32_1 = arith.constant 0 : i32
    return %c0_i32, %c0_i32_0 : i32, i32
  }
  func.func @transform_4(%arg0: i32, %arg1: memref<8xi32, #tpu.memory_space<smem>>) -> (i32, i32) {
    %c0_i32 = arith.constant 0 : i32
    %c0_i32_0 = arith.constant 0 : i32
    %c0_i32_1 = arith.constant 0 : i32
    return %c0_i32, %c0_i32_0 : i32, i32
  }
  func.func @transform_5(%arg0: i32, %arg1: memref<8xi32, #tpu.memory_space<smem>>) -> (i32, i32) {
    %c0_i32 = arith.constant 0 : i32
    %c0_i32_0 = arith.constant 0 : i32
    %c0_i32_1 = arith.constant 0 : i32
    return %c0_i32, %c0_i32_0 : i32, i32
  }
  func.func @transform_6(%arg0: i32, %arg1: memref<8xi32, #tpu.memory_space<smem>>) -> (i32, i32) {
    %c0_i32 = arith.constant 0 : i32
    %c0_i32_0 = arith.constant 0 : i32
    %c0_i32_1 = arith.constant 0 : i32
    return %c0_i32, %c0_i32_0 : i32, i32
  }
  func.func @transform_7(%arg0: i32, %arg1: memref<8xi32, #tpu.memory_space<smem>>) -> (i32, i32) {
    %c0_i32 = arith.constant 0 : i32
    %c0_i32_0 = arith.constant 0 : i32
    %c0_i32_1 = arith.constant 0 : i32
    return %c0_i32, %c0_i32_0 : i32, i32
  }
  func.func @transform_8(%arg0: i32, %arg1: memref<8xi32, #tpu.memory_space<smem>>) -> (i32, i32) {
    %c0_i32 = arith.constant 0 : i32
    %c0_i32_0 = arith.constant 0 : i32
    %c0_i32_1 = arith.constant 0 : i32
    return %c0_i32, %c0_i32_0 : i32, i32
  }
  func.func @transform_9(%arg0: i32, %arg1: memref<8xi32, #tpu.memory_space<smem>>) -> (i32, i32) {
    %c0_i32 = arith.constant 0 : i32
    %c0_i32_0 = arith.constant 0 : i32
    %c0_i32_1 = arith.constant 0 : i32
    return %c0_i32, %c0_i32_0 : i32, i32
  }
}

</mosaic_0001>

<llo_original>
// kernel: custom_rnn_forward_seq.1
$region0: #{custom_rnn_forward_seq.1}
  #allocation0 [shape = 'u32[]', space=smem, size = 0x4, offset = 0x4, fixed_abs, tag = 'smem constant byte address 0x4 - core index']
  #allocation1 [shape = 'u32[144,128]{1,0:T(1,128)}', space=vmem, size = 0x12000, scoped, tag = 'internal scratch']
  #allocation2 [shape = 'f32[8,128]{1,0:T(8,128)}', space=vmem, size = 0x1000, scoped, tag = 'scratch operand']
  #allocation3 [shape = 'f32[8,128]{1,0:T(8,128)}', space=vmem, size = 0x1000, scoped, tag = 'scratch operand']
  #allocation4 [shape = 's32[1]{0}', space=sflag, size = 0x4, scoped, tag = 'scoped memory for custom_rnn_forward_seq.1']
  #allocation5 [shape = 'u8[512]{0}', space=smem, size = 0x200, scoped, tag = 'prefetched SMEM operand 0']
  %s0 = inlined_call_operand.vmem [shape: s32[8], index: 0, kind: input, shape index: {}]
  %s1 = inlined_call_operand.vmem [shape: f32[16,1,128], index: 1, kind: input, shape index: {}]
  %s2 = inlined_call_operand.vmem [shape: f32[1,128], index: 2, kind: input, shape index: {}]
  %s3 = inlined_call_operand.hbm [shape: f32[128,384], index: 3, kind: input, shape index: {}]
  %s4 = inlined_call_operand.hbm [shape: f32[128,384], index: 4, kind: input, shape index: {}]
  %s5 = inlined_call_operand.vmem [shape: f32[1,384], index: 5, kind: input, shape index: {}]
  %s6 = inlined_call_operand.vmem [shape: f32[1,384], index: 6, kind: input, shape index: {}]
  %s7 = inlined_call_operand.hbm [shape: f32[128,128], index: 7, kind: input, shape index: {}]
  %s8 = inlined_call_operand.vmem [shape: f32[1,128], index: 8, kind: input, shape index: {}]
  %s9 = inlined_call_operand.hbm [shape: f32[8,128], index: 9, kind: output, shape index: {0}]
  %s10 = inlined_call_operand.vmem [shape: f32[1,128], index: 10, kind: output, shape index: {1}]
  %11 = xla_tuple %s9, %s10
  %s12 = sld [smem:[#allocation0]]
  $region62: #{custom_rnn_forward_seq.1} parent=0
    _
  %s14 = ssub.s32 1, %s12
  %s15 = scalar_select 0, %s14, %s12
  %s16 = sshll.u32 %s0, 4
  %s17 = int_to_ptr.vmem [resolvable:$true] %s16
  %19 = dma.vmem_to_smem %s17, 16, [#allocation5], [#allocation4]
  %20 = dma.done [#allocation4], 16
  %21 = sfence
  $region1: #{custom_rnn_forward_seq.1} parent=0
    #allocation6 [shape = 'u8[196608]{0}', space=vmem, size = 0x30000, scoped, tag = 'input window, operand 3, single buffered']
    #allocation7 [shape = 's32[1]{0}', space=sflag, size = 0x4, scoped, tag = 'scoped memory for custom_rnn_forward_seq.1']
    #allocation8 [shape = 's32[1]{0}', space=sflag, size = 0x4, scoped, tag = 'scoped memory for custom_rnn_forward_seq.1']
    #allocation9 [shape = 'u8[196608]{0}', space=vmem, size = 0x30000, scoped, tag = 'input window, operand 4, single buffered']
    #allocation10 [shape = 's32[1]{0}', space=sflag, size = 0x4, scoped, tag = 'scoped memory for custom_rnn_forward_seq.1']
    #allocation11 [shape = 'u8[65536]{0}', space=vmem, size = 0x10000, scoped, tag = 'input window, operand 7, single buffered']
    #allocation12 [shape = 'u8[4096]{0}', space=vmem, size = 0x1000, scoped, tag = 'output window, operand 0, single buffered']
    %22 = vsyncpa [#allocation7], 0
    %23 = vsyncpa [#allocation10], 0
    %24 = vsyncpa [#allocation8], 0
    // Predicated region
    $region2: #{custom_rnn_forward_seq.1} parent=1 // pred_check
      _
    $region3: #{custom_rnn_forward_seq.1} parent=1 // pred_check_branch
      %26 = sbr.rel (0) target = $region5
    $region4: #{custom_rnn_forward_seq.1} parent=1 // pred_region
      _
    $region5: #{custom_rnn_forward_seq.1} parent=1 // pred_fallthru
      _
    // Predicated region
    $region6: #{custom_rnn_forward_seq.1} parent=1 // pred_check
      _
    $region7: #{custom_rnn_forward_seq.1} parent=1 // pred_check_branch
      %28 = sbr.rel (0) target = $region9
    $region8: #{custom_rnn_forward_seq.1} parent=1 // pred_region
      _
    $region9: #{custom_rnn_forward_seq.1} parent=1 // pred_fallthru
      _
    // Predicated region
    $region10: #{custom_rnn_forward_seq.1} parent=1 // pred_check
      _
    $region11: #{custom_rnn_forward_seq.1} parent=1 // pred_check_branch
      %30 = sbr.rel (0) target = $region13
    $region12: #{custom_rnn_forward_seq.1} parent=1 // pred_region
      %s32 = ssub.s32 6144, 6144
      %33 = vsyncadd [#allocation7], %s32
      %s34 = sshll.u32 [#allocation6], 4
      %s35 = int_to_ptr.vmem [resolvable:$true] %s34
      %40 = dma.hbm_to_vmem [thread:$0]  %s3, 6144, %s35, [#allocation7], 384, 384, 24
    $region13: #{custom_rnn_forward_seq.1} parent=1 // pred_fallthru
      _
    // Predicated region
    $region14: #{custom_rnn_forward_seq.1} parent=1 // pred_check
      _
    $region15: #{custom_rnn_forward_seq.1} parent=1 // pred_check_branch
      %42 = sbr.rel (0) target = $region17
    $region16: #{custom_rnn_forward_seq.1} parent=1 // pred_region
      %s44 = ssub.s32 6144, 6144
      %45 = vsyncadd [#allocation10], %s44
      %s46 = sshll.u32 [#allocation9], 4
      %s47 = int_to_ptr.vmem [resolvable:$true] %s46
      %52 = dma.hbm_to_vmem [thread:$0]  %s4, 6144, %s47, [#allocation10], 384, 384, 24
    $region17: #{custom_rnn_forward_seq.1} parent=1 // pred_fallthru
      _
    // Predicated region
    $region18: #{custom_rnn_forward_seq.1} parent=1 // pred_check
      _
    $region19: #{custom_rnn_forward_seq.1} parent=1 // pred_check_branch
      %54 = sbr.rel (0) target = $region21
    $region20: #{custom_rnn_forward_seq.1} parent=1 // pred_region
      _
    $region21: #{custom_rnn_forward_seq.1} parent=1 // pred_fallthru
      _
    // Predicated region
    $region22: #{custom_rnn_forward_seq.1} parent=1 // pred_check
      _
    $region23: #{custom_rnn_forward_seq.1} parent=1 // pred_check_branch
      %56 = sbr.rel (0) target = $region25
    $region24: #{custom_rnn_forward_seq.1} parent=1 // pred_region
      _
    $region25: #{custom_rnn_forward_seq.1} parent=1 // pred_fallthru
      _
    // Predicated region
    $region26: #{custom_rnn_forward_seq.1} parent=1 // pred_check
      _
    $region27: #{custom_rnn_forward_seq.1} parent=1 // pred_check_branch
      %58 = sbr.rel (0) target = $region29
    $region28: #{custom_rnn_forward_seq.1} parent=1 // pred_region
      %s60 = ssub.s32 2048, 2048
      %61 = vsyncadd [#allocation10], %s60
      %s62 = sshll.u32 [#allocation11], 4
      %s63 = int_to_ptr.vmem [resolvable:$true] %s62
      %68 = dma.hbm_to_vmem [thread:$0]  %s7, 2048, %s63, [#allocation10], 128, 128, 8
    $region29: #{custom_rnn_forward_seq.1} parent=1 // pred_fallthru
      _
    // Predicated region
    $region30: #{custom_rnn_forward_seq.1} parent=1 // pred_check
      _
    $region31: #{custom_rnn_forward_seq.1} parent=1 // pred_check_branch
      %70 = sbr.rel (0) target = $region33
    $region32: #{custom_rnn_forward_seq.1} parent=1 // pred_region
      _
    $region33: #{custom_rnn_forward_seq.1} parent=1 // pred_fallthru
      _
    // Predicated region
    $region34: #{custom_rnn_forward_seq.1} parent=1 // pred_check
      _
    $region35: #{custom_rnn_forward_seq.1} parent=1 // pred_check_branch
      %72 = sbr.rel (0) target = $region37
    $region36: #{custom_rnn_forward_seq.1} parent=1 // pred_region
      %73 = dma.done [#allocation7], 6144
    $region37: #{custom_rnn_forward_seq.1} parent=1 // pred_fallthru
      _
    // Predicated region
    $region38: #{custom_rnn_forward_seq.1} parent=1 // pred_check
      _
    $region39: #{custom_rnn_forward_seq.1} parent=1 // pred_check_branch
      %75 = sbr.rel (0) target = $region41
    $region40: #{custom_rnn_forward_seq.1} parent=1 // pred_region
      %76 = dma.done [#allocation10], 6144
    $region41: #{custom_rnn_forward_seq.1} parent=1 // pred_fallthru
      _
    // Predicated region
    $region42: #{custom_rnn_forward_seq.1} parent=1 // pred_check
      _
    $region43: #{custom_rnn_forward_seq.1} parent=1 // pred_check_branch
      %78 = sbr.rel (0) target = $region45
    $region44: #{custom_rnn_forward_seq.1} parent=1 // pred_region
      %79 = dma.done [#allocation10], 2048
    $region45: #{custom_rnn_forward_seq.1} parent=1 // pred_fallthru
      _
    %s80 = sld [smem:[#allocation5]]
    %p81 = scmp.gt.s32.totalorder %s80, 0
    %s82 = scalar_select %p81, %s80, 0
    %p83 = scmp.lt.s32.totalorder %s82, 15
    %s84 = scalar_select %p83, %s82, 15
    %s85 = scalar_lea.vmem %s1, %s84
    %v86 = vld [vmem:[%s85] sm:$0x1]
    %87 = vst [vmem:[#allocation2] sm:$0x1] %v86
    %s88 = sld [smem:[#allocation5 + $0x1]]
    %p89 = scmp.gt.s32.totalorder %s88, 0
    %s90 = scalar_select %p89, %s88, 0
    %p91 = scmp.lt.s32.totalorder %s90, 15
    %s92 = scalar_select %p91, %s90, 15
    %s93 = scalar_lea.vmem %s1, %s92
    %v94 = vld [vmem:[%s93] sm:$0x1]
    %95 = vst [vmem:[#allocation2 + $0x1] sm:$0x1] %v94
    %s96 = sld [smem:[#allocation5 + $0x2]]
    %p97 = scmp.gt.s32.totalorder %s96, 0
    %s98 = scalar_select %p97, %s96, 0
    %p99 = scmp.lt.s32.totalorder %s98, 15
    %s100 = scalar_select %p99, %s98, 15
    %s101 = scalar_lea.vmem %s1, %s100
    %v102 = vld [vmem:[%s101] sm:$0x1]
    %103 = vst [vmem:[#allocation2 + $0x2] sm:$0x1] %v102
    %s104 = sld [smem:[#allocation5 + $0x3]]
    %p105 = scmp.gt.s32.totalorder %s104, 0
    %s106 = scalar_select %p105, %s104, 0
    %p107 = scmp.lt.s32.totalorder %s106, 15
    %s108 = scalar_select %p107, %s106, 15
    %s109 = scalar_lea.vmem %s1, %s108
    %v110 = vld [vmem:[%s109] sm:$0x1]
    %111 = vst [vmem:[#allocation2 + $0x3] sm:$0x1] %v110
    %s112 = sld [smem:[#allocation5 + $0x4]]
    %p113 = scmp.gt.s32.totalorder %s112, 0
    %s114 = scalar_select %p113, %s112, 0
    %p115 = scmp.lt.s32.totalorder %s114, 15
    %s116 = scalar_select %p115, %s114, 15
    %s117 = scalar_lea.vmem %s1, %s116
    %v118 = vld [vmem:[%s117] sm:$0x1]
    %119 = vst [vmem:[#allocation2 + $0x4] sm:$0x1] %v118
    %s120 = sld [smem:[#allocation5 + $0x5]]
    %p121 = scmp.gt.s32.totalorder %s120, 0
    %s122 = scalar_select %p121, %s120, 0
    %p123 = scmp.lt.s32.totalorder %s122, 15
    %s124 = scalar_select %p123, %s122, 15
    %s125 = scalar_lea.vmem %s1, %s124
    %v126 = vld [vmem:[%s125] sm:$0x1]
    %127 = vst [vmem:[#allocation2 + $0x5] sm:$0x1] %v126
    %s128 = sld [smem:[#allocation5 + $0x6]]
    %p129 = scmp.gt.s32.totalorder %s128, 0
    %s130 = scalar_select %p129, %s128, 0
    %p131 = scmp.lt.s32.totalorder %s130, 15
    %s132 = scalar_select %p131, %s130, 15
    %s133 = scalar_lea.vmem %s1, %s132
    %v134 = vld [vmem:[%s133] sm:$0x1]
    %135 = vst [vmem:[#allocation2 + $0x6] sm:$0x1] %v134
    %s136 = sld [smem:[#allocation5 + $0x7]]
    %p137 = scmp.gt.s32.totalorder %s136, 0
    %s138 = scalar_select %p137, %s136, 0
    %p139 = scmp.lt.s32.totalorder %s138, 15
    %s140 = scalar_select %p139, %s138, 15
    %s141 = scalar_lea.vmem %s1, %s140
    %v142 = vld [vmem:[%s141] sm:$0x1]
    %143 = vst [vmem:[#allocation2 + $0x7] sm:$0x1] %v142
    %v144 = vld [vmem:[#allocation2] sm:$0xff]
    %v145 = vld [vmem:[#allocation6] sm:$0xff]
    %v146 = vld [vmem:[#allocation6 + $0x8] sm:$0xff]
    %v147 = vld [vmem:[#allocation6 + $0x10] sm:$0xff]
    %v148 = vld [vmem:[#allocation6 + $0x18] sm:$0xff]
    %v149 = vld [vmem:[#allocation6 + $0x20] sm:$0xff]
    %v150 = vld [vmem:[#allocation6 + $0x28] sm:$0xff]
    %v151 = vld [vmem:[#allocation6 + $0x30] sm:$0xff]
    %v152 = vld [vmem:[#allocation6 + $0x38] sm:$0xff]
    %v153 = vld [vmem:[#allocation6 + $0x40] sm:$0xff]
    %v154 = vld [vmem:[#allocation6 + $0x48] sm:$0xff]
    %v155 = vld [vmem:[#allocation6 + $0x50] sm:$0xff]
    %v156 = vld [vmem:[#allocation6 + $0x58] sm:$0xff]
    %v157 = vld [vmem:[#allocation6 + $0x60] sm:$0xff]
    %v158 = vld [vmem:[#allocation6 + $0x68] sm:$0xff]
    %v159 = vld [vmem:[#allocation6 + $0x70] sm:$0xff]
    %v160 = vld [vmem:[#allocation6 + $0x78] sm:$0xff]
    %v161 = vld [vmem:[#allocation6 + $0x80] sm:$0xff]
    %v162 = vld [vmem:[#allocation6 + $0x88] sm:$0xff]
    %v163 = vld [vmem:[#allocation6 + $0x90] sm:$0xff]
    %v164 = vld [vmem:[#allocation6 + $0x98] sm:$0xff]
    %v165 = vld [vmem:[#allocation6 + $0xa0] sm:$0xff]
    %v166 = vld [vmem:[#allocation6 + $0xa8] sm:$0xff]
    %v167 = vld [vmem:[#allocation6 + $0xb0] sm:$0xff]
    %v168 = vld [vmem:[#allocation6 + $0xb8] sm:$0xff]
    %v169 = vld [vmem:[#allocation6 + $0xc0] sm:$0xff]
    %v170 = vld [vmem:[#allocation6 + $0xc8] sm:$0xff]
    %v171 = vld [vmem:[#allocation6 + $0xd0] sm:$0xff]
    %v172 = vld [vmem:[#allocation6 + $0xd8] sm:$0xff]
    %v173 = vld [vmem:[#allocation6 + $0xe0] sm:$0xff]
    %v174 = vld [vmem:[#allocation6 + $0xe8] sm:$0xff]
    %v175 = vld [vmem:[#allocation6 + $0xf0] sm:$0xff]
    %v176 = vld [vmem:[#allocation6 + $0xf8] sm:$0xff]
    %v177 = vld [vmem:[#allocation6 + $0x100] sm:$0xff]
    %v178 = vld [vmem:[#allocation6 + $0x108] sm:$0xff]
    %v179 = vld [vmem:[#allocation6 + $0x110] sm:$0xff]
    %v180 = vld [vmem:[#allocation6 + $0x118] sm:$0xff]
    %v181 = vld [vmem:[#allocation6 + $0x120] sm:$0xff]
    %v182 = vld [vmem:[#allocation6 + $0x128] sm:$0xff]
    %v183 = vld [vmem:[#allocation6 + $0x130] sm:$0xff]
    %v184 = vld [vmem:[#allocation6 + $0x138] sm:$0xff]
    %v185 = vld [vmem:[#allocation6 + $0x140] sm:$0xff]
    %v186 = vld [vmem:[#allocation6 + $0x148] sm:$0xff]
    %v187 = vld [vmem:[#allocation6 + $0x150] sm:$0xff]
    %v188 = vld [vmem:[#allocation6 + $0x158] sm:$0xff]
    %v189 = vld [vmem:[#allocation6 + $0x160] sm:$0xff]
    %v190 = vld [vmem:[#allocation6 + $0x168] sm:$0xff]
    %v191 = vld [vmem:[#allocation6 + $0x170] sm:$0xff]
    %v192 = vld [vmem:[#allocation6 + $0x178] sm:$0xff]
    %v193 = vld [vmem:[%s5] sm:$0x7]
    %v195 = vlaneseq
    %v196 = vshrl.u32 %v195, 7
    %v197 = vsub.s32 0, %v196
    %v198 = vrot.slane %v193, %v197
    %v199 = vlaneseq
    %v200 = vshrl.u32 %v199, 7
    %v201 = vsub.s32 1, %v200
    %v202 = vrot.slane %v193, %v201
    %v203 = vlaneseq
    %v204 = vshrl.u32 %v203, 7
    %v205 = vsub.s32 2, %v204
    %v206 = vrot.slane %v193, %v205
    %210 = vmatprep.subr.mxu0 %v146
    %211 = vmatpush1.msra.mxu0 %v145
    %212 = vmatprep.subr.mxu0 %v149
    %213 = vmatpush1.msra.mxu0 %v148
    %214 = vmatprep.subr.mxu0 %v152
    %215 = vmatpush1.msra.mxu0 %v151
    %216 = vmatprep.subr.mxu0 %v155
    %217 = vmatpush1.msra.mxu0 %v154
    %218 = vmatprep.subr.mxu0 %v158
    %219 = vmatpush1.msra.mxu0 %v157
    %220 = vmatprep.subr.mxu0 %v161
    %221 = vmatpush1.msra.mxu0 %v160
    %222 = vmatprep.subr.mxu0 %v164
    %223 = vmatpush1.msra.mxu0 %v163
    %224 = vmatprep.subr.mxu0 %v167
    %225 = vmatpush1.msra.mxu0 %v166
    %226 = vmatprep.subr.mxu0 %v170
    %227 = vmatpush1.msra.mxu0 %v169
    %228 = vmatprep.subr.mxu0 %v173
    %229 = vmatpush1.msra.mxu0 %v172
    %230 = vmatprep.subr.mxu0 %v176
    %231 = vmatpush1.msra.mxu0 %v175
    %232 = vmatprep.subr.mxu0 %v179
    %233 = vmatpush1.msra.mxu0 %v178
    %234 = vmatprep.subr.mxu0 %v182
    %235 = vmatpush1.msra.mxu0 %v181
    %236 = vmatprep.subr.mxu0 %v185
    %237 = vmatpush1.msra.mxu0 %v184
    %238 = vmatprep.subr.mxu0 %v188
    %239 = vmatpush1.msra.mxu0 %v187
    %240 = vmatprep.subr.mxu0 %v191
    %241 = vmatpush1.msra.mxu0 %v190
    %242 = vmatprep.subr.mxu0 0.0
    %243 = vmatpush1.msra.mxu0 0.0
    %244 = vmatprep.subr.mxu0 0.0
    %245 = vmatpush1.msra.mxu0 0.0
    %246 = vmatprep.subr.mxu0 0.0
    %247 = vmatpush1.msra.mxu0 0.0
    %248 = vmatprep.subr.mxu0 0.0
    %249 = vmatpush1.msra.mxu0 0.0
    %250 = vmatprep.subr.mxu0 0.0
    %251 = vmatpush1.msra.mxu0 0.0
    %252 = vmatprep.subr.mxu0 0.0
    %253 = vmatpush1.msra.mxu0 0.0
    %254 = vmatprep.subr.mxu0 0.0
    %255 = vmatpush1.msra.mxu0 0.0
    %256 = vmatprep.subr.mxu0 0.0
    %257 = vmatpush1.msra.mxu0 0.0
    %258 = vmatprep.subr.mxu0 0.0
    %259 = vmatpush1.msra.mxu0 0.0
    %260 = vmatprep.subr.mxu0 0.0
    %261 = vmatpush1.msra.mxu0 0.0
    %262 = vmatprep.subr.mxu0 0.0
    %263 = vmatpush1.msra.mxu0 0.0
    %264 = vmatprep.subr.mxu0 0.0
    %265 = vmatpush1.msra.mxu0 0.0
    %266 = vmatprep.subr.mxu0 0.0
    %267 = vmatpush1.msra.mxu0 0.0
    %268 = vmatprep.subr.mxu0 0.0
    %269 = vmatpush1.msra.mxu0 0.0
    %270 = vmatprep.subr.mxu0 0.0
    %271 = vmatpush1.msra.mxu0 0.0
    %272 = vmatprep.subr.mxu0 0.0
    %273 = vmatpush1.msra.mxu0 0.0
    %274 = vmatprep.mubr.f32.mxu0 0.0
    %275 = vmatmul.mubr.f32.gmra.mrb[0].mxu0 %v144
    %v276 = vpop.f32.mrb[0].mxu0
    %v277 = vadd.f32 %v198, %v276
    %v278 = vpop.f32.mrb[0].mxu0
    %v279 = vadd.f32 %v202, %v278
    %280 = vdwg.mxu0
    %281 = vmatprep.subr.mxu0 0.0
    %282 = vmatpush1.msra.mxu0 %v147
    %283 = vmatprep.subr.mxu0 0.0
    %284 = vmatpush1.msra.mxu0 %v150
    %285 = vmatprep.subr.mxu0 0.0
    %286 = vmatpush1.msra.mxu0 %v153
    %287 = vmatprep.subr.mxu0 0.0
    %288 = vmatpush1.msra.mxu0 %v156
    %289 = vmatprep.subr.mxu0 0.0
    %290 = vmatpush1.msra.mxu0 %v159
    %291 = vmatprep.subr.mxu0 0.0
    %292 = vmatpush1.msra.mxu0 %v162
    %293 = vmatprep.subr.mxu0 0.0
    %294 = vmatpush1.msra.mxu0 %v165
    %295 = vmatprep.subr.mxu0 0.0
    %296 = vmatpush1.msra.mxu0 %v168
    %297 = vmatprep.subr.mxu0 0.0
    %298 = vmatpush1.msra.mxu0 %v171
    %299 = vmatprep.subr.mxu0 0.0
    %300 = vmatpush1.msra.mxu0 %v174
    %301 = vmatprep.subr.mxu0 0.0
    %302 = vmatpush1.msra.mxu0 %v177
    %303 = vmatprep.subr.mxu0 0.0
    %304 = vmatpush1.msra.mxu0 %v180
    %305 = vmatprep.subr.mxu0 0.0
    %306 = vmatpush1.msra.mxu0 %v183
    %307 = vmatprep.subr.mxu0 0.0
    %308 = vmatpush1.msra.mxu0 %v186
    %309 = vmatprep.subr.mxu0 0.0
    %310 = vmatpush1.msra.mxu0 %v189
    %311 = vmatprep.subr.mxu0 0.0
    %312 = vmatpush1.msra.mxu0 %v192
    %313 = vmatprep.subr.mxu0 0.0
    %314 = vmatpush1.msra.mxu0 0.0
    %315 = vmatprep.subr.mxu0 0.0
    %316 = vmatpush1.msra.mxu0 0.0
    %317 = vmatprep.subr.mxu0 0.0
    %318 = vmatpush1.msra.mxu0 0.0
    %319 = vmatprep.subr.mxu0 0.0
    %320 = vmatpush1.msra.mxu0 0.0
    %321 = vmatprep.subr.mxu0 0.0
    %322 = vmatpush1.msra.mxu0 0.0
    %323 = vmatprep.subr.mxu0 0.0
    %324 = vmatpush1.msra.mxu0 0.0
    %325 = vmatprep.subr.mxu0 0.0
    %326 = vmatpush1.msra.mxu0 0.0
    %327 = vmatprep.subr.mxu0 0.0
    %328 = vmatpush1.msra.mxu0 0.0
    %329 = vmatprep.subr.mxu0 0.0
    %330 = vmatpush1.msra.mxu0 0.0
    %331 = vmatprep.subr.mxu0 0.0
    %332 = vmatpush1.msra.mxu0 0.0
    %333 = vmatprep.subr.mxu0 0.0
    %334 = vmatpush1.msra.mxu0 0.0
    %335 = vmatprep.subr.mxu0 0.0
    %336 = vmatpush1.msra.mxu0 0.0
    %337 = vmatprep.subr.mxu0 0.0
    %338 = vmatpush1.msra.mxu0 0.0
    %339 = vmatprep.subr.mxu0 0.0
    %340 = vmatpush1.msra.mxu0 0.0
    %341 = vmatprep.subr.mxu0 0.0
    %342 = vmatpush1.msra.mxu0 0.0
    %343 = vmatprep.subr.mxu0 0.0
    %344 = vmatpush1.msra.mxu0 0.0
    %345 = vmatprep.mubr.f32.mxu0 0.0
    %346 = vmatmul.mubr.f32.gmra.mrb[0].mxu0 %v144
    %v347 = vpop.f32.mrb[0].mxu0
    %v348 = vadd.f32 %v206, %v347
    %v349 = vpop.f32.mrb[0].mxu0
    %350 = vdwg.mxu0
    %v351 = vld [vmem:[%s2] sm:$0x1]
    %v352 = vld [vmem:[#allocation9] sm:$0xff]
    %v353 = vld [vmem:[#allocation9 + $0x8] sm:$0xff]
    %v354 = vld [vmem:[#allocation9 + $0x10] sm:$0xff]
    %v355 = vld [vmem:[#allocation9 + $0x18] sm:$0xff]
    %v356 = vld [vmem:[#allocation9 + $0x20] sm:$0xff]
    %v357 = vld [vmem:[#allocation9 + $0x28] sm:$0xff]
    %v358 = vld [vmem:[#allocation9 + $0x30] sm:$0xff]
    %v359 = vld [vmem:[#allocation9 + $0x38] sm:$0xff]
    %v360 = vld [vmem:[#allocation9 + $0x40] sm:$0xff]
    %v361 = vld [vmem:[#allocation9 + $0x48] sm:$0xff]
    %v362 = vld [vmem:[#allocation9 + $0x50] sm:$0xff]
    %v363 = vld [vmem:[#allocation9 + $0x58] sm:$0xff]
    %v364 = vld [vmem:[#allocation9 + $0x60] sm:$0xff]
    %v365 = vld [vmem:[#allocation9 + $0x68] sm:$0xff]
    %v366 = vld [vmem:[#allocation9 + $0x70] sm:$0xff]
    %v367 = vld [vmem:[#allocation9 + $0x78] sm:$0xff]
    %v368 = vld [vmem:[#allocation9 + $0x80] sm:$0xff]
    %v369 = vld [vmem:[#allocation9 + $0x88] sm:$0xff]
    %v370 = vld [vmem:[#allocation9 + $0x90] sm:$0xff]
    %v371 = vld [vmem:[#allocation9 + $0x98] sm:$0xff]
    %v372 = vld [vmem:[#allocation9 + $0xa0] sm:$0xff]
    %v373 = vld [vmem:[#allocation9 + $0xa8] sm:$0xff]
    %v374 = vld [vmem:[#allocation9 + $0xb0] sm:$0xff]
    %v375 = vld [vmem:[#allocation9 + $0xb8] sm:$0xff]
    %v376 = vld [vmem:[#allocation9 + $0xc0] sm:$0xff]
    %v377 = vld [vmem:[#allocation9 + $0xc8] sm:$0xff]
    %v378 = vld [vmem:[#allocation9 + $0xd0] sm:$0xff]
    %v379 = vld [vmem:[#allocation9 + $0xd8] sm:$0xff]
    %v380 = vld [vmem:[#allocation9 + $0xe0] sm:$0xff]
    %v381 = vld [vmem:[#allocation9 + $0xe8] sm:$0xff]
    %v382 = vld [vmem:[#allocation9 + $0xf0] sm:$0xff]
    %v383 = vld [vmem:[#allocation9 + $0xf8] sm:$0xff]
    %v384 = vld [vmem:[#allocation9 + $0x100] sm:$0xff]
    %v385 = vld [vmem:[#allocation9 + $0x108] sm:$0xff]
    %v386 = vld [vmem:[#allocation9 + $0x110] sm:$0xff]
    %v387 = vld [vmem:[#allocation9 + $0x118] sm:$0xff]
    %v388 = vld [vmem:[#allocation9 + $0x120] sm:$0xff]
    %v389 = vld [vmem:[#allocation9 + $0x128] sm:$0xff]
    %v390 = vld [vmem:[#allocation9 + $0x130] sm:$0xff]
    %v391 = vld [vmem:[#allocation9 + $0x138] sm:$0xff]
    %v392 = vld [vmem:[#allocation9 + $0x140] sm:$0xff]
    %v393 = vld [vmem:[#allocation9 + $0x148] sm:$0xff]
    %v394 = vld [vmem:[#allocation9 + $0x150] sm:$0xff]
    %v395 = vld [vmem:[#allocation9 + $0x158] sm:$0xff]
    %v396 = vld [vmem:[#allocation9 + $0x160] sm:$0xff]
    %v397 = vld [vmem:[#allocation9 + $0x168] sm:$0xff]
    %v398 = vld [vmem:[#allocation9 + $0x170] sm:$0xff]
    %v399 = vld [vmem:[#allocation9 + $0x178] sm:$0xff]
    %v400 = vld [vmem:[%s6] sm:$0x7]
    %v402 = vlaneseq
    %v403 = vshrl.u32 %v402, 7
    %v404 = vsub.s32 0, %v403
    %v405 = vrot.slane %v400, %v404
    %v406 = vlaneseq
    %v407 = vshrl.u32 %v406, 7
    %v408 = vsub.s32 1, %v407
    %v409 = vrot.slane %v400, %v408
    %v410 = vlaneseq
    %v411 = vshrl.u32 %v410, 7
    %v412 = vsub.s32 2, %v411
    %v413 = vrot.slane %v400, %v412
    %417 = vmatprep.subr.mxu0 %v353
    %418 = vmatpush1.msra.mxu0 %v352
    %419 = vmatprep.subr.mxu0 %v356
    %420 = vmatpush1.msra.mxu0 %v355
    %421 = vmatprep.subr.mxu0 %v359
    %422 = vmatpush1.msra.mxu0 %v358
    %423 = vmatprep.subr.mxu0 %v362
    %424 = vmatpush1.msra.mxu0 %v361
    %425 = vmatprep.subr.mxu0 %v365
    %426 = vmatpush1.msra.mxu0 %v364
    %427 = vmatprep.subr.mxu0 %v368
    %428 = vmatpush1.msra.mxu0 %v367
    %429 = vmatprep.subr.mxu0 %v371
    %430 = vmatpush1.msra.mxu0 %v370
    %431 = vmatprep.subr.mxu0 %v374
    %432 = vmatpush1.msra.mxu0 %v373
    %433 = vmatprep.subr.mxu0 %v377
    %434 = vmatpush1.msra.mxu0 %v376
    %435 = vmatprep.subr.mxu0 %v380
    %436 = vmatpush1.msra.mxu0 %v379
    %437 = vmatprep.subr.mxu0 %v383
    %438 = vmatpush1.msra.mxu0 %v382
    %439 = vmatprep.subr.mxu0 %v386
    %440 = vmatpush1.msra.mxu0 %v385
    %441 = vmatprep.subr.mxu0 %v389
    %442 = vmatpush1.msra.mxu0 %v388
    %443 = vmatprep.subr.mxu0 %v392
    %444 = vmatpush1.msra.mxu0 %v391
    %445 = vmatprep.subr.mxu0 %v395
    %446 = vmatpush1.msra.mxu0 %v394
    %447 = vmatprep.subr.mxu0 %v398
    %448 = vmatpush1.msra.mxu0 %v397
    %449 = vmatprep.subr.mxu0 0.0
    %450 = vmatpush1.msra.mxu0 0.0
    %451 = vmatprep.subr.mxu0 0.0
    %452 = vmatpush1.msra.mxu0 0.0
    %453 = vmatprep.subr.mxu0 0.0
    %454 = vmatpush1.msra.mxu0 0.0
    %455 = vmatprep.subr.mxu0 0.0
    %456 = vmatpush1.msra.mxu0 0.0
    %457 = vmatprep.subr.mxu0 0.0
    %458 = vmatpush1.msra.mxu0 0.0
    %459 = vmatprep.subr.mxu0 0.0
    %460 = vmatpush1.msra.mxu0 0.0
    %461 = vmatprep.subr.mxu0 0.0
    %462 = vmatpush1.msra.mxu0 0.0
    %463 = vmatprep.subr.mxu0 0.0
    %464 = vmatpush1.msra.mxu0 0.0
    %465 = vmatprep.subr.mxu0 0.0
    %466 = vmatpush1.msra.mxu0 0.0
    %467 = vmatprep.subr.mxu0 0.0
    %468 = vmatpush1.msra.mxu0 0.0
    %469 = vmatprep.subr.mxu0 0.0
    %470 = vmatpush1.msra.mxu0 0.0
    %471 = vmatprep.subr.mxu0 0.0
    %472 = vmatpush1.msra.mxu0 0.0
    %473 = vmatprep.subr.mxu0 0.0
    %474 = vmatpush1.msra.mxu0 0.0
    %475 = vmatprep.subr.mxu0 0.0
    %476 = vmatpush1.msra.mxu0 0.0
    %477 = vmatprep.subr.mxu0 0.0
    %478 = vmatpush1.msra.mxu0 0.0
    %479 = vmatprep.subr.mxu0 0.0
    %480 = vmatpush1.msra.mxu0 0.0
    %481 = vmatprep.mubr.f32.mxu0 0.0
    %482 = vmatmul.mubr.f32.gmra.mrb[0].mxu0 %v351
    %v483 = vpop.f32.mrb[0].mxu0
    %v484 = vadd.f32 %v405, %v483
    %v485 = vpop.f32.mrb[0].mxu0
    %v486 = vadd.f32 %v409, %v485
    %487 = vdwg.mxu0
    %488 = vmatprep.subr.mxu0 0.0
    %489 = vmatpush1.msra.mxu0 %v354
    %490 = vmatprep.subr.mxu0 0.0
    %491 = vmatpush1.msra.mxu0 %v357
    %492 = vmatprep.subr.mxu0 0.0
    %493 = vmatpush1.msra.mxu0 %v360
    %494 = vmatprep.subr.mxu0 0.0
    %495 = vmatpush1.msra.mxu0 %v363
    %496 = vmatprep.subr.mxu0 0.0
    %497 = vmatpush1.msra.mxu0 %v366
    %498 = vmatprep.subr.mxu0 0.0
    %499 = vmatpush1.msra.mxu0 %v369
    %500 = vmatprep.subr.mxu0 0.0
    %501 = vmatpush1.msra.mxu0 %v372
    %502 = vmatprep.subr.mxu0 0.0
    %503 = vmatpush1.msra.mxu0 %v375
    %504 = vmatprep.subr.mxu0 0.0
    %505 = vmatpush1.msra.mxu0 %v378
    %506 = vmatprep.subr.mxu0 0.0
    %507 = vmatpush1.msra.mxu0 %v381
    %508 = vmatprep.subr.mxu0 0.0
    %509 = vmatpush1.msra.mxu0 %v384
    %510 = vmatprep.subr.mxu0 0.0
    %511 = vmatpush1.msra.mxu0 %v387
    %512 = vmatprep.subr.mxu0 0.0
    %513 = vmatpush1.msra.mxu0 %v390
    %514 = vmatprep.subr.mxu0 0.0
    %515 = vmatpush1.msra.mxu0 %v393
    %516 = vmatprep.subr.mxu0 0.0
    %517 = vmatpush1.msra.mxu0 %v396
    %518 = vmatprep.subr.mxu0 0.0
    %519 = vmatpush1.msra.mxu0 %v399
    %520 = vmatprep.subr.mxu0 0.0
    %521 = vmatpush1.msra.mxu0 0.0
    %522 = vmatprep.subr.mxu0 0.0
    %523 = vmatpush1.msra.mxu0 0.0
    %524 = vmatprep.subr.mxu0 0.0
    %525 = vmatpush1.msra.mxu0 0.0
    %526 = vmatprep.subr.mxu0 0.0
    %527 = vmatpush1.msra.mxu0 0.0
    %528 = vmatprep.subr.mxu0 0.0
    %529 = vmatpush1.msra.mxu0 0.0
    %530 = vmatprep.subr.mxu0 0.0
    %531 = vmatpush1.msra.mxu0 0.0
    %532 = vmatprep.subr.mxu0 0.0
    %533 = vmatpush1.msra.mxu0 0.0
    %534 = vmatprep.subr.mxu0 0.0
    %535 = vmatpush1.msra.mxu0 0.0
    %536 = vmatprep.subr.mxu0 0.0
    %537 = vmatpush1.msra.mxu0 0.0
    %538 = vmatprep.subr.mxu0 0.0
    %539 = vmatpush1.msra.mxu0 0.0
    %540 = vmatprep.subr.mxu0 0.0
    %541 = vmatpush1.msra.mxu0 0.0
    %542 = vmatprep.subr.mxu0 0.0
    %543 = vmatpush1.msra.mxu0 0.0
    %544 = vmatprep.subr.mxu0 0.0
    %545 = vmatpush1.msra.mxu0 0.0
    %546 = vmatprep.subr.mxu0 0.0
    %547 = vmatpush1.msra.mxu0 0.0
    %548 = vmatprep.subr.mxu0 0.0
    %549 = vmatpush1.msra.mxu0 0.0
    %550 = vmatprep.subr.mxu0 0.0
    %551 = vmatpush1.msra.mxu0 0.0
    %552 = vmatprep.mubr.f32.mxu0 0.0
    %553 = vmatmul.mubr.f32.gmra.mrb[0].mxu0 %v351
    %v554 = vpop.f32.mrb[0].mxu0
    %v555 = vadd.f32 %v413, %v554
    %v556 = vpop.f32.mrb[0].mxu0
    %557 = vdwg.mxu0
    %v558 = vadd.f32 %v277, %v484
    %v559 = vadd.f32 %v279, %v486
    %v560 = vxor.u32 %v558, 2147483648
    %v561 = vxor.u32 %v559, 2147483648
    %v562 = vmul.f32 %v560, 1.442695
    %v563 = vpow.pop %v562
    %v564 = vmul.f32 %v561, 1.442695
    %v565 = vpow.pop %v564
    %v566 = vadd.f32 %v563, 1.0
    %v567 = vadd.f32 %v565, 1.0
    %v568 = vrcp.pop %v566
    %v569 = vmul.f32 1.0, %v568
    %v570 = vrcp.pop %v567
    %v571 = vmul.f32 1.0, %v570
    %v572 = vmul.f32 %v569, %v555
    %v573 = vadd.f32 %v348, %v572
    %v574 = vtanh.pop %v573
    %v575 = vsub.f32 1.0, %v571
    %v576 = vmul.f32 %v575, %v574
    %v577 = vmul.f32 %v571, %v351
    %v578 = vadd.f32 %v576, %v577
    %579 = vst [vmem:[#allocation3] sm:$0x1] %v578
    %v580 = vld [vmem:[#allocation9] sm:$0xff]
    %v581 = vld [vmem:[#allocation9 + $0x8] sm:$0xff]
    %v582 = vld [vmem:[#allocation9 + $0x10] sm:$0xff]
    %v583 = vld [vmem:[#allocation9 + $0x18] sm:$0xff]
    %v584 = vld [vmem:[#allocation9 + $0x20] sm:$0xff]
    %v585 = vld [vmem:[#allocation9 + $0x28] sm:$0xff]
    %v586 = vld [vmem:[#allocation9 + $0x30] sm:$0xff]
    %v587 = vld [vmem:[#allocation9 + $0x38] sm:$0xff]
    %v588 = vld [vmem:[#allocation9 + $0x40] sm:$0xff]
    %v589 = vld [vmem:[#allocation9 + $0x48] sm:$0xff]
    %v590 = vld [vmem:[#allocation9 + $0x50] sm:$0xff]
    %v591 = vld [vmem:[#allocation9 + $0x58] sm:$0xff]
    %v592 = vld [vmem:[#allocation9 + $0x60] sm:$0xff]
    %v593 = vld [vmem:[#allocation9 + $0x68] sm:$0xff]
    %v594 = vld [vmem:[#allocation9 + $0x70] sm:$0xff]
    %v595 = vld [vmem:[#allocation9 + $0x78] sm:$0xff]
    %v596 = vld [vmem:[#allocation9 + $0x80] sm:$0xff]
    %v597 = vld [vmem:[#allocation9 + $0x88] sm:$0xff]
    %v598 = vld [vmem:[#allocation9 + $0x90] sm:$0xff]
    %v599 = vld [vmem:[#allocation9 + $0x98] sm:$0xff]
    %v600 = vld [vmem:[#allocation9 + $0xa0] sm:$0xff]
    %v601 = vld [vmem:[#allocation9 + $0xa8] sm:$0xff]
    %v602 = vld [vmem:[#allocation9 + $0xb0] sm:$0xff]
    %v603 = vld [vmem:[#allocation9 + $0xb8] sm:$0xff]
    %v604 = vld [vmem:[#allocation9 + $0xc0] sm:$0xff]
    %v605 = vld [vmem:[#allocation9 + $0xc8] sm:$0xff]
    %v606 = vld [vmem:[#allocation9 + $0xd0] sm:$0xff]
    %v607 = vld [vmem:[#allocation9 + $0xd8] sm:$0xff]
    %v608 = vld [vmem:[#allocation9 + $0xe0] sm:$0xff]
    %v609 = vld [vmem:[#allocation9 + $0xe8] sm:$0xff]
    %v610 = vld [vmem:[#allocation9 + $0xf0] sm:$0xff]
    %v611 = vld [vmem:[#allocation9 + $0xf8] sm:$0xff]
    %v612 = vld [vmem:[#allocation9 + $0x100] sm:$0xff]
    %v613 = vld [vmem:[#allocation9 + $0x108] sm:$0xff]
    %v614 = vld [vmem:[#allocation9 + $0x110] sm:$0xff]
    %v615 = vld [vmem:[#allocation9 + $0x118] sm:$0xff]
    %v616 = vld [vmem:[#allocation9 + $0x120] sm:$0xff]
    %v617 = vld [vmem:[#allocation9 + $0x128] sm:$0xff]
    %v618 = vld [vmem:[#allocation9 + $0x130] sm:$0xff]
    %v619 = vld [vmem:[#allocation9 + $0x138] sm:$0xff]
    %v620 = vld [vmem:[#allocation9 + $0x140] sm:$0xff]
    %v621 = vld [vmem:[#allocation9 + $0x148] sm:$0xff]
    %v622 = vld [vmem:[#allocation9 + $0x150] sm:$0xff]
    %v623 = vld [vmem:[#allocation9 + $0x158] sm:$0xff]
    %v624 = vld [vmem:[#allocation9 + $0x160] sm:$0xff]
    %v625 = vld [vmem:[#allocation9 + $0x168] sm:$0xff]
    %v626 = vld [vmem:[#allocation9 + $0x170] sm:$0xff]
    %v627 = vld [vmem:[#allocation9 + $0x178] sm:$0xff]
    %v628 = vld [vmem:[%s6] sm:$0x7]
    %v630 = vlaneseq
    %v631 = vshrl.u32 %v630, 7
    %v632 = vsub.s32 0, %v631
    %v633 = vrot.slane %v628, %v632
    %v634 = vlaneseq
    %v635 = vshrl.u32 %v634, 7
    %v636 = vsub.s32 1, %v635
    %v637 = vrot.slane %v628, %v636
    %v638 = vlaneseq
    %v639 = vshrl.u32 %v638, 7
    %v640 = vsub.s32 2, %v639
    %v641 = vrot.slane %v628, %v640
    %645 = vmatprep.subr.mxu0 %v581
    %646 = vmatpush1.msra.mxu0 %v580
    %647 = vmatprep.subr.mxu0 %v584
    %648 = vmatpush1.msra.mxu0 %v583
    %649 = vmatprep.subr.mxu0 %v587
    %650 = vmatpush1.msra.mxu0 %v586
    %651 = vmatprep.subr.mxu0 %v590
    %652 = vmatpush1.msra.mxu0 %v589
    %653 = vmatprep.subr.mxu0 %v593
    %654 = vmatpush1.msra.mxu0 %v592
    %655 = vmatprep.subr.mxu0 %v596
    %656 = vmatpush1.msra.mxu0 %v595
    %657 = vmatprep.subr.mxu0 %v599
    %658 = vmatpush1.msra.mxu0 %v598
    %659 = vmatprep.subr.mxu0 %v602
    %660 = vmatpush1.msra.mxu0 %v601
    %661 = vmatprep.subr.mxu0 %v605
    %662 = vmatpush1.msra.mxu0 %v604
    %663 = vmatprep.subr.mxu0 %v608
    %664 = vmatpush1.msra.mxu0 %v607
    %665 = vmatprep.subr.mxu0 %v611
    %666 = vmatpush1.msra.mxu0 %v610
    %667 = vmatprep.subr.mxu0 %v614
    %668 = vmatpush1.msra.mxu0 %v613
    %669 = vmatprep.subr.mxu0 %v617
    %670 = vmatpush1.msra.mxu0 %v616
    %671 = vmatprep.subr.mxu0 %v620
    %672 = vmatpush1.msra.mxu0 %v619
    %673 = vmatprep.subr.mxu0 %v623
    %674 = vmatpush1.msra.mxu0 %v622
    %675 = vmatprep.subr.mxu0 %v626
    %676 = vmatpush1.msra.mxu0 %v625
    %677 = vmatprep.subr.mxu0 0.0
    %678 = vmatpush1.msra.mxu0 0.0
    %679 = vmatprep.subr.mxu0 0.0
    %680 = vmatpush1.msra.mxu0 0.0
    %681 = vmatprep.subr.mxu0 0.0
    %682 = vmatpush1.msra.mxu0 0.0
    %683 = vmatprep.subr.mxu0 0.0
    %684 = vmatpush1.msra.mxu0 0.0
    %685 = vmatprep.subr.mxu0 0.0
    %686 = vmatpush1.msra.mxu0 0.0
    %687 = vmatprep.subr.mxu0 0.0
    %688 = vmatpush1.msra.mxu0 0.0
    %689 = vmatprep.subr.mxu0 0.0
    %690 = vmatpush1.msra.mxu0 0.0
    %691 = vmatprep.subr.mxu0 0.0
    %692 = vmatpush1.msra.mxu0 0.0
    %693 = vmatprep.subr.mxu0 0.0
    %694 = vmatpush1.msra.mxu0 0.0
    %695 = vmatprep.subr.mxu0 0.0
    %696 = vmatpush1.msra.mxu0 0.0
    %697 = vmatprep.subr.mxu0 0.0
    %698 = vmatpush1.msra.mxu0 0.0
    %699 = vmatprep.subr.mxu0 0.0
    %700 = vmatpush1.msra.mxu0 0.0
    %701 = vmatprep.subr.mxu0 0.0
    %702 = vmatpush1.msra.mxu0 0.0
    %703 = vmatprep.subr.mxu0 0.0
    %704 = vmatpush1.msra.mxu0 0.0
    %705 = vmatprep.subr.mxu0 0.0
    %706 = vmatpush1.msra.mxu0 0.0
    %707 = vmatprep.subr.mxu0 0.0
    %708 = vmatpush1.msra.mxu0 0.0
    %709 = vmatprep.mubr.f32.mxu0 0.0
    %710 = vmatmul.mubr.f32.gmra.mrb[0].mxu0 %v578
    %v711 = vpop.f32.mrb[0].mxu0
    %v712 = vadd.f32 %v633, %v711
    %v713 = vpop.f32.mrb[0].mxu0
    %v714 = vadd.f32 %v637, %v713
    %715 = vdwg.mxu0
    %716 = vmatprep.subr.mxu0 0.0
    %717 = vmatpush1.msra.mxu0 %v582
    %718 = vmatprep.subr.mxu0 0.0
    %719 = vmatpush1.msra.mxu0 %v585
    %720 = vmatprep.subr.mxu0 0.0
    %721 = vmatpush1.msra.mxu0 %v588
    %722 = vmatprep.subr.mxu0 0.0
    %723 = vmatpush1.msra.mxu0 %v591
    %724 = vmatprep.subr.mxu0 0.0
    %725 = vmatpush1.msra.mxu0 %v594
    %726 = vmatprep.subr.mxu0 0.0
    %727 = vmatpush1.msra.mxu0 %v597
    %728 = vmatprep.subr.mxu0 0.0
    %729 = vmatpush1.msra.mxu0 %v600
    %730 = vmatprep.subr.mxu0 0.0
    %731 = vmatpush1.msra.mxu0 %v603
    %732 = vmatprep.subr.mxu0 0.0
    %733 = vmatpush1.msra.mxu0 %v606
    %734 = vmatprep.subr.mxu0 0.0
    %735 = vmatpush1.msra.mxu0 %v609
    %736 = vmatprep.subr.mxu0 0.0
    %737 = vmatpush1.msra.mxu0 %v612
    %738 = vmatprep.subr.mxu0 0.0
    %739 = vmatpush1.msra.mxu0 %v615
    %740 = vmatprep.subr.mxu0 0.0
    %741 = vmatpush1.msra.mxu0 %v618
    %742 = vmatprep.subr.mxu0 0.0
    %743 = vmatpush1.msra.mxu0 %v621
    %744 = vmatprep.subr.mxu0 0.0
    %745 = vmatpush1.msra.mxu0 %v624
    %746 = vmatprep.subr.mxu0 0.0
    %747 = vmatpush1.msra.mxu0 %v627
    %748 = vmatprep.subr.mxu0 0.0
    %749 = vmatpush1.msra.mxu0 0.0
    %750 = vmatprep.subr.mxu0 0.0
    %751 = vmatpush1.msra.mxu0 0.0
    %752 = vmatprep.subr.mxu0 0.0
    %753 = vmatpush1.msra.mxu0 0.0
    %754 = vmatprep.subr.mxu0 0.0
    %755 = vmatpush1.msra.mxu0 0.0
    %756 = vmatprep.subr.mxu0 0.0
    %757 = vmatpush1.msra.mxu0 0.0
    %758 = vmatprep.subr.mxu0 0.0
    %759 = vmatpush1.msra.mxu0 0.0
    %760 = vmatprep.subr.mxu0 0.0
    %761 = vmatpush1.msra.mxu0 0.0
    %762 = vmatprep.subr.mxu0 0.0
    %763 = vmatpush1.msra.mxu0 0.0
    %764 = vmatprep.subr.mxu0 0.0
    %765 = vmatpush1.msra.mxu0 0.0
    %766 = vmatprep.subr.mxu0 0.0
    %767 = vmatpush1.msra.mxu0 0.0
    %768 = vmatprep.subr.mxu0 0.0
    %769 = vmatpush1.msra.mxu0 0.0
    %770 = vmatprep.subr.mxu0 0.0
    %771 = vmatpush1.msra.mxu0 0.0
    %772 = vmatprep.subr.mxu0 0.0
    %773 = vmatpush1.msra.mxu0 0.0
    %774 = vmatprep.subr.mxu0 0.0
    %775 = vmatpush1.msra.mxu0 0.0
    %776 = vmatprep.subr.mxu0 0.0
    %777 = vmatpush1.msra.mxu0 0.0
    %778 = vmatprep.subr.mxu0 0.0
    %779 = vmatpush1.msra.mxu0 0.0
    %780 = vmatprep.mubr.f32.mxu0 0.0
    %781 = vmatmul.mubr.f32.gmra.mrb[0].mxu0 %v578
    %v782 = vpop.f32.mrb[0].mxu0
    %v783 = vadd.f32 %v641, %v782
    %v784 = vpop.f32.mrb[0].mxu0
    %785 = vdwg.mxu0
    %v788 = vrot.slane %v712, 7
    %v789 = vrot.slane %v714, 7
    %v792 = vadd.f32 %v277, %v788
    %v793 = vadd.f32 %v279, %v789
    %v794 = vxor.u32 %v792, 2147483648
    %v795 = vxor.u32 %v793, 2147483648
    %v796 = vmul.f32 %v794, 1.442695
    %v797 = vpow.pop %v796
    %v798 = vmul.f32 %v795, 1.442695
    %v799 = vpow.pop %v798
    %v800 = vadd.f32 %v797, 1.0
    %v801 = vadd.f32 %v799, 1.0
    %v802 = vrcp.pop %v800
    %v803 = vmul.f32 1.0, %v802
    %v804 = vrcp.pop %v801
    %v805 = vmul.f32 1.0, %v804
    %v807 = vrot.slane %v783, 7
    %v809 = vmul.f32 %v803, %v807
    %v810 = vadd.f32 %v348, %v809
    %v811 = vtanh.pop %v810
    %v812 = vsub.f32 1.0, %v805
    %v813 = vmul.f32 %v812, %v811
    %v815 = vrot.slane %v578, 7
    %v817 = vmul.f32 %v805, %v815
    %v818 = vadd.f32 %v813, %v817
    %819 = vst [vmem:[#allocation3] sm:$0x2] %v818
    %v820 = vld [vmem:[#allocation9] sm:$0xff]
    %v821 = vld [vmem:[#allocation9 + $0x8] sm:$0xff]
    %v822 = vld [vmem:[#allocation9 + $0x10] sm:$0xff]
    %v823 = vld [vmem:[#allocation9 + $0x18] sm:$0xff]
    %v824 = vld [vmem:[#allocation9 + $0x20] sm:$0xff]
    %v825 = vld [vmem:[#allocation9 + $0x28] sm:$0xff]
    %v826 = vld [vmem:[#allocation9 + $0x30] sm:$0xff]
    %v827 = vld [vmem:[#allocation9 + $0x38] sm:$0xff]
    %v828 = vld [vmem:[#allocation9 + $0x40] sm:$0xff]
    %v829 = vld [vmem:[#allocation9 + $0x48] sm:$0xff]
    %v830 = vld [vmem:[#allocation9 + $0x50] sm:$0xff]
    %v831 = vld [vmem:[#allocation9 + $0x58] sm:$0xff]
    %v832 = vld [vmem:[#allocation9 + $0x60] sm:$0xff]
    %v833 = vld [vmem:[#allocation9 + $0x68] sm:$0xff]
    %v834 = vld [vmem:[#allocation9 + $0x70] sm:$0xff]
    %v835 = vld [vmem:[#allocation9 + $0x78] sm:$0xff]
    %v836 = vld [vmem:[#allocation9 + $0x80] sm:$0xff]
    %v837 = vld [vmem:[#allocation9 + $0x88] sm:$0xff]
    %v838 = vld [vmem:[#allocation9 + $0x90] sm:$0xff]
    %v839 = vld [vmem:[#allocation9 + $0x98] sm:$0xff]
    %v840 = vld [vmem:[#allocation9 + $0xa0] sm:$0xff]
    %v841 = vld [vmem:[#allocation9 + $0xa8] sm:$0xff]
    %v842 = vld [vmem:[#allocation9 + $0xb0] sm:$0xff]
    %v843 = vld [vmem:[#allocation9 + $0xb8] sm:$0xff]
    %v844 = vld [vmem:[#allocation9 + $0xc0] sm:$0xff]
    %v845 = vld [vmem:[#allocation9 + $0xc8] sm:$0xff]
    %v846 = vld [vmem:[#allocation9 + $0xd0] sm:$0xff]
    %v847 = vld [vmem:[#allocation9 + $0xd8] sm:$0xff]
    %v848 = vld [vmem:[#allocation9 + $0xe0] sm:$0xff]
    %v849 = vld [vmem:[#allocation9 + $0xe8] sm:$0xff]
    %v850 = vld [vmem:[#allocation9 + $0xf0] sm:$0xff]
    %v851 = vld [vmem:[#allocation9 + $0xf8] sm:$0xff]
    %v852 = vld [vmem:[#allocation9 + $0x100] sm:$0xff]
    %v853 = vld [vmem:[#allocation9 + $0x108] sm:$0xff]
    %v854 = vld [vmem:[#allocation9 + $0x110] sm:$0xff]
    %v855 = vld [vmem:[#allocation9 + $0x118] sm:$0xff]
    %v856 = vld [vmem:[#allocation9 + $0x120] sm:$0xff]
    %v857 = vld [vmem:[#allocation9 + $0x128] sm:$0xff]
    %v858 = vld [vmem:[#allocation9 + $0x130] sm:$0xff]
    %v859 = vld [vmem:[#allocation9 + $0x138] sm:$0xff]
    %v860 = vld [vmem:[#allocation9 + $0x140] sm:$0xff]
    %v861 = vld [vmem:[#allocation9 + $0x148] sm:$0xff]
    %v862 = vld [vmem:[#allocation9 + $0x150] sm:$0xff]
    %v863 = vld [vmem:[#allocation9 + $0x158] sm:$0xff]
    %v864 = vld [vmem:[#allocation9 + $0x160] sm:$0xff]
    %v865 = vld [vmem:[#allocation9 + $0x168] sm:$0xff]
    %v866 = vld [vmem:[#allocation9 + $0x170] sm:$0xff]
    %v867 = vld [vmem:[#allocation9 + $0x178] sm:$0xff]
    %v868 = vld [vmem:[%s6] sm:$0x7]
    %v870 = vrot.slane %v818, 1
    %v873 = vlaneseq
    %v874 = vshrl.u32 %v873, 7
    %v875 = vsub.s32 0, %v874
    %v876 = vrot.slane %v868, %v875
    %v877 = vlaneseq
    %v878 = vshrl.u32 %v877, 7
    %v879 = vsub.s32 1, %v878
    %v880 = vrot.slane %v868, %v879
    %v881 = vlaneseq
    %v882 = vshrl.u32 %v881, 7
    %v883 = vsub.s32 2, %v882
    %v884 = vrot.slane %v868, %v883
    %888 = vmatprep.subr.mxu0 %v821
    %889 = vmatpush1.msra.mxu0 %v820
    %890 = vmatprep.subr.mxu0 %v824
    %891 = vmatpush1.msra.mxu0 %v823
    %892 = vmatprep.subr.mxu0 %v827
    %893 = vmatpush1.msra.mxu0 %v826
    %894 = vmatprep.subr.mxu0 %v830
    %895 = vmatpush1.msra.mxu0 %v829
    %896 = vmatprep.subr.mxu0 %v833
    %897 = vmatpush1.msra.mxu0 %v832
    %898 = vmatprep.subr.mxu0 %v836
    %899 = vmatpush1.msra.mxu0 %v835
    %900 = vmatprep.subr.mxu0 %v839
    %901 = vmatpush1.msra.mxu0 %v838
    %902 = vmatprep.subr.mxu0 %v842
    %903 = vmatpush1.msra.mxu0 %v841
    %904 = vmatprep.subr.mxu0 %v845
    %905 = vmatpush1.msra.mxu0 %v844
    %906 = vmatprep.subr.mxu0 %v848
    %907 = vmatpush1.msra.mxu0 %v847
    %908 = vmatprep.subr.mxu0 %v851
    %909 = vmatpush1.msra.mxu0 %v850
    %910 = vmatprep.subr.mxu0 %v854
    %911 = vmatpush1.msra.mxu0 %v853
    %912 = vmatprep.subr.mxu0 %v857
    %913 = vmatpush1.msra.mxu0 %v856
    %914 = vmatprep.subr.mxu0 %v860
    %915 = vmatpush1.msra.mxu0 %v859
    %916 = vmatprep.subr.mxu0 %v863
    %917 = vmatpush1.msra.mxu0 %v862
    %918 = vmatprep.subr.mxu0 %v866
    %919 = vmatpush1.msra.mxu0 %v865
    %920 = vmatprep.subr.mxu0 0.0
    %921 = vmatpush1.msra.mxu0 0.0
    %922 = vmatprep.subr.mxu0 0.0
    %923 = vmatpush1.msra.mxu0 0.0
    %924 = vmatprep.subr.mxu0 0.0
    %925 = vmatpush1.msra.mxu0 0.0
    %926 = vmatprep.subr.mxu0 0.0
    %927 = vmatpush1.msra.mxu0 0.0
    %928 = vmatprep.subr.mxu0 0.0
    %929 = vmatpush1.msra.mxu0 0.0
    %930 = vmatprep.subr.mxu0 0.0
    %931 = vmatpush1.msra.mxu0 0.0
    %932 = vmatprep.subr.mxu0 0.0
    %933 = vmatpush1.msra.mxu0 0.0
    %934 = vmatprep.subr.mxu0 0.0
    %935 = vmatpush1.msra.mxu0 0.0
    %936 = vmatprep.subr.mxu0 0.0
    %937 = vmatpush1.msra.mxu0 0.0
    %938 = vmatprep.subr.mxu0 0.0
    %939 = vmatpush1.msra.mxu0 0.0
    %940 = vmatprep.subr.mxu0 0.0
    %941 = vmatpush1.msra.mxu0 0.0
    %942 = vmatprep.subr.mxu0 0.0
    %943 = vmatpush1.msra.mxu0 0.0
    %944 = vmatprep.subr.mxu0 0.0
    %945 = vmatpush1.msra.mxu0 0.0
    %946 = vmatprep.subr.mxu0 0.0
    %947 = vmatpush1.msra.mxu0 0.0
    %948 = vmatprep.subr.mxu0 0.0
    %949 = vmatpush1.msra.mxu0 0.0
    %950 = vmatprep.subr.mxu0 0.0
    %951 = vmatpush1.msra.mxu0 0.0
    %952 = vmatprep.mubr.f32.mxu0 0.0
    %953 = vmatmul.mubr.f32.gmra.mrb[0].mxu0 %v870
    %v954 = vpop.f32.mrb[0].mxu0
    %v955 = vadd.f32 %v876, %v954
    %v956 = vpop.f32.mrb[0].mxu0
    %v957 = vadd.f32 %v880, %v956
    %958 = vdwg.mxu0
    %959 = vmatprep.subr.mxu0 0.0
    %960 = vmatpush1.msra.mxu0 %v822
    %961 = vmatprep.subr.mxu0 0.0
    %962 = vmatpush1.msra.mxu0 %v825
    %963 = vmatprep.subr.mxu0 0.0
    %964 = vmatpush1.msra.mxu0 %v828
    %965 = vmatprep.subr.mxu0 0.0
    %966 = vmatpush1.msra.mxu0 %v831
    %967 = vmatprep.subr.mxu0 0.0
    %968 = vmatpush1.msra.mxu0 %v834
    %969 = vmatprep.subr.mxu0 0.0
    %970 = vmatpush1.msra.mxu0 %v837
    %971 = vmatprep.subr.mxu0 0.0
    %972 = vmatpush1.msra.mxu0 %v840
    %973 = vmatprep.subr.mxu0 0.0
    %974 = vmatpush1.msra.mxu0 %v843
    %975 = vmatprep.subr.mxu0 0.0
    %976 = vmatpush1.msra.mxu0 %v846
    %977 = vmatprep.subr.mxu0 0.0
    %978 = vmatpush1.msra.mxu0 %v849
    %979 = vmatprep.subr.mxu0 0.0
    %980 = vmatpush1.msra.mxu0 %v852
    %981 = vmatprep.subr.mxu0 0.0
    %982 = vmatpush1.msra.mxu0 %v855
    %983 = vmatprep.subr.mxu0 0.0
    %984 = vmatpush1.msra.mxu0 %v858
    %985 = vmatprep.subr.mxu0 0.0
    %986 = vmatpush1.msra.mxu0 %v861
    %987 = vmatprep.subr.mxu0 0.0
    %988 = vmatpush1.msra.mxu0 %v864
    %989 = vmatprep.subr.mxu0 0.0
    %990 = vmatpush1.msra.mxu0 %v867
    %991 = vmatprep.subr.mxu0 0.0
    %992 = vmatpush1.msra.mxu0 0.0
    %993 = vmatprep.subr.mxu0 0.0
    %994 = vmatpush1.msra.mxu0 0.0
    %995 = vmatprep.subr.mxu0 0.0
    %996 = vmatpush1.msra.mxu0 0.0
    %997 = vmatprep.subr.mxu0 0.0
    %998 = vmatpush1.msra.mxu0 0.0
    %999 = vmatprep.subr.mxu0 0.0
    %1000 = vmatpush1.msra.mxu0 0.0
    %1001 = vmatprep.subr.mxu0 0.0
    %1002 = vmatpush1.msra.mxu0 0.0
    %1003 = vmatprep.subr.mxu0 0.0
    %1004 = vmatpush1.msra.mxu0 0.0
    %1005 = vmatprep.subr.mxu0 0.0
    %1006 = vmatpush1.msra.mxu0 0.0
    %1007 = vmatprep.subr.mxu0 0.0
    %1008 = vmatpush1.msra.mxu0 0.0
    %1009 = vmatprep.subr.mxu0 0.0
    %1010 = vmatpush1.msra.mxu0 0.0
    %1011 = vmatprep.subr.mxu0 0.0
    %1012 = vmatpush1.msra.mxu0 0.0
    %1013 = vmatprep.subr.mxu0 0.0
    %1014 = vmatpush1.msra.mxu0 0.0
    %1015 = vmatprep.subr.mxu0 0.0
    %1016 = vmatpush1.msra.mxu0 0.0
    %1017 = vmatprep.subr.mxu0 0.0
    %1018 = vmatpush1.msra.mxu0 0.0
    %1019 = vmatprep.subr.mxu0 0.0
    %1020 = vmatpush1.msra.mxu0 0.0
    %1021 = vmatprep.subr.mxu0 0.0
    %1022 = vmatpush1.msra.mxu0 0.0
    %1023 = vmatprep.mubr.f32.mxu0 0.0
    %1024 = vmatmul.mubr.f32.gmra.mrb[0].mxu0 %v870
    %v1025 = vpop.f32.mrb[0].mxu0
    %v1026 = vadd.f32 %v884, %v1025
    %v1027 = vpop.f32.mrb[0].mxu0
    %1028 = vdwg.mxu0
    %v1031 = vrot.slane %v955, 6
    %v1032 = vrot.slane %v957, 6
    %v1035 = vadd.f32 %v277, %v1031
    %v1036 = vadd.f32 %v279, %v1032
    %v1037 = vxor.u32 %v1035, 2147483648
    %v1038 = vxor.u32 %v1036, 2147483648
    %v1039 = vmul.f32 %v1037, 1.442695
    %v1040 = vpow.pop %v1039
    %v1041 = vmul.f32 %v1038, 1.442695
    %v1042 = vpow.pop %v1041
    %v1043 = vadd.f32 %v1040, 1.0
    %v1044 = vadd.f32 %v1042, 1.0
    %v1045 = vrcp.pop %v1043
    %v1046 = vmul.f32 1.0, %v1045
    %v1047 = vrcp.pop %v1044
    %v1048 = vmul.f32 1.0, %v1047
    %v1050 = vrot.slane %v1026, 6
    %v1052 = vmul.f32 %v1046, %v1050
    %v1053 = vadd.f32 %v348, %v1052
    %v1054 = vtanh.pop %v1053
    %v1055 = vsub.f32 1.0, %v1048
    %v1056 = vmul.f32 %v1055, %v1054
    %v1057 = vrot.slane %v818, 7
    %v1059 = vmul.f32 %v1048, %v1057
    %v1060 = vadd.f32 %v1056, %v1059
    %1061 = vst [vmem:[#allocation3] sm:$0x4] %v1060
    %v1062 = vld [vmem:[#allocation9] sm:$0xff]
    %v1063 = vld [vmem:[#allocation9 + $0x8] sm:$0xff]
    %v1064 = vld [vmem:[#allocation9 + $0x10] sm:$0xff]
    %v1065 = vld [vmem:[#allocation9 + $0x18] sm:$0xff]
    %v1066 = vld [vmem:[#allocation9 + $0x20] sm:$0xff]
    %v1067 = vld [vmem:[#allocation9 + $0x28] sm:$0xff]
    %v1068 = vld [vmem:[#allocation9 + $0x30] sm:$0xff]
    %v1069 = vld [vmem:[#allocation9 + $0x38] sm:$0xff]
    %v1070 = vld [vmem:[#allocation9 + $0x40] sm:$0xff]
    %v1071 = vld [vmem:[#allocation9 + $0x48] sm:$0xff]
    %v1072 = vld [vmem:[#allocation9 + $0x50] sm:$0xff]
    %v1073 = vld [vmem:[#allocation9 + $0x58] sm:$0xff]
    %v1074 = vld [vmem:[#allocation9 + $0x60] sm:$0xff]
    %v1075 = vld [vmem:[#allocation9 + $0x68] sm:$0xff]
    %v1076 = vld [vmem:[#allocation9 + $0x70] sm:$0xff]
    %v1077 = vld [vmem:[#allocation9 + $0x78] sm:$0xff]
    %v1078 = vld [vmem:[#allocation9 + $0x80] sm:$0xff]
    %v1079 = vld [vmem:[#allocation9 + $0x88] sm:$0xff]
    %v1080 = vld [vmem:[#allocation9 + $0x90] sm:$0xff]
    %v1081 = vld [vmem:[#allocation9 + $0x98] sm:$0xff]
    %v1082 = vld [vmem:[#allocation9 + $0xa0] sm:$0xff]
    %v1083 = vld [vmem:[#allocation9 + $0xa8] sm:$0xff]
    %v1084 = vld [vmem:[#allocation9 + $0xb0] sm:$0xff]
    %v1085 = vld [vmem:[#allocation9 + $0xb8] sm:$0xff]
    %v1086 = vld [vmem:[#allocation9 + $0xc0] sm:$0xff]
    %v1087 = vld [vmem:[#allocation9 + $0xc8] sm:$0xff]
    %v1088 = vld [vmem:[#allocation9 + $0xd0] sm:$0xff]
    %v1089 = vld [vmem:[#allocation9 + $0xd8] sm:$0xff]
    %v1090 = vld [vmem:[#allocation9 + $0xe0] sm:$0xff]
    %v1091 = vld [vmem:[#allocation9 + $0xe8] sm:$0xff]
    %v1092 = vld [vmem:[#allocation9 + $0xf0] sm:$0xff]
    %v1093 = vld [vmem:[#allocation9 + $0xf8] sm:$0xff]
    %v1094 = vld [vmem:[#allocation9 + $0x100] sm:$0xff]
    %v1095 = vld [vmem:[#allocation9 + $0x108] sm:$0xff]
    %v1096 = vld [vmem:[#allocation9 + $0x110] sm:$0xff]
    %v1097 = vld [vmem:[#allocation9 + $0x118] sm:$0xff]
    %v1098 = vld [vmem:[#allocation9 + $0x120] sm:$0xff]
    %v1099 = vld [vmem:[#allocation9 + $0x128] sm:$0xff]
    %v1100 = vld [vmem:[#allocation9 + $0x130] sm:$0xff]
    %v1101 = vld [vmem:[#allocation9 + $0x138] sm:$0xff]
    %v1102 = vld [vmem:[#allocation9 + $0x140] sm:$0xff]
    %v1103 = vld [vmem:[#allocation9 + $0x148] sm:$0xff]
    %v1104 = vld [vmem:[#allocation9 + $0x150] sm:$0xff]
    %v1105 = vld [vmem:[#allocation9 + $0x158] sm:$0xff]
    %v1106 = vld [vmem:[#allocation9 + $0x160] sm:$0xff]
    %v1107 = vld [vmem:[#allocation9 + $0x168] sm:$0xff]
    %v1108 = vld [vmem:[#allocation9 + $0x170] sm:$0xff]
    %v1109 = vld [vmem:[#allocation9 + $0x178] sm:$0xff]
    %v1110 = vld [vmem:[%s6] sm:$0x7]
    %v1112 = vrot.slane %v1060, 2
    %v1115 = vlaneseq
    %v1116 = vshrl.u32 %v1115, 7
    %v1117 = vsub.s32 0, %v1116
    %v1118 = vrot.slane %v1110, %v1117
    %v1119 = vlaneseq
    %v1120 = vshrl.u32 %v1119, 7
    %v1121 = vsub.s32 1, %v1120
    %v1122 = vrot.slane %v1110, %v1121
    %v1123 = vlaneseq
    %v1124 = vshrl.u32 %v1123, 7
    %v1125 = vsub.s32 2, %v1124
    %v1126 = vrot.slane %v1110, %v1125
    %1130 = vmatprep.subr.mxu0 %v1063
    %1131 = vmatpush1.msra.mxu0 %v1062
    %1132 = vmatprep.subr.mxu0 %v1066
    %1133 = vmatpush1.msra.mxu0 %v1065
    %1134 = vmatprep.subr.mxu0 %v1069
    %1135 = vmatpush1.msra.mxu0 %v1068
    %1136 = vmatprep.subr.mxu0 %v1072
    %1137 = vmatpush1.msra.mxu0 %v1071
    %1138 = vmatprep.subr.mxu0 %v1075
    %1139 = vmatpush1.msra.mxu0 %v1074
    %1140 = vmatprep.subr.mxu0 %v1078
    %1141 = vmatpush1.msra.mxu0 %v1077
    %1142 = vmatprep.subr.mxu0 %v1081
    %1143 = vmatpush1.msra.mxu0 %v1080
    %1144 = vmatprep.subr.mxu0 %v1084
    %1145 = vmatpush1.msra.mxu0 %v1083
    %1146 = vmatprep.subr.mxu0 %v1087
    %1147 = vmatpush1.msra.mxu0 %v1086
    %1148 = vmatprep.subr.mxu0 %v1090
    %1149 = vmatpush1.msra.mxu0 %v1089
    %1150 = vmatprep.subr.mxu0 %v1093
    %1151 = vmatpush1.msra.mxu0 %v1092
    %1152 = vmatprep.subr.mxu0 %v1096
    %1153 = vmatpush1.msra.mxu0 %v1095
    %1154 = vmatprep.subr.mxu0 %v1099
    %1155 = vmatpush1.msra.mxu0 %v1098
    %1156 = vmatprep.subr.mxu0 %v1102
    %1157 = vmatpush1.msra.mxu0 %v1101
    %1158 = vmatprep.subr.mxu0 %v1105
    %1159 = vmatpush1.msra.mxu0 %v1104
    %1160 = vmatprep.subr.mxu0 %v1108
    %1161 = vmatpush1.msra.mxu0 %v1107
    %1162 = vmatprep.subr.mxu0 0.0
    %1163 = vmatpush1.msra.mxu0 0.0
    %1164 = vmatprep.subr.mxu0 0.0
    %1165 = vmatpush1.msra.mxu0 0.0
    %1166 = vmatprep.subr.mxu0 0.0
    %1167 = vmatpush1.msra.mxu0 0.0
    %1168 = vmatprep.subr.mxu0 0.0
    %1169 = vmatpush1.msra.mxu0 0.0
    %1170 = vmatprep.subr.mxu0 0.0
    %1171 = vmatpush1.msra.mxu0 0.0
    %1172 = vmatprep.subr.mxu0 0.0
    %1173 = vmatpush1.msra.mxu0 0.0
    %1174 = vmatprep.subr.mxu0 0.0
    %1175 = vmatpush1.msra.mxu0 0.0
    %1176 = vmatprep.subr.mxu0 0.0
    %1177 = vmatpush1.msra.mxu0 0.0
    %1178 = vmatprep.subr.mxu0 0.0
    %1179 = vmatpush1.msra.mxu0 0.0
    %1180 = vmatprep.subr.mxu0 0.0
    %1181 = vmatpush1.msra.mxu0 0.0
    %1182 = vmatprep.subr.mxu0 0.0
    %1183 = vmatpush1.msra.mxu0 0.0
    %1184 = vmatprep.subr.mxu0 0.0
    %1185 = vmatpush1.msra.mxu0 0.0
    %1186 = vmatprep.subr.mxu0 0.0
    %1187 = vmatpush1.msra.mxu0 0.0
    %1188 = vmatprep.subr.mxu0 0.0
    %1189 = vmatpush1.msra.mxu0 0.0
    %1190 = vmatprep.subr.mxu0 0.0
    %1191 = vmatpush1.msra.mxu0 0.0
    %1192 = vmatprep.subr.mxu0 0.0
    %1193 = vmatpush1.msra.mxu0 0.0
    %1194 = vmatprep.mubr.f32.mxu0 0.0
    %1195 = vmatmul.mubr.f32.gmra.mrb[0].mxu0 %v1112
    %v1196 = vpop.f32.mrb[0].mxu0
    %v1197 = vadd.f32 %v1118, %v1196
    %v1198 = vpop.f32.mrb[0].mxu0
    %v1199 = vadd.f32 %v1122, %v1198
    %1200 = vdwg.mxu0
    %1201 = vmatprep.subr.mxu0 0.0
    %1202 = vmatpush1.msra.mxu0 %v1064
    %1203 = vmatprep.subr.mxu0 0.0
    %1204 = vmatpush1.msra.mxu0 %v1067
    %1205 = vmatprep.subr.mxu0 0.0
    %1206 = vmatpush1.msra.mxu0 %v1070
    %1207 = vmatprep.subr.mxu0 0.0
    %1208 = vmatpush1.msra.mxu0 %v1073
    %1209 = vmatprep.subr.mxu0 0.0
    %1210 = vmatpush1.msra.mxu0 %v1076
    %1211 = vmatprep.subr.mxu0 0.0
    %1212 = vmatpush1.msra.mxu0 %v1079
    %1213 = vmatprep.subr.mxu0 0.0
    %1214 = vmatpush1.msra.mxu0 %v1082
    %1215 = vmatprep.subr.mxu0 0.0
    %1216 = vmatpush1.msra.mxu0 %v1085
    %1217 = vmatprep.subr.mxu0 0.0
    %1218 = vmatpush1.msra.mxu0 %v1088
    %1219 = vmatprep.subr.mxu0 0.0
    %1220 = vmatpush1.msra.mxu0 %v1091
    %1221 = vmatprep.subr.mxu0 0.0
    %1222 = vmatpush1.msra.mxu0 %v1094
    %1223 = vmatprep.subr.mxu0 0.0
    %1224 = vmatpush1.msra.mxu0 %v1097
    %1225 = vmatprep.subr.mxu0 0.0
    %1226 = vmatpush1.msra.mxu0 %v1100
    %1227 = vmatprep.subr.mxu0 0.0
    %1228 = vmatpush1.msra.mxu0 %v1103
    %1229 = vmatprep.subr.mxu0 0.0
    %1230 = vmatpush1.msra.mxu0 %v1106
    %1231 = vmatprep.subr.mxu0 0.0
    %1232 = vmatpush1.msra.mxu0 %v1109
    %1233 = vmatprep.subr.mxu0 0.0
    %1234 = vmatpush1.msra.mxu0 0.0
    %1235 = vmatprep.subr.mxu0 0.0
    %1236 = vmatpush1.msra.mxu0 0.0
    %1237 = vmatprep.subr.mxu0 0.0
    %1238 = vmatpush1.msra.mxu0 0.0
    %1239 = vmatprep.subr.mxu0 0.0
    %1240 = vmatpush1.msra.mxu0 0.0
    %1241 = vmatprep.subr.mxu0 0.0
    %1242 = vmatpush1.msra.mxu0 0.0
    %1243 = vmatprep.subr.mxu0 0.0
    %1244 = vmatpush1.msra.mxu0 0.0
    %1245 = vmatprep.subr.mxu0 0.0
    %1246 = vmatpush1.msra.mxu0 0.0
    %1247 = vmatprep.subr.mxu0 0.0
    %1248 = vmatpush1.msra.mxu0 0.0
    %1249 = vmatprep.subr.mxu0 0.0
    %1250 = vmatpush1.msra.mxu0 0.0
    %1251 = vmatprep.subr.mxu0 0.0
    %1252 = vmatpush1.msra.mxu0 0.0
    %1253 = vmatprep.subr.mxu0 0.0
    %1254 = vmatpush1.msra.mxu0 0.0
    %1255 = vmatprep.subr.mxu0 0.0
    %1256 = vmatpush1.msra.mxu0 0.0
    %1257 = vmatprep.subr.mxu0 0.0
    %1258 = vmatpush1.msra.mxu0 0.0
    %1259 = vmatprep.subr.mxu0 0.0
    %1260 = vmatpush1.msra.mxu0 0.0
    %1261 = vmatprep.subr.mxu0 0.0
    %1262 = vmatpush1.msra.mxu0 0.0
    %1263 = vmatprep.subr.mxu0 0.0
    %1264 = vmatpush1.msra.mxu0 0.0
    %1265 = vmatprep.mubr.f32.mxu0 0.0
    %1266 = vmatmul.mubr.f32.gmra.mrb[0].mxu0 %v1112
    %v1267 = vpop.f32.mrb[0].mxu0
    %v1268 = vadd.f32 %v1126, %v1267
    %v1269 = vpop.f32.mrb[0].mxu0
    %1270 = vdwg.mxu0
    %v1273 = vrot.slane %v1197, 5
    %v1274 = vrot.slane %v1199, 5
    %v1277 = vadd.f32 %v277, %v1273
    %v1278 = vadd.f32 %v279, %v1274
    %v1279 = vxor.u32 %v1277, 2147483648
    %v1280 = vxor.u32 %v1278, 2147483648
    %v1281 = vmul.f32 %v1279, 1.442695
    %v1282 = vpow.pop %v1281
    %v1283 = vmul.f32 %v1280, 1.442695
    %v1284 = vpow.pop %v1283
    %v1285 = vadd.f32 %v1282, 1.0
    %v1286 = vadd.f32 %v1284, 1.0
    %v1287 = vrcp.pop %v1285
    %v1288 = vmul.f32 1.0, %v1287
    %v1289 = vrcp.pop %v1286
    %v1290 = vmul.f32 1.0, %v1289
    %v1292 = vrot.slane %v1268, 5
    %v1294 = vmul.f32 %v1288, %v1292
    %v1295 = vadd.f32 %v348, %v1294
    %v1296 = vtanh.pop %v1295
    %v1297 = vsub.f32 1.0, %v1290
    %v1298 = vmul.f32 %v1297, %v1296
    %v1299 = vrot.slane %v1060, 7
    %v1301 = vmul.f32 %v1290, %v1299
    %v1302 = vadd.f32 %v1298, %v1301
    %1303 = vst [vmem:[#allocation3] sm:$0x8] %v1302
    %v1304 = vld [vmem:[#allocation9] sm:$0xff]
    %v1305 = vld [vmem:[#allocation9 + $0x8] sm:$0xff]
    %v1306 = vld [vmem:[#allocation9 + $0x10] sm:$0xff]
    %v1307 = vld [vmem:[#allocation9 + $0x18] sm:$0xff]
    %v1308 = vld [vmem:[#allocation9 + $0x20] sm:$0xff]
    %v1309 = vld [vmem:[#allocation9 + $0x28] sm:$0xff]
    %v1310 = vld [vmem:[#allocation9 + $0x30] sm:$0xff]
    %v1311 = vld [vmem:[#allocation9 + $0x38] sm:$0xff]
    %v1312 = vld [vmem:[#allocation9 + $0x40] sm:$0xff]
    %v1313 = vld [vmem:[#allocation9 + $0x48] sm:$0xff]
    %v1314 = vld [vmem:[#allocation9 + $0x50] sm:$0xff]
    %v1315 = vld [vmem:[#allocation9 + $0x58] sm:$0xff]
    %v1316 = vld [vmem:[#allocation9 + $0x60] sm:$0xff]
    %v1317 = vld [vmem:[#allocation9 + $0x68] sm:$0xff]
    %v1318 = vld [vmem:[#allocation9 + $0x70] sm:$0xff]
    %v1319 = vld [vmem:[#allocation9 + $0x78] sm:$0xff]
    %v1320 = vld [vmem:[#allocation9 + $0x80] sm:$0xff]
    %v1321 = vld [vmem:[#allocation9 + $0x88] sm:$0xff]
    %v1322 = vld [vmem:[#allocation9 + $0x90] sm:$0xff]
    %v1323 = vld [vmem:[#allocation9 + $0x98] sm:$0xff]
    %v1324 = vld [vmem:[#allocation9 + $0xa0] sm:$0xff]
    %v1325 = vld [vmem:[#allocation9 + $0xa8] sm:$0xff]
    %v1326 = vld [vmem:[#allocation9 + $0xb0] sm:$0xff]
    %v1327 = vld [vmem:[#allocation9 + $0xb8] sm:$0xff]
    %v1328 = vld [vmem:[#allocation9 + $0xc0] sm:$0xff]
    %v1329 = vld [vmem:[#allocation9 + $0xc8] sm:$0xff]
    %v1330 = vld [vmem:[#allocation9 + $0xd0] sm:$0xff]
    %v1331 = vld [vmem:[#allocation9 + $0xd8] sm:$0xff]
    %v1332 = vld [vmem:[#allocation9 + $0xe0] sm:$0xff]
    %v1333 = vld [vmem:[#allocation9 + $0xe8] sm:$0xff]
    %v1334 = vld [vmem:[#allocation9 + $0xf0] sm:$0xff]
    %v1335 = vld [vmem:[#allocation9 + $0xf8] sm:$0xff]
    %v1336 = vld [vmem:[#allocation9 + $0x100] sm:$0xff]
    %v1337 = vld [vmem:[#allocation9 + $0x108] sm:$0xff]
    %v1338 = vld [vmem:[#allocation9 + $0x110] sm:$0xff]
    %v1339 = vld [vmem:[#allocation9 + $0x118] sm:$0xff]
    %v1340 = vld [vmem:[#allocation9 + $0x120] sm:$0xff]
    %v1341 = vld [vmem:[#allocation9 + $0x128] sm:$0xff]
    %v1342 = vld [vmem:[#allocation9 + $0x130] sm:$0xff]
    %v1343 = vld [vmem:[#allocation9 + $0x138] sm:$0xff]
    %v1344 = vld [vmem:[#allocation9 + $0x140] sm:$0xff]
    %v1345 = vld [vmem:[#allocation9 + $0x148] sm:$0xff]
    %v1346 = vld [vmem:[#allocation9 + $0x150] sm:$0xff]
    %v1347 = vld [vmem:[#allocation9 + $0x158] sm:$0xff]
    %v1348 = vld [vmem:[#allocation9 + $0x160] sm:$0xff]
    %v1349 = vld [vmem:[#allocation9 + $0x168] sm:$0xff]
    %v1350 = vld [vmem:[#allocation9 + $0x170] sm:$0xff]
    %v1351 = vld [vmem:[#allocation9 + $0x178] sm:$0xff]
    %v1352 = vld [vmem:[%s6] sm:$0x7]
    %v1354 = vrot.slane %v1302, 3
    %v1357 = vlaneseq
    %v1358 = vshrl.u32 %v1357, 7
    %v1359 = vsub.s32 0, %v1358
    %v1360 = vrot.slane %v1352, %v1359
    %v1361 = vlaneseq
    %v1362 = vshrl.u32 %v1361, 7
    %v1363 = vsub.s32 1, %v1362
    %v1364 = vrot.slane %v1352, %v1363
    %v1365 = vlaneseq
    %v1366 = vshrl.u32 %v1365, 7
    %v1367 = vsub.s32 2, %v1366
    %v1368 = vrot.slane %v1352, %v1367
    %1372 = vmatprep.subr.mxu0 %v1305
    %1373 = vmatpush1.msra.mxu0 %v1304
    %1374 = vmatprep.subr.mxu0 %v1308
    %1375 = vmatpush1.msra.mxu0 %v1307
    %1376 = vmatprep.subr.mxu0 %v1311
    %1377 = vmatpush1.msra.mxu0 %v1310
    %1378 = vmatprep.subr.mxu0 %v1314
    %1379 = vmatpush1.msra.mxu0 %v1313
    %1380 = vmatprep.subr.mxu0 %v1317
    %1381 = vmatpush1.msra.mxu0 %v1316
    %1382 = vmatprep.subr.mxu0 %v1320
    %1383 = vmatpush1.msra.mxu0 %v1319
    %1384 = vmatprep.subr.mxu0 %v1323
    %1385 = vmatpush1.msra.mxu0 %v1322
    %1386 = vmatprep.subr.mxu0 %v1326
    %1387 = vmatpush1.msra.mxu0 %v1325
    %1388 = vmatprep.subr.mxu0 %v1329
    %1389 = vmatpush1.msra.mxu0 %v1328
    %1390 = vmatprep.subr.mxu0 %v1332
    %1391 = vmatpush1.msra.mxu0 %v1331
    %1392 = vmatprep.subr.mxu0 %v1335
    %1393 = vmatpush1.msra.mxu0 %v1334
    %1394 = vmatprep.subr.mxu0 %v1338
    %1395 = vmatpush1.msra.mxu0 %v1337
    %1396 = vmatprep.subr.mxu0 %v1341
    %1397 = vmatpush1.msra.mxu0 %v1340
    %1398 = vmatprep.subr.mxu0 %v1344
    %1399 = vmatpush1.msra.mxu0 %v1343
    %1400 = vmatprep.subr.mxu0 %v1347
    %1401 = vmatpush1.msra.mxu0 %v1346
    %1402 = vmatprep.subr.mxu0 %v1350
    %1403 = vmatpush1.msra.mxu0 %v1349
    %1404 = vmatprep.subr.mxu0 0.0
    %1405 = vmatpush1.msra.mxu0 0.0
    %1406 = vmatprep.subr.mxu0 0.0
    %1407 = vmatpush1.msra.mxu0 0.0
    %1408 = vmatprep.subr.mxu0 0.0
    %1409 = vmatpush1.msra.mxu0 0.0
    %1410 = vmatprep.subr.mxu0 0.0
    %1411 = vmatpush1.msra.mxu0 0.0
    %1412 = vmatprep.subr.mxu0 0.0
    %1413 = vmatpush1.msra.mxu0 0.0
    %1414 = vmatprep.subr.mxu0 0.0
    %1415 = vmatpush1.msra.mxu0 0.0
    %1416 = vmatprep.subr.mxu0 0.0
    %1417 = vmatpush1.msra.mxu0 0.0
    %1418 = vmatprep.subr.mxu0 0.0
    %1419 = vmatpush1.msra.mxu0 0.0
    %1420 = vmatprep.subr.mxu0 0.0
    %1421 = vmatpush1.msra.mxu0 0.0
    %1422 = vmatprep.subr.mxu0 0.0
    %1423 = vmatpush1.msra.mxu0 0.0
    %1424 = vmatprep.subr.mxu0 0.0
    %1425 = vmatpush1.msra.mxu0 0.0
    %1426 = vmatprep.subr.mxu0 0.0
    %1427 = vmatpush1.msra.mxu0 0.0
    %1428 = vmatprep.subr.mxu0 0.0
    %1429 = vmatpush1.msra.mxu0 0.0
    %1430 = vmatprep.subr.mxu0 0.0
    %1431 = vmatpush1.msra.mxu0 0.0
    %1432 = vmatprep.subr.mxu0 0.0
    %1433 = vmatpush1.msra.mxu0 0.0
    %1434 = vmatprep.subr.mxu0 0.0
    %1435 = vmatpush1.msra.mxu0 0.0
    %1436 = vmatprep.mubr.f32.mxu0 0.0
    %1437 = vmatmul.mubr.f32.gmra.mrb[0].mxu0 %v1354
    %v1438 = vpop.f32.mrb[0].mxu0
    %v1439 = vadd.f32 %v1360, %v1438
    %v1440 = vpop.f32.mrb[0].mxu0
    %v1441 = vadd.f32 %v1364, %v1440
    %1442 = vdwg.mxu0
    %1443 = vmatprep.subr.mxu0 0.0
    %1444 = vmatpush1.msra.mxu0 %v1306
    %1445 = vmatprep.subr.mxu0 0.0
    %1446 = vmatpush1.msra.mxu0 %v1309
    %1447 = vmatprep.subr.mxu0 0.0
    %1448 = vmatpush1.msra.mxu0 %v1312
    %1449 = vmatprep.subr.mxu0 0.0
    %1450 = vmatpush1.msra.mxu0 %v1315
    %1451 = vmatprep.subr.mxu0 0.0
    %1452 = vmatpush1.msra.mxu0 %v1318
    %1453 = vmatprep.subr.mxu0 0.0
    %1454 = vmatpush1.msra.mxu0 %v1321
    %1455 = vmatprep.subr.mxu0 0.0
    %1456 = vmatpush1.msra.mxu0 %v1324
    %1457 = vmatprep.subr.mxu0 0.0
    %1458 = vmatpush1.msra.mxu0 %v1327
    %1459 = vmatprep.subr.mxu0 0.0
    %1460 = vmatpush1.msra.mxu0 %v1330
    %1461 = vmatprep.subr.mxu0 0.0
    %1462 = vmatpush1.msra.mxu0 %v1333
    %1463 = vmatprep.subr.mxu0 0.0
    %1464 = vmatpush1.msra.mxu0 %v1336
    %1465 = vmatprep.subr.mxu0 0.0
    %1466 = vmatpush1.msra.mxu0 %v1339
    %1467 = vmatprep.subr.mxu0 0.0
    %1468 = vmatpush1.msra.mxu0 %v1342
    %1469 = vmatprep.subr.mxu0 0.0
    %1470 = vmatpush1.msra.mxu0 %v1345
    %1471 = vmatprep.subr.mxu0 0.0
    %1472 = vmatpush1.msra.mxu0 %v1348
    %1473 = vmatprep.subr.mxu0 0.0
    %1474 = vmatpush1.msra.mxu0 %v1351
    %1475 = vmatprep.subr.mxu0 0.0
    %1476 = vmatpush1.msra.mxu0 0.0
    %1477 = vmatprep.subr.mxu0 0.0
    %1478 = vmatpush1.msra.mxu0 0.0
    %1479 = vmatprep.subr.mxu0 0.0
    %1480 = vmatpush1.msra.mxu0 0.0
    %1481 = vmatprep.subr.mxu0 0.0
    %1482 = vmatpush1.msra.mxu0 0.0
    %1483 = vmatprep.subr.mxu0 0.0
    %1484 = vmatpush1.msra.mxu0 0.0
    %1485 = vmatprep.subr.mxu0 0.0
    %1486 = vmatpush1.msra.mxu0 0.0
    %1487 = vmatprep.subr.mxu0 0.0
    %1488 = vmatpush1.msra.mxu0 0.0
    %1489 = vmatprep.subr.mxu0 0.0
    %1490 = vmatpush1.msra.mxu0 0.0
    %1491 = vmatprep.subr.mxu0 0.0
    %1492 = vmatpush1.msra.mxu0 0.0
    %1493 = vmatprep.subr.mxu0 0.0
    %1494 = vmatpush1.msra.mxu0 0.0
    %1495 = vmatprep.subr.mxu0 0.0
    %1496 = vmatpush1.msra.mxu0 0.0
    %1497 = vmatprep.subr.mxu0 0.0
    %1498 = vmatpush1.msra.mxu0 0.0
    %1499 = vmatprep.subr.mxu0 0.0
    %1500 = vmatpush1.msra.mxu0 0.0
    %1501 = vmatprep.subr.mxu0 0.0
    %1502 = vmatpush1.msra.mxu0 0.0
    %1503 = vmatprep.subr.mxu0 0.0
    %1504 = vmatpush1.msra.mxu0 0.0
    %1505 = vmatprep.subr.mxu0 0.0
    %1506 = vmatpush1.msra.mxu0 0.0
    %1507 = vmatprep.mubr.f32.mxu0 0.0
    %1508 = vmatmul.mubr.f32.gmra.mrb[0].mxu0 %v1354
    %v1509 = vpop.f32.mrb[0].mxu0
    %v1510 = vadd.f32 %v1368, %v1509
    %v1511 = vpop.f32.mrb[0].mxu0
    %1512 = vdwg.mxu0
    %v1515 = vrot.slane %v1439, 4
    %v1516 = vrot.slane %v1441, 4
    %v1519 = vadd.f32 %v277, %v1515
    %v1520 = vadd.f32 %v279, %v1516
    %v1521 = vxor.u32 %v1519, 2147483648
    %v1522 = vxor.u32 %v1520, 2147483648
    %v1523 = vmul.f32 %v1521, 1.442695
    %v1524 = vpow.pop %v1523
    %v1525 = vmul.f32 %v1522, 1.442695
    %v1526 = vpow.pop %v1525
    %v1527 = vadd.f32 %v1524, 1.0
    %v1528 = vadd.f32 %v1526, 1.0
    %v1529 = vrcp.pop %v1527
    %v1530 = vmul.f32 1.0, %v1529
    %v1531 = vrcp.pop %v1528
    %v1532 = vmul.f32 1.0, %v1531
    %v1534 = vrot.slane %v1510, 4
    %v1536 = vmul.f32 %v1530, %v1534
    %v1537 = vadd.f32 %v348, %v1536
    %v1538 = vtanh.pop %v1537
    %v1539 = vsub.f32 1.0, %v1532
    %v1540 = vmul.f32 %v1539, %v1538
    %v1541 = vrot.slane %v1302, 7
    %v1543 = vmul.f32 %v1532, %v1541
    %v1544 = vadd.f32 %v1540, %v1543
    %1545 = vst [vmem:[#allocation3] sm:$0x10] %v1544
    %v1546 = vld [vmem:[#allocation9] sm:$0xff]
    %v1547 = vld [vmem:[#allocation9 + $0x8] sm:$0xff]
    %v1548 = vld [vmem:[#allocation9 + $0x10] sm:$0xff]
    %v1549 = vld [vmem:[#allocation9 + $0x18] sm:$0xff]
    %v1550 = vld [vmem:[#allocation9 + $0x20] sm:$0xff]
    %v1551 = vld [vmem:[#allocation9 + $0x28] sm:$0xff]
    %v1552 = vld [vmem:[#allocation9 + $0x30] sm:$0xff]
    %v1553 = vld [vmem:[#allocation9 + $0x38] sm:$0xff]
    %v1554 = vld [vmem:[#allocation9 + $0x40] sm:$0xff]
    %v1555 = vld [vmem:[#allocation9 + $0x48] sm:$0xff]
    %v1556 = vld [vmem:[#allocation9 + $0x50] sm:$0xff]
    %v1557 = vld [vmem:[#allocation9 + $0x58] sm:$0xff]
    %v1558 = vld [vmem:[#allocation9 + $0x60] sm:$0xff]
    %v1559 = vld [vmem:[#allocation9 + $0x68] sm:$0xff]
    %v1560 = vld [vmem:[#allocation9 + $0x70] sm:$0xff]
    %v1561 = vld [vmem:[#allocation9 + $0x78] sm:$0xff]
    %v1562 = vld [vmem:[#allocation9 + $0x80] sm:$0xff]
    %v1563 = vld [vmem:[#allocation9 + $0x88] sm:$0xff]
    %v1564 = vld [vmem:[#allocation9 + $0x90] sm:$0xff]
    %v1565 = vld [vmem:[#allocation9 + $0x98] sm:$0xff]
    %v1566 = vld [vmem:[#allocation9 + $0xa0] sm:$0xff]
    %v1567 = vld [vmem:[#allocation9 + $0xa8] sm:$0xff]
    %v1568 = vld [vmem:[#allocation9 + $0xb0] sm:$0xff]
    %v1569 = vld [vmem:[#allocation9 + $0xb8] sm:$0xff]
    %v1570 = vld [vmem:[#allocation9 + $0xc0] sm:$0xff]
    %v1571 = vld [vmem:[#allocation9 + $0xc8] sm:$0xff]
    %v1572 = vld [vmem:[#allocation9 + $0xd0] sm:$0xff]
    %v1573 = vld [vmem:[#allocation9 + $0xd8] sm:$0xff]
    %v1574 = vld [vmem:[#allocation9 + $0xe0] sm:$0xff]
    %v1575 = vld [vmem:[#allocation9 + $0xe8] sm:$0xff]
    %v1576 = vld [vmem:[#allocation9 + $0xf0] sm:$0xff]
    %v1577 = vld [vmem:[#allocation9 + $0xf8] sm:$0xff]
    %v1578 = vld [vmem:[#allocation9 + $0x100] sm:$0xff]
    %v1579 = vld [vmem:[#allocation9 + $0x108] sm:$0xff]
    %v1580 = vld [vmem:[#allocation9 + $0x110] sm:$0xff]
    %v1581 = vld [vmem:[#allocation9 + $0x118] sm:$0xff]
    %v1582 = vld [vmem:[#allocation9 + $0x120] sm:$0xff]
    %v1583 = vld [vmem:[#allocation9 + $0x128] sm:$0xff]
    %v1584 = vld [vmem:[#allocation9 + $0x130] sm:$0xff]
    %v1585 = vld [vmem:[#allocation9 + $0x138] sm:$0xff]
    %v1586 = vld [vmem:[#allocation9 + $0x140] sm:$0xff]
    %v1587 = vld [vmem:[#allocation9 + $0x148] sm:$0xff]
    %v1588 = vld [vmem:[#allocation9 + $0x150] sm:$0xff]
    %v1589 = vld [vmem:[#allocation9 + $0x158] sm:$0xff]
    %v1590 = vld [vmem:[#allocation9 + $0x160] sm:$0xff]
    %v1591 = vld [vmem:[#allocation9 + $0x168] sm:$0xff]
    %v1592 = vld [vmem:[#allocation9 + $0x170] sm:$0xff]
    %v1593 = vld [vmem:[#allocation9 + $0x178] sm:$0xff]
    %v1594 = vld [vmem:[%s6] sm:$0x7]
    %v1596 = vrot.slane %v1544, 4
    %v1599 = vlaneseq
    %v1600 = vshrl.u32 %v1599, 7
    %v1601 = vsub.s32 0, %v1600
    %v1602 = vrot.slane %v1594, %v1601
    %v1603 = vlaneseq
    %v1604 = vshrl.u32 %v1603, 7
    %v1605 = vsub.s32 1, %v1604
    %v1606 = vrot.slane %v1594, %v1605
    %v1607 = vlaneseq
    %v1608 = vshrl.u32 %v1607, 7
    %v1609 = vsub.s32 2, %v1608
    %v1610 = vrot.slane %v1594, %v1609
    %1614 = vmatprep.subr.mxu0 %v1547
    %1615 = vmatpush1.msra.mxu0 %v1546
    %1616 = vmatprep.subr.mxu0 %v1550
    %1617 = vmatpush1.msra.mxu0 %v1549
    %1618 = vmatprep.subr.mxu0 %v1553
    %1619 = vmatpush1.msra.mxu0 %v1552
    %1620 = vmatprep.subr.mxu0 %v1556
    %1621 = vmatpush1.msra.mxu0 %v1555
    %1622 = vmatprep.subr.mxu0 %v1559
    %1623 = vmatpush1.msra.mxu0 %v1558
    %1624 = vmatprep.subr.mxu0 %v1562
    %1625 = vmatpush1.msra.mxu0 %v1561
    %1626 = vmatprep.subr.mxu0 %v1565
    %1627 = vmatpush1.msra.mxu0 %v1564
    %1628 = vmatprep.subr.mxu0 %v1568
    %1629 = vmatpush1.msra.mxu0 %v1567
    %1630 = vmatprep.subr.mxu0 %v1571
    %1631 = vmatpush1.msra.mxu0 %v1570
    %1632 = vmatprep.subr.mxu0 %v1574
    %1633 = vmatpush1.msra.mxu0 %v1573
    %1634 = vmatprep.subr.mxu0 %v1577
    %1635 = vmatpush1.msra.mxu0 %v1576
    %1636 = vmatprep.subr.mxu0 %v1580
    %1637 = vmatpush1.msra.mxu0 %v1579
    %1638 = vmatprep.subr.mxu0 %v1583
    %1639 = vmatpush1.msra.mxu0 %v1582
    %1640 = vmatprep.subr.mxu0 %v1586
    %1641 = vmatpush1.msra.mxu0 %v1585
    %1642 = vmatprep.subr.mxu0 %v1589
    %1643 = vmatpush1.msra.mxu0 %v1588
    %1644 = vmatprep.subr.mxu0 %v1592
    %1645 = vmatpush1.msra.mxu0 %v1591
    %1646 = vmatprep.subr.mxu0 0.0
    %1647 = vmatpush1.msra.mxu0 0.0
    %1648 = vmatprep.subr.mxu0 0.0
    %1649 = vmatpush1.msra.mxu0 0.0
    %1650 = vmatprep.subr.mxu0 0.0
    %1651 = vmatpush1.msra.mxu0 0.0
    %1652 = vmatprep.subr.mxu0 0.0
    %1653 = vmatpush1.msra.mxu0 0.0
    %1654 = vmatprep.subr.mxu0 0.0
    %1655 = vmatpush1.msra.mxu0 0.0
    %1656 = vmatprep.subr.mxu0 0.0
    %1657 = vmatpush1.msra.mxu0 0.0
    %1658 = vmatprep.subr.mxu0 0.0
    %1659 = vmatpush1.msra.mxu0 0.0
    %1660 = vmatprep.subr.mxu0 0.0
    %1661 = vmatpush1.msra.mxu0 0.0
    %1662 = vmatprep.subr.mxu0 0.0
    %1663 = vmatpush1.msra.mxu0 0.0
    %1664 = vmatprep.subr.mxu0 0.0
    %1665 = vmatpush1.msra.mxu0 0.0
    %1666 = vmatprep.subr.mxu0 0.0
    %1667 = vmatpush1.msra.mxu0 0.0
    %1668 = vmatprep.subr.mxu0 0.0
    %1669 = vmatpush1.msra.mxu0 0.0
    %1670 = vmatprep.subr.mxu0 0.0
    %1671 = vmatpush1.msra.mxu0 0.0
    %1672 = vmatprep.subr.mxu0 0.0
    %1673 = vmatpush1.msra.mxu0 0.0
    %1674 = vmatprep.subr.mxu0 0.0
    %1675 = vmatpush1.msra.mxu0 0.0
    %1676 = vmatprep.subr.mxu0 0.0
    %1677 = vmatpush1.msra.mxu0 0.0
    %1678 = vmatprep.mubr.f32.mxu0 0.0
    %1679 = vmatmul.mubr.f32.gmra.mrb[0].mxu0 %v1596
    %v1680 = vpop.f32.mrb[0].mxu0
    %v1681 = vadd.f32 %v1602, %v1680
    %v1682 = vpop.f32.mrb[0].mxu0
    %v1683 = vadd.f32 %v1606, %v1682
    %1684 = vdwg.mxu0
    %1685 = vmatprep.subr.mxu0 0.0
    %1686 = vmatpush1.msra.mxu0 %v1548
    %1687 = vmatprep.subr.mxu0 0.0
    %1688 = vmatpush1.msra.mxu0 %v1551
    %1689 = vmatprep.subr.mxu0 0.0
    %1690 = vmatpush1.msra.mxu0 %v1554
    %1691 = vmatprep.subr.mxu0 0.0
    %1692 = vmatpush1.msra.mxu0 %v1557
    %1693 = vmatprep.subr.mxu0 0.0
    %1694 = vmatpush1.msra.mxu0 %v1560
    %1695 = vmatprep.subr.mxu0 0.0
    %1696 = vmatpush1.msra.mxu0 %v1563
    %1697 = vmatprep.subr.mxu0 0.0
    %1698 = vmatpush1.msra.mxu0 %v1566
    %1699 = vmatprep.subr.mxu0 0.0
    %1700 = vmatpush1.msra.mxu0 %v1569
    %1701 = vmatprep.subr.mxu0 0.0
    %1702 = vmatpush1.msra.mxu0 %v1572
    %1703 = vmatprep.subr.mxu0 0.0
    %1704 = vmatpush1.msra.mxu0 %v1575
    %1705 = vmatprep.subr.mxu0 0.0
    %1706 = vmatpush1.msra.mxu0 %v1578
    %1707 = vmatprep.subr.mxu0 0.0
    %1708 = vmatpush1.msra.mxu0 %v1581
    %1709 = vmatprep.subr.mxu0 0.0
    %1710 = vmatpush1.msra.mxu0 %v1584
    %1711 = vmatprep.subr.mxu0 0.0
    %1712 = vmatpush1.msra.mxu0 %v1587
    %1713 = vmatprep.subr.mxu0 0.0
    %1714 = vmatpush1.msra.mxu0 %v1590
    %1715 = vmatprep.subr.mxu0 0.0
    %1716 = vmatpush1.msra.mxu0 %v1593
    %1717 = vmatprep.subr.mxu0 0.0
    %1718 = vmatpush1.msra.mxu0 0.0
    %1719 = vmatprep.subr.mxu0 0.0
    %1720 = vmatpush1.msra.mxu0 0.0
    %1721 = vmatprep.subr.mxu0 0.0
    %1722 = vmatpush1.msra.mxu0 0.0
    %1723 = vmatprep.subr.mxu0 0.0
    %1724 = vmatpush1.msra.mxu0 0.0
    %1725 = vmatprep.subr.mxu0 0.0
    %1726 = vmatpush1.msra.mxu0 0.0
    %1727 = vmatprep.subr.mxu0 0.0
    %1728 = vmatpush1.msra.mxu0 0.0
    %1729 = vmatprep.subr.mxu0 0.0
    %1730 = vmatpush1.msra.mxu0 0.0
    %1731 = vmatprep.subr.mxu0 0.0
    %1732 = vmatpush1.msra.mxu0 0.0
    %1733 = vmatprep.subr.mxu0 0.0
    %1734 = vmatpush1.msra.mxu0 0.0
    %1735 = vmatprep.subr.mxu0 0.0
    %1736 = vmatpush1.msra.mxu0 0.0
    %1737 = vmatprep.subr.mxu0 0.0
    %1738 = vmatpush1.msra.mxu0 0.0
    %1739 = vmatprep.subr.mxu0 0.0
    %1740 = vmatpush1.msra.mxu0 0.0
    %1741 = vmatprep.subr.mxu0 0.0
    %1742 = vmatpush1.msra.mxu0 0.0
    %1743 = vmatprep.subr.mxu0 0.0
    %1744 = vmatpush1.msra.mxu0 0.0
    %1745 = vmatprep.subr.mxu0 0.0
    %1746 = vmatpush1.msra.mxu0 0.0
    %1747 = vmatprep.subr.mxu0 0.0
    %1748 = vmatpush1.msra.mxu0 0.0
    %1749 = vmatprep.mubr.f32.mxu0 0.0
    %1750 = vmatmul.mubr.f32.gmra.mrb[0].mxu0 %v1596
    %v1751 = vpop.f32.mrb[0].mxu0
    %v1752 = vadd.f32 %v1610, %v1751
    %v1753 = vpop.f32.mrb[0].mxu0
    %1754 = vdwg.mxu0
    %v1757 = vrot.slane %v1681, 3
    %v1758 = vrot.slane %v1683, 3
    %v1761 = vadd.f32 %v277, %v1757
    %v1762 = vadd.f32 %v279, %v1758
    %v1763 = vxor.u32 %v1761, 2147483648
    %v1764 = vxor.u32 %v1762, 2147483648
    %v1765 = vmul.f32 %v1763, 1.442695
    %v1766 = vpow.pop %v1765
    %v1767 = vmul.f32 %v1764, 1.442695
    %v1768 = vpow.pop %v1767
    %v1769 = vadd.f32 %v1766, 1.0
    %v1770 = vadd.f32 %v1768, 1.0
    %v1771 = vrcp.pop %v1769
    %v1772 = vmul.f32 1.0, %v1771
    %v1773 = vrcp.pop %v1770
    %v1774 = vmul.f32 1.0, %v1773
    %v1776 = vrot.slane %v1752, 3
    %v1778 = vmul.f32 %v1772, %v1776
    %v1779 = vadd.f32 %v348, %v1778
    %v1780 = vtanh.pop %v1779
    %v1781 = vsub.f32 1.0, %v1774
    %v1782 = vmul.f32 %v1781, %v1780
    %v1783 = vrot.slane %v1544, 7
    %v1785 = vmul.f32 %v1774, %v1783
    %v1786 = vadd.f32 %v1782, %v1785
    %1787 = vst [vmem:[#allocation3] sm:$0x20] %v1786
    %v1788 = vld [vmem:[#allocation9] sm:$0xff]
    %v1789 = vld [vmem:[#allocation9 + $0x8] sm:$0xff]
    %v1790 = vld [vmem:[#allocation9 + $0x10] sm:$0xff]
    %v1791 = vld [vmem:[#allocation9 + $0x18] sm:$0xff]
    %v1792 = vld [vmem:[#allocation9 + $0x20] sm:$0xff]
    %v1793 = vld [vmem:[#allocation9 + $0x28] sm:$0xff]
    %v1794 = vld [vmem:[#allocation9 + $0x30] sm:$0xff]
    %v1795 = vld [vmem:[#allocation9 + $0x38] sm:$0xff]
    %v1796 = vld [vmem:[#allocation9 + $0x40] sm:$0xff]
    %v1797 = vld [vmem:[#allocation9 + $0x48] sm:$0xff]
    %v1798 = vld [vmem:[#allocation9 + $0x50] sm:$0xff]
    %v1799 = vld [vmem:[#allocation9 + $0x58] sm:$0xff]
    %v1800 = vld [vmem:[#allocation9 + $0x60] sm:$0xff]
    %v1801 = vld [vmem:[#allocation9 + $0x68] sm:$0xff]
    %v1802 = vld [vmem:[#allocation9 + $0x70] sm:$0xff]
    %v1803 = vld [vmem:[#allocation9 + $0x78] sm:$0xff]
    %v1804 = vld [vmem:[#allocation9 + $0x80] sm:$0xff]
    %v1805 = vld [vmem:[#allocation9 + $0x88] sm:$0xff]
    %v1806 = vld [vmem:[#allocation9 + $0x90] sm:$0xff]
    %v1807 = vld [vmem:[#allocation9 + $0x98] sm:$0xff]
    %v1808 = vld [vmem:[#allocation9 + $0xa0] sm:$0xff]
    %v1809 = vld [vmem:[#allocation9 + $0xa8] sm:$0xff]
    %v1810 = vld [vmem:[#allocation9 + $0xb0] sm:$0xff]
    %v1811 = vld [vmem:[#allocation9 + $0xb8] sm:$0xff]
    %v1812 = vld [vmem:[#allocation9 + $0xc0] sm:$0xff]
    %v1813 = vld [vmem:[#allocation9 + $0xc8] sm:$0xff]
    %v1814 = vld [vmem:[#allocation9 + $0xd0] sm:$0xff]
    %v1815 = vld [vmem:[#allocation9 + $0xd8] sm:$0xff]
    %v1816 = vld [vmem:[#allocation9 + $0xe0] sm:$0xff]
    %v1817 = vld [vmem:[#allocation9 + $0xe8] sm:$0xff]
    %v1818 = vld [vmem:[#allocation9 + $0xf0] sm:$0xff]
    %v1819 = vld [vmem:[#allocation9 + $0xf8] sm:$0xff]
    %v1820 = vld [vmem:[#allocation9 + $0x100] sm:$0xff]
    %v1821 = vld [vmem:[#allocation9 + $0x108] sm:$0xff]
    %v1822 = vld [vmem:[#allocation9 + $0x110] sm:$0xff]
    %v1823 = vld [vmem:[#allocation9 + $0x118] sm:$0xff]
    %v1824 = vld [vmem:[#allocation9 + $0x120] sm:$0xff]
    %v1825 = vld [vmem:[#allocation9 + $0x128] sm:$0xff]
    %v1826 = vld [vmem:[#allocation9 + $0x130] sm:$0xff]
    %v1827 = vld [vmem:[#allocation9 + $0x138] sm:$0xff]
    %v1828 = vld [vmem:[#allocation9 + $0x140] sm:$0xff]
    %v1829 = vld [vmem:[#allocation9 + $0x148] sm:$0xff]
    %v1830 = vld [vmem:[#allocation9 + $0x150] sm:$0xff]
    %v1831 = vld [vmem:[#allocation9 + $0x158] sm:$0xff]
    %v1832 = vld [vmem:[#allocation9 + $0x160] sm:$0xff]
    %v1833 = vld [vmem:[#allocation9 + $0x168] sm:$0xff]
    %v1834 = vld [vmem:[#allocation9 + $0x170] sm:$0xff]
    %v1835 = vld [vmem:[#allocation9 + $0x178] sm:$0xff]
    %v1836 = vld [vmem:[%s6] sm:$0x7]
    %v1838 = vrot.slane %v1786, 5
    %v1841 = vlaneseq
    %v1842 = vshrl.u32 %v1841, 7
    %v1843 = vsub.s32 0, %v1842
    %v1844 = vrot.slane %v1836, %v1843
    %v1845 = vlaneseq
    %v1846 = vshrl.u32 %v1845, 7
    %v1847 = vsub.s32 1, %v1846
    %v1848 = vrot.slane %v1836, %v1847
    %v1849 = vlaneseq
    %v1850 = vshrl.u32 %v1849, 7
    %v1851 = vsub.s32 2, %v1850
    %v1852 = vrot.slane %v1836, %v1851
    %1856 = vmatprep.subr.mxu0 %v1789
    %1857 = vmatpush1.msra.mxu0 %v1788
    %1858 = vmatprep.subr.mxu0 %v1792
    %1859 = vmatpush1.msra.mxu0 %v1791
    %1860 = vmatprep.subr.mxu0 %v1795
    %1861 = vmatpush1.msra.mxu0 %v1794
    %1862 = vmatprep.subr.mxu0 %v1798
    %1863 = vmatpush1.msra.mxu0 %v1797
    %1864 = vmatprep.subr.mxu0 %v1801
    %1865 = vmatpush1.msra.mxu0 %v1800
    %1866 = vmatprep.subr.mxu0 %v1804
    %1867 = vmatpush1.msra.mxu0 %v1803
    %1868 = vmatprep.subr.mxu0 %v1807
    %1869 = vmatpush1.msra.mxu0 %v1806
    %1870 = vmatprep.subr.mxu0 %v1810
    %1871 = vmatpush1.msra.mxu0 %v1809
    %1872 = vmatprep.subr.mxu0 %v1813
    %1873 = vmatpush1.msra.mxu0 %v1812
    %1874 = vmatprep.subr.mxu0 %v1816
    %1875 = vmatpush1.msra.mxu0 %v1815
    %1876 = vmatprep.subr.mxu0 %v1819
    %1877 = vmatpush1.msra.mxu0 %v1818
    %1878 = vmatprep.subr.mxu0 %v1822
    %1879 = vmatpush1.msra.mxu0 %v1821
    %1880 = vmatprep.subr.mxu0 %v1825
    %1881 = vmatpush1.msra.mxu0 %v1824
    %1882 = vmatprep.subr.mxu0 %v1828
    %1883 = vmatpush1.msra.mxu0 %v1827
    %1884 = vmatprep.subr.mxu0 %v1831
    %1885 = vmatpush1.msra.mxu0 %v1830
    %1886 = vmatprep.subr.mxu0 %v1834
    %1887 = vmatpush1.msra.mxu0 %v1833
    %1888 = vmatprep.subr.mxu0 0.0
    %1889 = vmatpush1.msra.mxu0 0.0
    %1890 = vmatprep.subr.mxu0 0.0
    %1891 = vmatpush1.msra.mxu0 0.0
    %1892 = vmatprep.subr.mxu0 0.0
    %1893 = vmatpush1.msra.mxu0 0.0
    %1894 = vmatprep.subr.mxu0 0.0
    %1895 = vmatpush1.msra.mxu0 0.0
    %1896 = vmatprep.subr.mxu0 0.0
    %1897 = vmatpush1.msra.mxu0 0.0
    %1898 = vmatprep.subr.mxu0 0.0
    %1899 = vmatpush1.msra.mxu0 0.0
    %1900 = vmatprep.subr.mxu0 0.0
    %1901 = vmatpush1.msra.mxu0 0.0
    %1902 = vmatprep.subr.mxu0 0.0
    %1903 = vmatpush1.msra.mxu0 0.0
    %1904 = vmatprep.subr.mxu0 0.0
    %1905 = vmatpush1.msra.mxu0 0.0
    %1906 = vmatprep.subr.mxu0 0.0
    %1907 = vmatpush1.msra.mxu0 0.0
    %1908 = vmatprep.subr.mxu0 0.0
    %1909 = vmatpush1.msra.mxu0 0.0
    %1910 = vmatprep.subr.mxu0 0.0
    %1911 = vmatpush1.msra.mxu0 0.0
    %1912 = vmatprep.subr.mxu0 0.0
    %1913 = vmatpush1.msra.mxu0 0.0
    %1914 = vmatprep.subr.mxu0 0.0
    %1915 = vmatpush1.msra.mxu0 0.0
    %1916 = vmatprep.subr.mxu0 0.0
    %1917 = vmatpush1.msra.mxu0 0.0
    %1918 = vmatprep.subr.mxu0 0.0
    %1919 = vmatpush1.msra.mxu0 0.0
    %1920 = vmatprep.mubr.f32.mxu0 0.0
    %1921 = vmatmul.mubr.f32.gmra.mrb[0].mxu0 %v1838
    %v1922 = vpop.f32.mrb[0].mxu0
    %v1923 = vadd.f32 %v1844, %v1922
    %v1924 = vpop.f32.mrb[0].mxu0
    %v1925 = vadd.f32 %v1848, %v1924
    %1926 = vdwg.mxu0
    %1927 = vmatprep.subr.mxu0 0.0
    %1928 = vmatpush1.msra.mxu0 %v1790
    %1929 = vmatprep.subr.mxu0 0.0
    %1930 = vmatpush1.msra.mxu0 %v1793
    %1931 = vmatprep.subr.mxu0 0.0
    %1932 = vmatpush1.msra.mxu0 %v1796
    %1933 = vmatprep.subr.mxu0 0.0
    %1934 = vmatpush1.msra.mxu0 %v1799
    %1935 = vmatprep.subr.mxu0 0.0
    %1936 = vmatpush1.msra.mxu0 %v1802
    %1937 = vmatprep.subr.mxu0 0.0
    %1938 = vmatpush1.msra.mxu0 %v1805
    %1939 = vmatprep.subr.mxu0 0.0
    %1940 = vmatpush1.msra.mxu0 %v1808
    %1941 = vmatprep.subr.mxu0 0.0
    %1942 = vmatpush1.msra.mxu0 %v1811
    %1943 = vmatprep.subr.mxu0 0.0
    %1944 = vmatpush1.msra.mxu0 %v1814
    %1945 = vmatprep.subr.mxu0 0.0
    %1946 = vmatpush1.msra.mxu0 %v1817
    %1947 = vmatprep.subr.mxu0 0.0
    %1948 = vmatpush1.msra.mxu0 %v1820
    %1949 = vmatprep.subr.mxu0 0.0
    %1950 = vmatpush1.msra.mxu0 %v1823
    %1951 = vmatprep.subr.mxu0 0.0
    %1952 = vmatpush1.msra.mxu0 %v1826
    %1953 = vmatprep.subr.mxu0 0.0
    %1954 = vmatpush1.msra.mxu0 %v1829
    %1955 = vmatprep.subr.mxu0 0.0
    %1956 = vmatpush1.msra.mxu0 %v1832
    %1957 = vmatprep.subr.mxu0 0.0
    %1958 = vmatpush1.msra.mxu0 %v1835
    %1959 = vmatprep.subr.mxu0 0.0
    %1960 = vmatpush1.msra.mxu0 0.0
    %1961 = vmatprep.subr.mxu0 0.0
    %1962 = vmatpush1.msra.mxu0 0.0
    %1963 = vmatprep.subr.mxu0 0.0
    %1964 = vmatpush1.msra.mxu0 0.0
    %1965 = vmatprep.subr.mxu0 0.0
    %1966 = vmatpush1.msra.mxu0 0.0
    %1967 = vmatprep.subr.mxu0 0.0
    %1968 = vmatpush1.msra.mxu0 0.0
    %1969 = vmatprep.subr.mxu0 0.0
    %1970 = vmatpush1.msra.mxu0 0.0
    %1971 = vmatprep.subr.mxu0 0.0
    %1972 = vmatpush1.msra.mxu0 0.0
    %1973 = vmatprep.subr.mxu0 0.0
    %1974 = vmatpush1.msra.mxu0 0.0
    %1975 = vmatprep.subr.mxu0 0.0
    %1976 = vmatpush1.msra.mxu0 0.0
    %1977 = vmatprep.subr.mxu0 0.0
    %1978 = vmatpush1.msra.mxu0 0.0
    %1979 = vmatprep.subr.mxu0 0.0
    %1980 = vmatpush1.msra.mxu0 0.0
    %1981 = vmatprep.subr.mxu0 0.0
    %1982 = vmatpush1.msra.mxu0 0.0
    %1983 = vmatprep.subr.mxu0 0.0
    %1984 = vmatpush1.msra.mxu0 0.0
    %1985 = vmatprep.subr.mxu0 0.0
    %1986 = vmatpush1.msra.mxu0 0.0
    %1987 = vmatprep.subr.mxu0 0.0
    %1988 = vmatpush1.msra.mxu0 0.0
    %1989 = vmatprep.subr.mxu0 0.0
    %1990 = vmatpush1.msra.mxu0 0.0
    %1991 = vmatprep.mubr.f32.mxu0 0.0
    %1992 = vmatmul.mubr.f32.gmra.mrb[0].mxu0 %v1838
    %v1993 = vpop.f32.mrb[0].mxu0
    %v1994 = vadd.f32 %v1852, %v1993
    %v1995 = vpop.f32.mrb[0].mxu0
    %1996 = vdwg.mxu0
    %v1999 = vrot.slane %v1923, 2
    %v2000 = vrot.slane %v1925, 2
    %v2003 = vadd.f32 %v277, %v1999
    %v2004 = vadd.f32 %v279, %v2000
    %v2005 = vxor.u32 %v2003, 2147483648
    %v2006 = vxor.u32 %v2004, 2147483648
    %v2007 = vmul.f32 %v2005, 1.442695
    %v2008 = vpow.pop %v2007
    %v2009 = vmul.f32 %v2006, 1.442695
    %v2010 = vpow.pop %v2009
    %v2011 = vadd.f32 %v2008, 1.0
    %v2012 = vadd.f32 %v2010, 1.0
    %v2013 = vrcp.pop %v2011
    %v2014 = vmul.f32 1.0, %v2013
    %v2015 = vrcp.pop %v2012
    %v2016 = vmul.f32 1.0, %v2015
    %v2018 = vrot.slane %v1994, 2
    %v2020 = vmul.f32 %v2014, %v2018
    %v2021 = vadd.f32 %v348, %v2020
    %v2022 = vtanh.pop %v2021
    %v2023 = vsub.f32 1.0, %v2016
    %v2024 = vmul.f32 %v2023, %v2022
    %v2025 = vrot.slane %v1786, 7
    %v2027 = vmul.f32 %v2016, %v2025
    %v2028 = vadd.f32 %v2024, %v2027
    %2029 = vst [vmem:[#allocation3] sm:$0x40] %v2028
    %v2030 = vld [vmem:[#allocation9] sm:$0xff]
    %v2031 = vld [vmem:[#allocation9 + $0x8] sm:$0xff]
    %v2032 = vld [vmem:[#allocation9 + $0x10] sm:$0xff]
    %v2033 = vld [vmem:[#allocation9 + $0x18] sm:$0xff]
    %v2034 = vld [vmem:[#allocation9 + $0x20] sm:$0xff]
    %v2035 = vld [vmem:[#allocation9 + $0x28] sm:$0xff]
    %v2036 = vld [vmem:[#allocation9 + $0x30] sm:$0xff]
    %v2037 = vld [vmem:[#allocation9 + $0x38] sm:$0xff]
    %v2038 = vld [vmem:[#allocation9 + $0x40] sm:$0xff]
    %v2039 = vld [vmem:[#allocation9 + $0x48] sm:$0xff]
    %v2040 = vld [vmem:[#allocation9 + $0x50] sm:$0xff]
    %v2041 = vld [vmem:[#allocation9 + $0x58] sm:$0xff]
    %v2042 = vld [vmem:[#allocation9 + $0x60] sm:$0xff]
    %v2043 = vld [vmem:[#allocation9 + $0x68] sm:$0xff]
    %v2044 = vld [vmem:[#allocation9 + $0x70] sm:$0xff]
    %v2045 = vld [vmem:[#allocation9 + $0x78] sm:$0xff]
    %v2046 = vld [vmem:[#allocation9 + $0x80] sm:$0xff]
    %v2047 = vld [vmem:[#allocation9 + $0x88] sm:$0xff]
    %v2048 = vld [vmem:[#allocation9 + $0x90] sm:$0xff]
    %v2049 = vld [vmem:[#allocation9 + $0x98] sm:$0xff]
    %v2050 = vld [vmem:[#allocation9 + $0xa0] sm:$0xff]
    %v2051 = vld [vmem:[#allocation9 + $0xa8] sm:$0xff]
    %v2052 = vld [vmem:[#allocation9 + $0xb0] sm:$0xff]
    %v2053 = vld [vmem:[#allocation9 + $0xb8] sm:$0xff]
    %v2054 = vld [vmem:[#allocation9 + $0xc0] sm:$0xff]
    %v2055 = vld [vmem:[#allocation9 + $0xc8] sm:$0xff]
    %v2056 = vld [vmem:[#allocation9 + $0xd0] sm:$0xff]
    %v2057 = vld [vmem:[#allocation9 + $0xd8] sm:$0xff]
    %v2058 = vld [vmem:[#allocation9 + $0xe0] sm:$0xff]
    %v2059 = vld [vmem:[#allocation9 + $0xe8] sm:$0xff]
    %v2060 = vld [vmem:[#allocation9 + $0xf0] sm:$0xff]
    %v2061 = vld [vmem:[#allocation9 + $0xf8] sm:$0xff]
    %v2062 = vld [vmem:[#allocation9 + $0x100] sm:$0xff]
    %v2063 = vld [vmem:[#allocation9 + $0x108] sm:$0xff]
    %v2064 = vld [vmem:[#allocation9 + $0x110] sm:$0xff]
    %v2065 = vld [vmem:[#allocation9 + $0x118] sm:$0xff]
    %v2066 = vld [vmem:[#allocation9 + $0x120] sm:$0xff]
    %v2067 = vld [vmem:[#allocation9 + $0x128] sm:$0xff]
    %v2068 = vld [vmem:[#allocation9 + $0x130] sm:$0xff]
    %v2069 = vld [vmem:[#allocation9 + $0x138] sm:$0xff]
    %v2070 = vld [vmem:[#allocation9 + $0x140] sm:$0xff]
    %v2071 = vld [vmem:[#allocation9 + $0x148] sm:$0xff]
    %v2072 = vld [vmem:[#allocation9 + $0x150] sm:$0xff]
    %v2073 = vld [vmem:[#allocation9 + $0x158] sm:$0xff]
    %v2074 = vld [vmem:[#allocation9 + $0x160] sm:$0xff]
    %v2075 = vld [vmem:[#allocation9 + $0x168] sm:$0xff]
    %v2076 = vld [vmem:[#allocation9 + $0x170] sm:$0xff]
    %v2077 = vld [vmem:[#allocation9 + $0x178] sm:$0xff]
    %v2078 = vld [vmem:[%s6] sm:$0x7]
    %v2080 = vrot.slane %v2028, 6
    %v2083 = vlaneseq
    %v2084 = vshrl.u32 %v2083, 7
    %v2085 = vsub.s32 0, %v2084
    %v2086 = vrot.slane %v2078, %v2085
    %v2087 = vlaneseq
    %v2088 = vshrl.u32 %v2087, 7
    %v2089 = vsub.s32 1, %v2088
    %v2090 = vrot.slane %v2078, %v2089
    %v2091 = vlaneseq
    %v2092 = vshrl.u32 %v2091, 7
    %v2093 = vsub.s32 2, %v2092
    %v2094 = vrot.slane %v2078, %v2093
    %2098 = vmatprep.subr.mxu0 %v2031
    %2099 = vmatpush1.msra.mxu0 %v2030
    %2100 = vmatprep.subr.mxu0 %v2034
    %2101 = vmatpush1.msra.mxu0 %v2033
    %2102 = vmatprep.subr.mxu0 %v2037
    %2103 = vmatpush1.msra.mxu0 %v2036
    %2104 = vmatprep.subr.mxu0 %v2040
    %2105 = vmatpush1.msra.mxu0 %v2039
    %2106 = vmatprep.subr.mxu0 %v2043
    %2107 = vmatpush1.msra.mxu0 %v2042
    %2108 = vmatprep.subr.mxu0 %v2046
    %2109 = vmatpush1.msra.mxu0 %v2045
    %2110 = vmatprep.subr.mxu0 %v2049
    %2111 = vmatpush1.msra.mxu0 %v2048
    %2112 = vmatprep.subr.mxu0 %v2052
    %2113 = vmatpush1.msra.mxu0 %v2051
    %2114 = vmatprep.subr.mxu0 %v2055
    %2115 = vmatpush1.msra.mxu0 %v2054
    %2116 = vmatprep.subr.mxu0 %v2058
    %2117 = vmatpush1.msra.mxu0 %v2057
    %2118 = vmatprep.subr.mxu0 %v2061
    %2119 = vmatpush1.msra.mxu0 %v2060
    %2120 = vmatprep.subr.mxu0 %v2064
    %2121 = vmatpush1.msra.mxu0 %v2063
    %2122 = vmatprep.subr.mxu0 %v2067
    %2123 = vmatpush1.msra.mxu0 %v2066
    %2124 = vmatprep.subr.mxu0 %v2070
    %2125 = vmatpush1.msra.mxu0 %v2069
    %2126 = vmatprep.subr.mxu0 %v2073
    %2127 = vmatpush1.msra.mxu0 %v2072
    %2128 = vmatprep.subr.mxu0 %v2076
    %2129 = vmatpush1.msra.mxu0 %v2075
    %2130 = vmatprep.subr.mxu0 0.0
    %2131 = vmatpush1.msra.mxu0 0.0
    %2132 = vmatprep.subr.mxu0 0.0
    %2133 = vmatpush1.msra.mxu0 0.0
    %2134 = vmatprep.subr.mxu0 0.0
    %2135 = vmatpush1.msra.mxu0 0.0
    %2136 = vmatprep.subr.mxu0 0.0
    %2137 = vmatpush1.msra.mxu0 0.0
    %2138 = vmatprep.subr.mxu0 0.0
    %2139 = vmatpush1.msra.mxu0 0.0
    %2140 = vmatprep.subr.mxu0 0.0
    %2141 = vmatpush1.msra.mxu0 0.0
    %2142 = vmatprep.subr.mxu0 0.0
    %2143 = vmatpush1.msra.mxu0 0.0
    %2144 = vmatprep.subr.mxu0 0.0
    %2145 = vmatpush1.msra.mxu0 0.0
    %2146 = vmatprep.subr.mxu0 0.0
    %2147 = vmatpush1.msra.mxu0 0.0
    %2148 = vmatprep.subr.mxu0 0.0
    %2149 = vmatpush1.msra.mxu0 0.0
    %2150 = vmatprep.subr.mxu0 0.0
    %2151 = vmatpush1.msra.mxu0 0.0
    %2152 = vmatprep.subr.mxu0 0.0
    %2153 = vmatpush1.msra.mxu0 0.0
    %2154 = vmatprep.subr.mxu0 0.0
    %2155 = vmatpush1.msra.mxu0 0.0
    %2156 = vmatprep.subr.mxu0 0.0
    %2157 = vmatpush1.msra.mxu0 0.0
    %2158 = vmatprep.subr.mxu0 0.0
    %2159 = vmatpush1.msra.mxu0 0.0
    %2160 = vmatprep.subr.mxu0 0.0
    %2161 = vmatpush1.msra.mxu0 0.0
    %2162 = vmatprep.mubr.f32.mxu0 0.0
    %2163 = vmatmul.mubr.f32.gmra.mrb[0].mxu0 %v2080
    %v2164 = vpop.f32.mrb[0].mxu0
    %v2165 = vadd.f32 %v2086, %v2164
    %v2166 = vpop.f32.mrb[0].mxu0
    %v2167 = vadd.f32 %v2090, %v2166
    %2168 = vdwg.mxu0
    %2169 = vmatprep.subr.mxu0 0.0
    %2170 = vmatpush1.msra.mxu0 %v2032
    %2171 = vmatprep.subr.mxu0 0.0
    %2172 = vmatpush1.msra.mxu0 %v2035
    %2173 = vmatprep.subr.mxu0 0.0
    %2174 = vmatpush1.msra.mxu0 %v2038
    %2175 = vmatprep.subr.mxu0 0.0
    %2176 = vmatpush1.msra.mxu0 %v2041
    %2177 = vmatprep.subr.mxu0 0.0
    %2178 = vmatpush1.msra.mxu0 %v2044
    %2179 = vmatprep.subr.mxu0 0.0
    %2180 = vmatpush1.msra.mxu0 %v2047
    %2181 = vmatprep.subr.mxu0 0.0
    %2182 = vmatpush1.msra.mxu0 %v2050
    %2183 = vmatprep.subr.mxu0 0.0
    %2184 = vmatpush1.msra.mxu0 %v2053
    %2185 = vmatprep.subr.mxu0 0.0
    %2186 = vmatpush1.msra.mxu0 %v2056
    %2187 = vmatprep.subr.mxu0 0.0
    %2188 = vmatpush1.msra.mxu0 %v2059
    %2189 = vmatprep.subr.mxu0 0.0
    %2190 = vmatpush1.msra.mxu0 %v2062
    %2191 = vmatprep.subr.mxu0 0.0
    %2192 = vmatpush1.msra.mxu0 %v2065
    %2193 = vmatprep.subr.mxu0 0.0
    %2194 = vmatpush1.msra.mxu0 %v2068
    %2195 = vmatprep.subr.mxu0 0.0
    %2196 = vmatpush1.msra.mxu0 %v2071
    %2197 = vmatprep.subr.mxu0 0.0
    %2198 = vmatpush1.msra.mxu0 %v2074
    %2199 = vmatprep.subr.mxu0 0.0
    %2200 = vmatpush1.msra.mxu0 %v2077
    %2201 = vmatprep.subr.mxu0 0.0
    %2202 = vmatpush1.msra.mxu0 0.0
    %2203 = vmatprep.subr.mxu0 0.0
    %2204 = vmatpush1.msra.mxu0 0.0
    %2205 = vmatprep.subr.mxu0 0.0
    %2206 = vmatpush1.msra.mxu0 0.0
    %2207 = vmatprep.subr.mxu0 0.0
    %2208 = vmatpush1.msra.mxu0 0.0
    %2209 = vmatprep.subr.mxu0 0.0
    %2210 = vmatpush1.msra.mxu0 0.0
    %2211 = vmatprep.subr.mxu0 0.0
    %2212 = vmatpush1.msra.mxu0 0.0
    %2213 = vmatprep.subr.mxu0 0.0
    %2214 = vmatpush1.msra.mxu0 0.0
    %2215 = vmatprep.subr.mxu0 0.0
    %2216 = vmatpush1.msra.mxu0 0.0
    %2217 = vmatprep.subr.mxu0 0.0
    %2218 = vmatpush1.msra.mxu0 0.0
    %2219 = vmatprep.subr.mxu0 0.0
    %2220 = vmatpush1.msra.mxu0 0.0
    %2221 = vmatprep.subr.mxu0 0.0
    %2222 = vmatpush1.msra.mxu0 0.0
    %2223 = vmatprep.subr.mxu0 0.0
    %2224 = vmatpush1.msra.mxu0 0.0
    %2225 = vmatprep.subr.mxu0 0.0
    %2226 = vmatpush1.msra.mxu0 0.0
    %2227 = vmatprep.subr.mxu0 0.0
    %2228 = vmatpush1.msra.mxu0 0.0
    %2229 = vmatprep.subr.mxu0 0.0
    %2230 = vmatpush1.msra.mxu0 0.0
    %2231 = vmatprep.subr.mxu0 0.0
    %2232 = vmatpush1.msra.mxu0 0.0
    %2233 = vmatprep.mubr.f32.mxu0 0.0
    %2234 = vmatmul.mubr.f32.gmra.mrb[0].mxu0 %v2080
    %v2235 = vpop.f32.mrb[0].mxu0
    %v2236 = vadd.f32 %v2094, %v2235
    %v2237 = vpop.f32.mrb[0].mxu0
    %2238 = vdwg.mxu0
    %v2241 = vrot.slane %v2165, 1
    %v2242 = vrot.slane %v2167, 1
    %v2245 = vadd.f32 %v277, %v2241
    %v2246 = vadd.f32 %v279, %v2242
    %v2247 = vxor.u32 %v2245, 2147483648
    %v2248 = vxor.u32 %v2246, 2147483648
    %v2249 = vmul.f32 %v2247, 1.442695
    %v2250 = vpow.pop %v2249
    %v2251 = vmul.f32 %v2248, 1.442695
    %v2252 = vpow.pop %v2251
    %v2253 = vadd.f32 %v2250, 1.0
    %v2254 = vadd.f32 %v2252, 1.0
    %v2255 = vrcp.pop %v2253
    %v2256 = vmul.f32 1.0, %v2255
    %v2257 = vrcp.pop %v2254
    %v2258 = vmul.f32 1.0, %v2257
    %v2260 = vrot.slane %v2236, 1
    %v2262 = vmul.f32 %v2256, %v2260
    %v2263 = vadd.f32 %v348, %v2262
    %v2264 = vtanh.pop %v2263
    %v2265 = vsub.f32 1.0, %v2258
    %v2266 = vmul.f32 %v2265, %v2264
    %v2267 = vrot.slane %v2028, 7
    %v2269 = vmul.f32 %v2258, %v2267
    %v2270 = vadd.f32 %v2266, %v2269
    %2271 = vst [vmem:[#allocation3] sm:$0x80] %v2270
    %2272 = vst [vmem:[%s10 - $0x7] sm:$0x80] %v2270
    %v2273 = vld [vmem:[#allocation3] sm:$0xff]
    %v2274 = vld [vmem:[#allocation11] sm:$0xff]
    %v2275 = vld [vmem:[#allocation11 + $0x8] sm:$0xff]
    %v2276 = vld [vmem:[#allocation11 + $0x10] sm:$0xff]
    %v2277 = vld [vmem:[#allocation11 + $0x18] sm:$0xff]
    %v2278 = vld [vmem:[#allocation11 + $0x20] sm:$0xff]
    %v2279 = vld [vmem:[#allocation11 + $0x28] sm:$0xff]
    %v2280 = vld [vmem:[#allocation11 + $0x30] sm:$0xff]
    %v2281 = vld [vmem:[#allocation11 + $0x38] sm:$0xff]
    %v2282 = vld [vmem:[#allocation11 + $0x40] sm:$0xff]
    %v2283 = vld [vmem:[#allocation11 + $0x48] sm:$0xff]
    %v2284 = vld [vmem:[#allocation11 + $0x50] sm:$0xff]
    %v2285 = vld [vmem:[#allocation11 + $0x58] sm:$0xff]
    %v2286 = vld [vmem:[#allocation11 + $0x60] sm:$0xff]
    %v2287 = vld [vmem:[#allocation11 + $0x68] sm:$0xff]
    %v2288 = vld [vmem:[#allocation11 + $0x70] sm:$0xff]
    %v2289 = vld [vmem:[#allocation11 + $0x78] sm:$0xff]
    %v2290 = vld [vmem:[%s8] sm:$0x1]
    %v2292 = vlaneseq
    %v2293 = vshrl.u32 %v2292, 7
    %v2294 = vsub.s32 0, %v2293
    %v2295 = vrot.slane %v2290, %v2294
    %2297 = vmatprep.subr.mxu0 0.0
    %2298 = vmatpush1.msra.mxu0 %v2274
    %2299 = vmatprep.subr.mxu0 0.0
    %2300 = vmatpush1.msra.mxu0 %v2275
    %2301 = vmatprep.subr.mxu0 0.0
    %2302 = vmatpush1.msra.mxu0 %v2276
    %2303 = vmatprep.subr.mxu0 0.0
    %2304 = vmatpush1.msra.mxu0 %v2277
    %2305 = vmatprep.subr.mxu0 0.0
    %2306 = vmatpush1.msra.mxu0 %v2278
    %2307 = vmatprep.subr.mxu0 0.0
    %2308 = vmatpush1.msra.mxu0 %v2279
    %2309 = vmatprep.subr.mxu0 0.0
    %2310 = vmatpush1.msra.mxu0 %v2280
    %2311 = vmatprep.subr.mxu0 0.0
    %2312 = vmatpush1.msra.mxu0 %v2281
    %2313 = vmatprep.subr.mxu0 0.0
    %2314 = vmatpush1.msra.mxu0 %v2282
    %2315 = vmatprep.subr.mxu0 0.0
    %2316 = vmatpush1.msra.mxu0 %v2283
    %2317 = vmatprep.subr.mxu0 0.0
    %2318 = vmatpush1.msra.mxu0 %v2284
    %2319 = vmatprep.subr.mxu0 0.0
    %2320 = vmatpush1.msra.mxu0 %v2285
    %2321 = vmatprep.subr.mxu0 0.0
    %2322 = vmatpush1.msra.mxu0 %v2286
    %2323 = vmatprep.subr.mxu0 0.0
    %2324 = vmatpush1.msra.mxu0 %v2287
    %2325 = vmatprep.subr.mxu0 0.0
    %2326 = vmatpush1.msra.mxu0 %v2288
    %2327 = vmatprep.subr.mxu0 0.0
    %2328 = vmatpush1.msra.mxu0 %v2289
    %2329 = vmatprep.subr.mxu0 0.0
    %2330 = vmatpush1.msra.mxu0 0.0
    %2331 = vmatprep.subr.mxu0 0.0
    %2332 = vmatpush1.msra.mxu0 0.0
    %2333 = vmatprep.subr.mxu0 0.0
    %2334 = vmatpush1.msra.mxu0 0.0
    %2335 = vmatprep.subr.mxu0 0.0
    %2336 = vmatpush1.msra.mxu0 0.0
    %2337 = vmatprep.subr.mxu0 0.0
    %2338 = vmatpush1.msra.mxu0 0.0
    %2339 = vmatprep.subr.mxu0 0.0
    %2340 = vmatpush1.msra.mxu0 0.0
    %2341 = vmatprep.subr.mxu0 0.0
    %2342 = vmatpush1.msra.mxu0 0.0
    %2343 = vmatprep.subr.mxu0 0.0
    %2344 = vmatpush1.msra.mxu0 0.0
    %2345 = vmatprep.subr.mxu0 0.0
    %2346 = vmatpush1.msra.mxu0 0.0
    %2347 = vmatprep.subr.mxu0 0.0
    %2348 = vmatpush1.msra.mxu0 0.0
    %2349 = vmatprep.subr.mxu0 0.0
    %2350 = vmatpush1.msra.mxu0 0.0
    %2351 = vmatprep.subr.mxu0 0.0
    %2352 = vmatpush1.msra.mxu0 0.0
    %2353 = vmatprep.subr.mxu0 0.0
    %2354 = vmatpush1.msra.mxu0 0.0
    %2355 = vmatprep.subr.mxu0 0.0
    %2356 = vmatpush1.msra.mxu0 0.0
    %2357 = vmatprep.subr.mxu0 0.0
    %2358 = vmatpush1.msra.mxu0 0.0
    %2359 = vmatprep.subr.mxu0 0.0
    %2360 = vmatpush1.msra.mxu0 0.0
    %2361 = vmatprep.mubr.f32.mxu0 0.0
    %2362 = vmatmul.mubr.f32.gmra.mrb[0].mxu0 %v2273
    %v2363 = vpop.f32.mrb[0].mxu0
    %v2364 = vadd.f32 %v2295, %v2363
    %v2365 = vpop.f32.mrb[0].mxu0
    %2366 = vdwg.mxu0
    %2367 = vst [vmem:[#allocation12] sm:$0xff] %v2364
    // Predicated region
    $region46: #{custom_rnn_forward_seq.1} parent=1 // pred_check
      _
    $region47: #{custom_rnn_forward_seq.1} parent=1 // pred_check_branch
      %2369 = sbr.rel (0) target = $region49
    $region48: #{custom_rnn_forward_seq.1} parent=1 // pred_region
      %s2371 = ssub.s32 128, 128
      %2372 = vsyncadd [#allocation8], %s2371
      %s2374 = sshll.u32 [#allocation12], 4
      %s2375 = int_to_ptr.vmem [resolvable:$true] %s2374
      %2377 = dma.vmem_to_hbm [thread:$0]  %s2375, 128, %s9, [#allocation8]
    $region49: #{custom_rnn_forward_seq.1} parent=1 // pred_fallthru
      _
    // Predicated region
    $region50: #{custom_rnn_forward_seq.1} parent=1 // pred_check
      _
    $region51: #{custom_rnn_forward_seq.1} parent=1 // pred_check_branch
      %2379 = sbr.rel (0) target = $region53
    $region52: #{custom_rnn_forward_seq.1} parent=1 // pred_region
      _
    $region53: #{custom_rnn_forward_seq.1} parent=1 // pred_fallthru
      _
    // Predicated region
    $region54: #{custom_rnn_forward_seq.1} parent=1 // pred_check
      _
    $region55: #{custom_rnn_forward_seq.1} parent=1 // pred_check_branch
      %2381 = sbr.rel (0) target = $region57
    $region56: #{custom_rnn_forward_seq.1} parent=1 // pred_region
      %2382 = dma.done [#allocation8], 128
    $region57: #{custom_rnn_forward_seq.1} parent=1 // pred_fallthru
      _
    // Predicated region
    $region58: #{custom_rnn_forward_seq.1} parent=1 // pred_check
      _
    $region59: #{custom_rnn_forward_seq.1} parent=1 // pred_check_branch
      %2384 = sbr.rel (0) target = $region61
    $region60: #{custom_rnn_forward_seq.1} parent=1 // pred_region
      _
    $region61: #{custom_rnn_forward_seq.1} parent=1 // pred_fallthru
      _
    %2385 = vsyncpa [#allocation7], 1
    %2386 = vsyncpa [#allocation10], 1
    %2387 = vsyncpa [#allocation8], 1

</llo_original>
